<compile_context>
chip_gen: v5e
topology: v5e:2x2
jax: 0.10.0
libtpu: 0.0.40
codegen_flags: <defaults>
</compile_context>

<pallas_src>
import jax
import jax.numpy as jnp
from jax.experimental import pallas as pl
from jax.experimental.pallas import tpu as pltpu

# ---- model hyper-parameters (small, consistent with the module) ------------
N = 2            # batch
C_IN = 16        # num_features (input feature dim, conv channels)
T = 16           # number of frames
H_TDNN = 32      # TDNN hidden channels
H = 32           # LSTM hidden size
NUM_LAYERS = 2   # LSTM layers (tdnn7_lstm2 -> 2 lstm layers)
NUM_TDNN = 2     # TDNN conv layers in this synthetic front-end
VOCAB = 32       # CTC output (vocab) size
K = 3            # conv1d kernel width

# lane layout of the single packed output slab (T*N, 128)
PACK_W = 128
OFF_CTC = 0
OFF_TDNN = VOCAB
OFF_H = VOCAB + H_TDNN
OFF_C = OFF_H + H
assert OFF_C + H == PACK_W, "packed output must be exactly 128 lanes wide"
assert NUM_LAYERS * N <= T * N

_F32 = jnp.float32
_VMEM = pl.BlockSpec(memory_space=pltpu.MemorySpace.VMEM)


# ---------------------------------------------------------------------------
# Fused kernel: TDNN x2 -> LSTM x2 -> CTC projection + log_softmax
# Sequence data is T-major flat (row = t*N + n); everything lives in VMEM.
# ---------------------------------------------------------------------------
def _fused_encoder_kernel(
        # inputs
        x_ref,                          # (T*N, C_IN)   T-major
        w1_ref, b1_ref,                 # (K*C_IN, H_TDNN), (1, H_TDNN)
        w2_ref, b2_ref,                 # (K*H_TDNN, H_TDNN), (1, H_TDNN)
        wih0_ref, whh0_ref, lb0_ref,    # (H_TDNN, 4H), (H, 4H), (1, 4H)
        wih1_ref, whh1_ref, lb1_ref,    # (H, 4H), (H, 4H), (1, 4H)
        ctc_w_ref, ctc_b_ref,           # (H, VOCAB), (1, VOCAB)
        cntxt_ref,                      # (NUM_LAYERS, 2, 1, N, H)
        # output
        out_ref,                        # (T*N, PACK_W) packed lane-dense slab
        # scratch (VMEM)
        col1_scr,                       # (T*N, K*C_IN)   im2col for conv 1
        col2_scr):                      # (T*N, K*H_TDNN) im2col for conv 2

    # -- reference semantics: x = x * 0 (kept in-kernel; not constant-folded
    #    so the kernel stays valid for non-zeroed inputs). -------------------
    x_val = x_ref[...] * 0.0

    # -- Conv1d(k=3, s=1, p=1) + ReLU as ONE matmul per layer via im2col -----
    # tap k of output frame t multiplies input frame (t + k - 1); frames -1
    # and T are zero padding.  Weight layout: w_flat[k*Cin + cin, cout].
    def conv_relu(x_seq, col_scr, w_ref, b_ref):
        cin = x_seq.shape[-1]
        zpad = jnp.zeros((N, cin), _F32)
        col_scr[0:N, 0:cin] = zpad                                    # t=0, k=0
        col_scr[N:T * N, 0:cin] = x_seq[0:(T - 1) * N, :]             # k=0
        col_scr[:, cin:2 * cin] = x_seq                               # k=1
        col_scr[0:(T - 1) * N, 2 * cin:3 * cin] = x_seq[N:T * N, :]   # k=2
        col_scr[(T - 1) * N:T * N, 2 * cin:3 * cin] = zpad            # t=T-1, k=2
        y = jnp.dot(col_scr[...], w_ref[...],
                    preferred_element_type=_F32) + b_ref[...]
        return jnp.maximum(y, 0.0)                                    # (T*N, Cout)

    y1 = conv_relu(x_val, col1_scr, w1_ref, b1_ref)                   # (T*N, H_TDNN)
    y2 = conv_relu(y1, col2_scr, w2_ref, b2_ref)                      # (T*N, H_TDNN)

    # -- packed lane-dense output slab: zero once, then fill lane groups -----
    out_ref[...] = jnp.zeros((T * N, PACK_W), _F32)
    out_ref[:, OFF_TDNN:OFF_TDNN + H_TDNN] = y2                       # tdnn_out

    # -- LSTM cell step on fused (N, 4H) pre-activations ---------------------
    # PyTorch gate order along the 4H lanes: i | f | g | o.
    def lstm_step(a, c):
        i_g = jax.nn.sigmoid(a[:, 0:H])
        f_g = jax.nn.sigmoid(a[:, H:2 * H])
        g_g = jnp.tanh(a[:, 2 * H:3 * H])
        o_g = jax.nn.sigmoid(a[:, 3 * H:4 * H])
        c_new = f_g * c + i_g * g_g
        h_new = o_g * jnp.tanh(c_new)
        return h_new, c_new

    # ---- layer 0: hoisted fused input projection + unrolled recurrence -----
    whh0 = whh0_ref[...]                                              # (H, 4H)
    wih1 = wih1_ref[...]                                              # (H, 4H)
    lb1 = lb1_ref[...]                                                # (1, 4H)
    # one lane-full (T*N, Cin) x (Cin, 4H) matmul for ALL gate inputs
    gin0 = jnp.dot(y2, wih0_ref[...], preferred_element_type=_F32) + lb0_ref[...]
    h = cntxt_ref[0, 0, 0]                                            # (N, H)
    c = cntxt_ref[0, 1, 0]                                            # (N, H)
    gin1 = []   # layer-1 gate inputs, computed off the serial chain
    for t in range(T):                                                # fully unrolled
        a = gin0[t * N:(t + 1) * N, :] + jnp.dot(h, whh0,
                                                 preferred_element_type=_F32)
        h, c = lstm_step(a, c)
        # layer-1 input projection for this frame (no recurrent dependency;
        # the MXU absorbs it while the chain waits)
        gin1.append(jnp.dot(h, wih1, preferred_element_type=_F32) + lb1)
    out_ref[0:N, OFF_H:OFF_H + H] = h                                 # h_T layer 0
    out_ref[0:N, OFF_C:OFF_C + H] = c                                 # c_T layer 0

    # ---- layer 1 + fused CTC head -------------------------------------------
    whh1 = whh1_ref[...]                                              # (H, 4H)
    ctc_w = ctc_w_ref[...]                                            # (H, VOCAB)
    ctc_b = ctc_b_ref[...]                                            # (1, VOCAB)
    h = cntxt_ref[1, 0, 0]
    c = cntxt_ref[1, 1, 0]
    for t in range(T):
        a = gin1[t] + jnp.dot(h, whh1, preferred_element_type=_F32)
        h, c = lstm_step(a, c)
        # CTC projection + stable log-softmax for this frame (off the chain)
        logits = jnp.dot(h, ctc_w, preferred_element_type=_F32) + ctc_b
        m = jnp.max(logits, axis=-1, keepdims=True)
        lse = jnp.log(jnp.sum(jnp.exp(logits - m), axis=-1, keepdims=True)) + m
        out_ref[t * N:(t + 1) * N, OFF_CTC:OFF_CTC + VOCAB] = logits - lse
    out_ref[N:2 * N, OFF_H:OFF_H + H] = h                             # h_T layer 1
    out_ref[N:2 * N, OFF_C:OFF_C + H] = c                             # c_T layer 1


def _fused_forward(x_flat, p, lstm_cntxts):
    return pl.pallas_call(
        _fused_encoder_kernel,
        out_shape=jax.ShapeDtypeStruct((T * N, PACK_W), _F32),
        in_specs=[_VMEM] * 14,
        out_specs=_VMEM,
        scratch_shapes=[
            pltpu.VMEM((T * N, K * C_IN), _F32),
            pltpu.VMEM((T * N, K * H_TDNN), _F32),
        ],
    )(x_flat,
      p["tdnn_w"][0], p["tdnn_b"][0],
      p["tdnn_w"][1], p["tdnn_b"][1],
      p["wih"][0], p["whh"][0], p["lstm_b"][0],
      p["wih"][1], p["whh"][1], p["lstm_b"][1],
      p["ctc_w"], p["ctc_b"],
      lstm_cntxts)


# ---------------------------------------------------------------------------
# Parameter init (deterministic, synthetic), pre-arranged in kernel layouts
# ---------------------------------------------------------------------------
def init_params(key):
    """tdnn_w: flattened im2col weight (K*Cin, Cout) = PyTorch conv weight
    (Cout, Cin, K) permuted to (K, Cin, Cout) and reshaped.  LSTM weights are
    the fused PyTorch matrices transposed to (Cin, 4H)/(H, 4H) with gate order
    i,f,g,o; the two PyTorch biases b_ih + b_hh are summed into one (1,4H)."""
    keys = jax.random.split(key, 12)
    ki = iter(keys)

    def nrm(k, shape):
        return 0.1 * jax.random.normal(k, shape, _F32)

    p = {"tdnn_w": [], "tdnn_b": [], "wih": [], "whh": [], "lstm_b": []}
    cin = C_IN
    for _ in range(NUM_TDNN):
        p["tdnn_w"].append(nrm(next(ki), (K, cin, H_TDNN)).reshape(K * cin, H_TDNN))
        p["tdnn_b"].append(nrm(next(ki), (1, H_TDNN)))
        cin = H_TDNN
    cin = H_TDNN
    for _ in range(NUM_LAYERS):
        p["wih"].append(nrm(next(ki), (cin, 4 * H)))      # = weight_ih_l{k}.T
        p["whh"].append(nrm(next(ki), (H, 4 * H)))        # = weight_hh_l{k}.T
        p["lstm_b"].append(nrm(next(ki), (1, 4 * H)))     # = b_ih + b_hh fused
        cin = H
    p["ctc_w"] = nrm(next(ki), (H, VOCAB))
    p["ctc_b"] = nrm(next(ki), (1, VOCAB))
    return p


# ---------------------------------------------------------------------------
# Forward wrapper (matches OnnxEncoder.forward semantics)
# ---------------------------------------------------------------------------
def onnx_encoder_forward(params, x, f_cache, tdnn_cache, lstm_cntxts):
    """x: (N, C_IN, T) in PyTorch NCT layout.
    lstm_cntxts: (NUM_LAYERS, 2, 1, N, H); [:,0,0]=h0, [:,1,0]=c0.
    returns (ctc_posts (N,T,VOCAB), tdnn_out (N,T,H_TDNN),
             new_lstm_cntxts (NUM_LAYERS,2,1,N,H))."""
    del f_cache, tdnn_cache   # TODO(synk): streaming caches unused (see header)

    # NCT -> T-major flat (row = t*N + n); the reference `x * 0` is in-kernel.
    x_flat = jnp.transpose(x, (2, 0, 1)).reshape(T * N, C_IN)

    slab = _fused_forward(x_flat, params, lstm_cntxts)               # (T*N, 128)

    # unpack the single lane-dense slab (fuses into a couple of tiny XLA ops)
    ctc_posts = slab[:, OFF_CTC:OFF_CTC + VOCAB].reshape(T, N, VOCAB).transpose(1, 0, 2)
    tdnn_out = slab[:, OFF_TDNN:OFF_TDNN + H_TDNN].reshape(T, N, H_TDNN).transpose(1, 0, 2)
    hT = slab[0:NUM_LAYERS * N, OFF_H:OFF_H + H].reshape(NUM_LAYERS, N, H)
    cT = slab[0:NUM_LAYERS * N, OFF_C:OFF_C + H].reshape(NUM_LAYERS, N, H)
    new_lstm_cntxts = jnp.stack([hT, cT], axis=1)[:, :, None, :, :]  # (L,2,1,N,H)
    return ctc_posts, tdnn_out, new_lstm_cntxts


if __name__ == "__main__":
    key = jax.random.PRNGKey(0)
    kp, kx, kf, kt, kl = jax.random.split(key, 5)

    params = init_params(kp)

    x = jax.random.normal(kx, (N, C_IN, T), _F32)
    f_cache = jax.random.normal(kf, (N, C_IN, K - 1), _F32)
    tdnn_cache = jax.random.normal(kt, (N, H_TDNN, K - 1), _F32)
    lstm_cntxts = jax.random.normal(kl, (NUM_LAYERS, 2, 1, N, H), _F32)

    fwd = jax.jit(onnx_encoder_forward)
    ctc_posts, tdnn_out, new_cntxts = fwd(params, x, f_cache, tdnn_cache,
                                          lstm_cntxts)
    jax.block_until_ready((ctc_posts, tdnn_out, new_cntxts))

    assert ctc_posts.shape == (N, T, VOCAB)
    assert tdnn_out.shape == (N, T, H_TDNN)
    assert new_cntxts.shape == (NUM_LAYERS, 2, 1, N, H)
    assert bool(jnp.all(jnp.isfinite(ctc_posts)))
    assert bool(jnp.all(jnp.isfinite(new_cntxts)))
    # log_softmax rows must normalise to ~1 in probability space
    assert bool(jnp.allclose(jnp.sum(jnp.exp(ctc_posts), axis=-1), 1.0,
                             atol=1e-3))
    print("KERNEL_OK")
</pallas_src>

<mosaic_0001>
module attributes {stable_mosaic.version = 11 : i64} {
  func.func @_fused_encoder_kernel(%arg0: memref<32x16xf32, #tpu.memory_space<vmem>>, %arg1: memref<48x32xf32, #tpu.memory_space<vmem>>, %arg2: memref<1x32xf32, #tpu.memory_space<vmem>>, %arg3: memref<96x32xf32, #tpu.memory_space<vmem>>, %arg4: memref<1x32xf32, #tpu.memory_space<vmem>>, %arg5: memref<32x128xf32, #tpu.memory_space<vmem>>, %arg6: memref<32x128xf32, #tpu.memory_space<vmem>>, %arg7: memref<1x128xf32, #tpu.memory_space<vmem>>, %arg8: memref<32x128xf32, #tpu.memory_space<vmem>>, %arg9: memref<32x128xf32, #tpu.memory_space<vmem>>, %arg10: memref<1x128xf32, #tpu.memory_space<vmem>>, %arg11: memref<32x32xf32, #tpu.memory_space<vmem>>, %arg12: memref<1x32xf32, #tpu.memory_space<vmem>>, %arg13: memref<2x2x1x2x32xf32, #tpu.memory_space<vmem>>, %arg14: memref<32x128xf32, #tpu.memory_space<vmem>>, %arg15: memref<32x48xf32, #tpu.memory_space<vmem>>, %arg16: memref<32x96xf32, #tpu.memory_space<vmem>>) attributes {dimension_semantics = [], scalar_prefetch = 0 : i64, scratch_operands = 2 : i64, tpu.core_type = #tpu.core_type<tc>} {
    %c0 = arith.constant 0 : index
    %c0_0 = arith.constant 0 : index
    %0 = vector.load %arg0[%c0, %c0_0] : memref<32x16xf32, #tpu.memory_space<vmem>>, vector<32x16xf32>
    %cst = arith.constant 0.000000e+00 : f32
    %1 = vector.broadcast %cst : f32 to vector<32x16xf32>
    %2 = arith.mulf %0, %1 : vector<32x16xf32>
    %cst_1 = arith.constant 0.000000e+00 : f32
    %3 = vector.broadcast %cst_1 : f32 to vector<2x16xf32>
    %c0_2 = arith.constant 0 : index
    %c0_3 = arith.constant 0 : index
    %4 = vector.load %arg15[%c0_2, %c0_3] : memref<32x48xf32, #tpu.memory_space<vmem>>, vector<2x16xf32>
    tpu.vector_store %arg15[%c0_2, %c0_3], %3 {strides = array<i32>} : memref<32x48xf32, #tpu.memory_space<vmem>>, vector<2x16xf32>,
    %5 = vector.extract_strided_slice %2 {offsets = [0, 0], sizes = [30, 16], strides = [1, 1]} : vector<32x16xf32> to vector<30x16xf32>
    %c2 = arith.constant 2 : index
    %c0_4 = arith.constant 0 : index
    %6 = vector.load %arg15[%c2, %c0_4] : memref<32x48xf32, #tpu.memory_space<vmem>>, vector<30x16xf32>
    tpu.vector_store %arg15[%c2, %c0_4], %5 {strides = array<i32>} : memref<32x48xf32, #tpu.memory_space<vmem>>, vector<30x16xf32>,
    %c0_5 = arith.constant 0 : index
    %c16 = arith.constant 16 : index
    %7 = vector.load %arg15[%c0_5, %c16] : memref<32x48xf32, #tpu.memory_space<vmem>>, vector<32x16xf32>
    tpu.vector_store %arg15[%c0_5, %c16], %2 {strides = array<i32>} : memref<32x48xf32, #tpu.memory_space<vmem>>, vector<32x16xf32>,
    %8 = vector.extract_strided_slice %2 {offsets = [2, 0], sizes = [30, 16], strides = [1, 1]} : vector<32x16xf32> to vector<30x16xf32>
    %c0_6 = arith.constant 0 : index
    %c32 = arith.constant 32 : index
    %9 = vector.load %arg15[%c0_6, %c32] : memref<32x48xf32, #tpu.memory_space<vmem>>, vector<30x16xf32>
    tpu.vector_store %arg15[%c0_6, %c32], %8 {strides = array<i32>} : memref<32x48xf32, #tpu.memory_space<vmem>>, vector<30x16xf32>,
    %c30 = arith.constant 30 : index
    %c32_7 = arith.constant 32 : index
    %10 = vector.load %arg15[%c30, %c32_7] : memref<32x48xf32, #tpu.memory_space<vmem>>, vector<2x16xf32>
    tpu.vector_store %arg15[%c30, %c32_7], %3 {strides = array<i32>} : memref<32x48xf32, #tpu.memory_space<vmem>>, vector<2x16xf32>,
    %c0_8 = arith.constant 0 : index
    %c0_9 = arith.constant 0 : index
    %11 = vector.load %arg15[%c0_8, %c0_9] : memref<32x48xf32, #tpu.memory_space<vmem>>, vector<32x48xf32>
    %c0_10 = arith.constant 0 : index
    %c0_11 = arith.constant 0 : index
    %12 = vector.load %arg1[%c0_10, %c0_11] : memref<48x32xf32, #tpu.memory_space<vmem>>, vector<48x32xf32>
    %cst_12 = arith.constant dense<0.000000e+00> : vector<32x32xf32>
    %13 = tpu.matmul %11, %12, %cst_12 {dimension_numbers = #tpu.dot_dimension_numbers<[1], [0], [0], [1], [0, 0, 1, 1], [], []>} : vector<32x48xf32>, vector<48x32xf32>, vector<32x32xf32> -> vector<32x32xf32>
    %c0_13 = arith.constant 0 : index
    %c0_14 = arith.constant 0 : index
    %14 = vector.load %arg2[%c0_13, %c0_14] : memref<1x32xf32, #tpu.memory_space<vmem>>, vector<1x32xf32>
    %15 = vector.broadcast %14 : vector<1x32xf32> to vector<32x32xf32>
    %16 = arith.addf %13, %15 : vector<32x32xf32>
    %cst_15 = arith.constant 0.000000e+00 : f32
    %17 = vector.broadcast %cst_15 : f32 to vector<32x32xf32>
    %18 = arith.maximumf %16, %17 : vector<32x32xf32>
    %cst_16 = arith.constant 0.000000e+00 : f32
    %19 = vector.broadcast %cst_16 : f32 to vector<2x32xf32>
    %c0_17 = arith.constant 0 : index
    %c0_18 = arith.constant 0 : index
    %20 = vector.load %arg16[%c0_17, %c0_18] : memref<32x96xf32, #tpu.memory_space<vmem>>, vector<2x32xf32>
    tpu.vector_store %arg16[%c0_17, %c0_18], %19 {strides = array<i32>} : memref<32x96xf32, #tpu.memory_space<vmem>>, vector<2x32xf32>,
    %21 = vector.extract_strided_slice %18 {offsets = [0, 0], sizes = [30, 32], strides = [1, 1]} : vector<32x32xf32> to vector<30x32xf32>
    %c2_19 = arith.constant 2 : index
    %c0_20 = arith.constant 0 : index
    %22 = vector.load %arg16[%c2_19, %c0_20] : memref<32x96xf32, #tpu.memory_space<vmem>>, vector<30x32xf32>
    tpu.vector_store %arg16[%c2_19, %c0_20], %21 {strides = array<i32>} : memref<32x96xf32, #tpu.memory_space<vmem>>, vector<30x32xf32>,
    %c0_21 = arith.constant 0 : index
    %c32_22 = arith.constant 32 : index
    %23 = vector.load %arg16[%c0_21, %c32_22] : memref<32x96xf32, #tpu.memory_space<vmem>>, vector<32x32xf32>
    tpu.vector_store %arg16[%c0_21, %c32_22], %18 {strides = array<i32>} : memref<32x96xf32, #tpu.memory_space<vmem>>, vector<32x32xf32>,
    %24 = vector.extract_strided_slice %18 {offsets = [2, 0], sizes = [30, 32], strides = [1, 1]} : vector<32x32xf32> to vector<30x32xf32>
    %c0_23 = arith.constant 0 : index
    %c64 = arith.constant 64 : index
    %25 = vector.load %arg16[%c0_23, %c64] : memref<32x96xf32, #tpu.memory_space<vmem>>, vector<30x32xf32>
    tpu.vector_store %arg16[%c0_23, %c64], %24 {strides = array<i32>} : memref<32x96xf32, #tpu.memory_space<vmem>>, vector<30x32xf32>,
    %c30_24 = arith.constant 30 : index
    %c64_25 = arith.constant 64 : index
    %26 = vector.load %arg16[%c30_24, %c64_25] : memref<32x96xf32, #tpu.memory_space<vmem>>, vector<2x32xf32>
    tpu.vector_store %arg16[%c30_24, %c64_25], %19 {strides = array<i32>} : memref<32x96xf32, #tpu.memory_space<vmem>>, vector<2x32xf32>,
    %c0_26 = arith.constant 0 : index
    %c0_27 = arith.constant 0 : index
    %27 = vector.load %arg16[%c0_26, %c0_27] : memref<32x96xf32, #tpu.memory_space<vmem>>, vector<32x96xf32>
    %c0_28 = arith.constant 0 : index
    %c0_29 = arith.constant 0 : index
    %28 = vector.load %arg3[%c0_28, %c0_29] : memref<96x32xf32, #tpu.memory_space<vmem>>, vector<96x32xf32>
    %cst_30 = arith.constant dense<0.000000e+00> : vector<32x32xf32>
    %29 = tpu.matmul %27, %28, %cst_30 {dimension_numbers = #tpu.dot_dimension_numbers<[1], [0], [0], [1], [0, 0, 1, 1], [], []>} : vector<32x96xf32>, vector<96x32xf32>, vector<32x32xf32> -> vector<32x32xf32>
    %c0_31 = arith.constant 0 : index
    %c0_32 = arith.constant 0 : index
    %30 = vector.load %arg4[%c0_31, %c0_32] : memref<1x32xf32, #tpu.memory_space<vmem>>, vector<1x32xf32>
    %31 = vector.broadcast %30 : vector<1x32xf32> to vector<32x32xf32>
    %32 = arith.addf %29, %31 : vector<32x32xf32>
    %cst_33 = arith.constant 0.000000e+00 : f32
    %33 = vector.broadcast %cst_33 : f32 to vector<32x32xf32>
    %34 = arith.maximumf %32, %33 : vector<32x32xf32>
    %cst_34 = arith.constant 0.000000e+00 : f32
    %35 = vector.broadcast %cst_34 : f32 to vector<32x128xf32>
    %c0_35 = arith.constant 0 : index
    %c0_36 = arith.constant 0 : index
    %36 = vector.load %arg14[%c0_35, %c0_36] : memref<32x128xf32, #tpu.memory_space<vmem>>, vector<32x128xf32>
    tpu.vector_store %arg14[%c0_35, %c0_36], %35 {strides = array<i32>} : memref<32x128xf32, #tpu.memory_space<vmem>>, vector<32x128xf32>,
    %c0_37 = arith.constant 0 : index
    %c32_38 = arith.constant 32 : index
    %37 = vector.load %arg14[%c0_37, %c32_38] : memref<32x128xf32, #tpu.memory_space<vmem>>, vector<32x32xf32>
    tpu.vector_store %arg14[%c0_37, %c32_38], %34 {strides = array<i32>} : memref<32x128xf32, #tpu.memory_space<vmem>>, vector<32x32xf32>,
    %c0_39 = arith.constant 0 : index
    %c0_40 = arith.constant 0 : index
    %38 = vector.load %arg6[%c0_39, %c0_40] : memref<32x128xf32, #tpu.memory_space<vmem>>, vector<32x128xf32>
    %c0_41 = arith.constant 0 : index
    %c0_42 = arith.constant 0 : index
    %39 = vector.load %arg8[%c0_41, %c0_42] : memref<32x128xf32, #tpu.memory_space<vmem>>, vector<32x128xf32>
    %c0_43 = arith.constant 0 : index
    %c0_44 = arith.constant 0 : index
    %40 = vector.load %arg10[%c0_43, %c0_44] : memref<1x128xf32, #tpu.memory_space<vmem>>, vector<1x128xf32>
    %c0_45 = arith.constant 0 : index
    %c0_46 = arith.constant 0 : index
    %41 = vector.load %arg5[%c0_45, %c0_46] : memref<32x128xf32, #tpu.memory_space<vmem>>, vector<32x128xf32>
    %cst_47 = arith.constant dense<0.000000e+00> : vector<32x128xf32>
    %42 = tpu.matmul %34, %41, %cst_47 {dimension_numbers = #tpu.dot_dimension_numbers<[1], [0], [0], [1], [0, 0, 1, 1], [], []>} : vector<32x32xf32>, vector<32x128xf32>, vector<32x128xf32> -> vector<32x128xf32>
    %c0_48 = arith.constant 0 : index
    %c0_49 = arith.constant 0 : index
    %43 = vector.load %arg7[%c0_48, %c0_49] : memref<1x128xf32, #tpu.memory_space<vmem>>, vector<1x128xf32>
    %44 = vector.broadcast %43 : vector<1x128xf32> to vector<32x128xf32>
    %45 = arith.addf %42, %44 : vector<32x128xf32>
    %c0_50 = arith.constant 0 : index
    %c0_51 = arith.constant 0 : index
    %c0_52 = arith.constant 0 : index
    %c0_53 = arith.constant 0 : index
    %c0_54 = arith.constant 0 : index
    %46 = vector.load %arg13[%c0_50, %c0_51, %c0_52, %c0_53, %c0_54] : memref<2x2x1x2x32xf32, #tpu.memory_space<vmem>>, vector<1x1x1x2x32xf32>
    %47 = vector.shape_cast %46 : vector<1x1x1x2x32xf32> to vector<2x32xf32>
    %c0_55 = arith.constant 0 : index
    %c1 = arith.constant 1 : index
    %c0_56 = arith.constant 0 : index
    %c0_57 = arith.constant 0 : index
    %c0_58 = arith.constant 0 : index
    %48 = vector.load %arg13[%c0_55, %c1, %c0_56, %c0_57, %c0_58] : memref<2x2x1x2x32xf32, #tpu.memory_space<vmem>>, vector<1x1x1x2x32xf32>
    %49 = vector.shape_cast %48 : vector<1x1x1x2x32xf32> to vector<2x32xf32>
    %50 = vector.extract_strided_slice %45 {offsets = [0, 0], sizes = [2, 128], strides = [1, 1]} : vector<32x128xf32> to vector<2x128xf32>
    %cst_59 = arith.constant dense<0.000000e+00> : vector<2x128xf32>
    %51 = tpu.matmul %47, %38, %cst_59 {dimension_numbers = #tpu.dot_dimension_numbers<[1], [0], [0], [1], [0, 0, 1, 1], [], []>} : vector<2x32xf32>, vector<32x128xf32>, vector<2x128xf32> -> vector<2x128xf32>
    %52 = arith.addf %50, %51 : vector<2x128xf32>
    %53 = vector.extract_strided_slice %52 {offsets = [0, 0], sizes = [2, 32], strides = [1, 1]} : vector<2x128xf32> to vector<2x32xf32>
    %54 = arith.negf %53 : vector<2x32xf32>
    %55 = math.exp %54 : vector<2x32xf32>
    %cst_60 = arith.constant 1.000000e+00 : f32
    %56 = vector.broadcast %cst_60 : f32 to vector<2x32xf32>
    %57 = arith.addf %56, %55 : vector<2x32xf32>
    %58 = arith.divf %56, %57 : vector<2x32xf32>
    %59 = vector.extract_strided_slice %52 {offsets = [0, 32], sizes = [2, 32], strides = [1, 1]} : vector<2x128xf32> to vector<2x32xf32>
    %60 = arith.negf %59 : vector<2x32xf32>
    %61 = math.exp %60 : vector<2x32xf32>
    %cst_61 = arith.constant 1.000000e+00 : f32
    %62 = vector.broadcast %cst_61 : f32 to vector<2x32xf32>
    %63 = arith.addf %62, %61 : vector<2x32xf32>
    %64 = arith.divf %62, %63 : vector<2x32xf32>
    %65 = vector.extract_strided_slice %52 {offsets = [0, 64], sizes = [2, 32], strides = [1, 1]} : vector<2x128xf32> to vector<2x32xf32>
    %66 = math.tanh %65 : vector<2x32xf32>
    %67 = vector.extract_strided_slice %52 {offsets = [0, 96], sizes = [2, 32], strides = [1, 1]} : vector<2x128xf32> to vector<2x32xf32>
    %68 = arith.negf %67 : vector<2x32xf32>
    %69 = math.exp %68 : vector<2x32xf32>
    %cst_62 = arith.constant 1.000000e+00 : f32
    %70 = vector.broadcast %cst_62 : f32 to vector<2x32xf32>
    %71 = arith.addf %70, %69 : vector<2x32xf32>
    %72 = arith.divf %70, %71 : vector<2x32xf32>
    %73 = arith.mulf %64, %49 : vector<2x32xf32>
    %74 = arith.mulf %58, %66 : vector<2x32xf32>
    %75 = arith.addf %73, %74 : vector<2x32xf32>
    %76 = math.tanh %75 : vector<2x32xf32>
    %77 = arith.mulf %72, %76 : vector<2x32xf32>
    %cst_63 = arith.constant dense<0.000000e+00> : vector<2x128xf32>
    %78 = tpu.matmul %77, %39, %cst_63 {dimension_numbers = #tpu.dot_dimension_numbers<[1], [0], [0], [1], [0, 0, 1, 1], [], []>} : vector<2x32xf32>, vector<32x128xf32>, vector<2x128xf32> -> vector<2x128xf32>
    %79 = vector.broadcast %40 : vector<1x128xf32> to vector<2x128xf32>
    %80 = arith.addf %78, %79 : vector<2x128xf32>
    %81 = vector.extract_strided_slice %45 {offsets = [2, 0], sizes = [2, 128], strides = [1, 1]} : vector<32x128xf32> to vector<2x128xf32>
    %cst_64 = arith.constant dense<0.000000e+00> : vector<2x128xf32>
    %82 = tpu.matmul %77, %38, %cst_64 {dimension_numbers = #tpu.dot_dimension_numbers<[1], [0], [0], [1], [0, 0, 1, 1], [], []>} : vector<2x32xf32>, vector<32x128xf32>, vector<2x128xf32> -> vector<2x128xf32>
    %83 = arith.addf %81, %82 : vector<2x128xf32>
    %84 = vector.extract_strided_slice %83 {offsets = [0, 0], sizes = [2, 32], strides = [1, 1]} : vector<2x128xf32> to vector<2x32xf32>
    %85 = arith.negf %84 : vector<2x32xf32>
    %86 = math.exp %85 : vector<2x32xf32>
    %cst_65 = arith.constant 1.000000e+00 : f32
    %87 = vector.broadcast %cst_65 : f32 to vector<2x32xf32>
    %88 = arith.addf %87, %86 : vector<2x32xf32>
    %89 = arith.divf %87, %88 : vector<2x32xf32>
    %90 = vector.extract_strided_slice %83 {offsets = [0, 32], sizes = [2, 32], strides = [1, 1]} : vector<2x128xf32> to vector<2x32xf32>
    %91 = arith.negf %90 : vector<2x32xf32>
    %92 = math.exp %91 : vector<2x32xf32>
    %cst_66 = arith.constant 1.000000e+00 : f32
    %93 = vector.broadcast %cst_66 : f32 to vector<2x32xf32>
    %94 = arith.addf %93, %92 : vector<2x32xf32>
    %95 = arith.divf %93, %94 : vector<2x32xf32>
    %96 = vector.extract_strided_slice %83 {offsets = [0, 64], sizes = [2, 32], strides = [1, 1]} : vector<2x128xf32> to vector<2x32xf32>
    %97 = math.tanh %96 : vector<2x32xf32>
    %98 = vector.extract_strided_slice %83 {offsets = [0, 96], sizes = [2, 32], strides = [1, 1]} : vector<2x128xf32> to vector<2x32xf32>
    %99 = arith.negf %98 : vector<2x32xf32>
    %100 = math.exp %99 : vector<2x32xf32>
    %cst_67 = arith.constant 1.000000e+00 : f32
    %101 = vector.broadcast %cst_67 : f32 to vector<2x32xf32>
    %102 = arith.addf %101, %100 : vector<2x32xf32>
    %103 = arith.divf %101, %102 : vector<2x32xf32>
    %104 = arith.mulf %95, %75 : vector<2x32xf32>
    %105 = arith.mulf %89, %97 : vector<2x32xf32>
    %106 = arith.addf %104, %105 : vector<2x32xf32>
    %107 = math.tanh %106 : vector<2x32xf32>
    %108 = arith.mulf %103, %107 : vector<2x32xf32>
    %cst_68 = arith.constant dense<0.000000e+00> : vector<2x128xf32>
    %109 = tpu.matmul %108, %39, %cst_68 {dimension_numbers = #tpu.dot_dimension_numbers<[1], [0], [0], [1], [0, 0, 1, 1], [], []>} : vector<2x32xf32>, vector<32x128xf32>, vector<2x128xf32> -> vector<2x128xf32>
    %110 = vector.broadcast %40 : vector<1x128xf32> to vector<2x128xf32>
    %111 = arith.addf %109, %110 : vector<2x128xf32>
    %112 = vector.extract_strided_slice %45 {offsets = [4, 0], sizes = [2, 128], strides = [1, 1]} : vector<32x128xf32> to vector<2x128xf32>
    %cst_69 = arith.constant dense<0.000000e+00> : vector<2x128xf32>
    %113 = tpu.matmul %108, %38, %cst_69 {dimension_numbers = #tpu.dot_dimension_numbers<[1], [0], [0], [1], [0, 0, 1, 1], [], []>} : vector<2x32xf32>, vector<32x128xf32>, vector<2x128xf32> -> vector<2x128xf32>
    %114 = arith.addf %112, %113 : vector<2x128xf32>
    %115 = vector.extract_strided_slice %114 {offsets = [0, 0], sizes = [2, 32], strides = [1, 1]} : vector<2x128xf32> to vector<2x32xf32>
    %116 = arith.negf %115 : vector<2x32xf32>
    %117 = math.exp %116 : vector<2x32xf32>
    %cst_70 = arith.constant 1.000000e+00 : f32
    %118 = vector.broadcast %cst_70 : f32 to vector<2x32xf32>
    %119 = arith.addf %118, %117 : vector<2x32xf32>
    %120 = arith.divf %118, %119 : vector<2x32xf32>
    %121 = vector.extract_strided_slice %114 {offsets = [0, 32], sizes = [2, 32], strides = [1, 1]} : vector<2x128xf32> to vector<2x32xf32>
    %122 = arith.negf %121 : vector<2x32xf32>
    %123 = math.exp %122 : vector<2x32xf32>
    %cst_71 = arith.constant 1.000000e+00 : f32
    %124 = vector.broadcast %cst_71 : f32 to vector<2x32xf32>
    %125 = arith.addf %124, %123 : vector<2x32xf32>
    %126 = arith.divf %124, %125 : vector<2x32xf32>
    %127 = vector.extract_strided_slice %114 {offsets = [0, 64], sizes = [2, 32], strides = [1, 1]} : vector<2x128xf32> to vector<2x32xf32>
    %128 = math.tanh %127 : vector<2x32xf32>
    %129 = vector.extract_strided_slice %114 {offsets = [0, 96], sizes = [2, 32], strides = [1, 1]} : vector<2x128xf32> to vector<2x32xf32>
    %130 = arith.negf %129 : vector<2x32xf32>
    %131 = math.exp %130 : vector<2x32xf32>
    %cst_72 = arith.constant 1.000000e+00 : f32
    %132 = vector.broadcast %cst_72 : f32 to vector<2x32xf32>
    %133 = arith.addf %132, %131 : vector<2x32xf32>
    %134 = arith.divf %132, %133 : vector<2x32xf32>
    %135 = arith.mulf %126, %106 : vector<2x32xf32>
    %136 = arith.mulf %120, %128 : vector<2x32xf32>
    %137 = arith.addf %135, %136 : vector<2x32xf32>
    %138 = math.tanh %137 : vector<2x32xf32>
    %139 = arith.mulf %134, %138 : vector<2x32xf32>
    %cst_73 = arith.constant dense<0.000000e+00> : vector<2x128xf32>
    %140 = tpu.matmul %139, %39, %cst_73 {dimension_numbers = #tpu.dot_dimension_numbers<[1], [0], [0], [1], [0, 0, 1, 1], [], []>} : vector<2x32xf32>, vector<32x128xf32>, vector<2x128xf32> -> vector<2x128xf32>
    %141 = vector.broadcast %40 : vector<1x128xf32> to vector<2x128xf32>
    %142 = arith.addf %140, %141 : vector<2x128xf32>
    %143 = vector.extract_strided_slice %45 {offsets = [6, 0], sizes = [2, 128], strides = [1, 1]} : vector<32x128xf32> to vector<2x128xf32>
    %cst_74 = arith.constant dense<0.000000e+00> : vector<2x128xf32>
    %144 = tpu.matmul %139, %38, %cst_74 {dimension_numbers = #tpu.dot_dimension_numbers<[1], [0], [0], [1], [0, 0, 1, 1], [], []>} : vector<2x32xf32>, vector<32x128xf32>, vector<2x128xf32> -> vector<2x128xf32>
    %145 = arith.addf %143, %144 : vector<2x128xf32>
    %146 = vector.extract_strided_slice %145 {offsets = [0, 0], sizes = [2, 32], strides = [1, 1]} : vector<2x128xf32> to vector<2x32xf32>
    %147 = arith.negf %146 : vector<2x32xf32>
    %148 = math.exp %147 : vector<2x32xf32>
    %cst_75 = arith.constant 1.000000e+00 : f32
    %149 = vector.broadcast %cst_75 : f32 to vector<2x32xf32>
    %150 = arith.addf %149, %148 : vector<2x32xf32>
    %151 = arith.divf %149, %150 : vector<2x32xf32>
    %152 = vector.extract_strided_slice %145 {offsets = [0, 32], sizes = [2, 32], strides = [1, 1]} : vector<2x128xf32> to vector<2x32xf32>
    %153 = arith.negf %152 : vector<2x32xf32>
    %154 = math.exp %153 : vector<2x32xf32>
    %cst_76 = arith.constant 1.000000e+00 : f32
    %155 = vector.broadcast %cst_76 : f32 to vector<2x32xf32>
    %156 = arith.addf %155, %154 : vector<2x32xf32>
    %157 = arith.divf %155, %156 : vector<2x32xf32>
    %158 = vector.extract_strided_slice %145 {offsets = [0, 64], sizes = [2, 32], strides = [1, 1]} : vector<2x128xf32> to vector<2x32xf32>
    %159 = math.tanh %158 : vector<2x32xf32>
    %160 = vector.extract_strided_slice %145 {offsets = [0, 96], sizes = [2, 32], strides = [1, 1]} : vector<2x128xf32> to vector<2x32xf32>
    %161 = arith.negf %160 : vector<2x32xf32>
    %162 = math.exp %161 : vector<2x32xf32>
    %cst_77 = arith.constant 1.000000e+00 : f32
    %163 = vector.broadcast %cst_77 : f32 to vector<2x32xf32>
    %164 = arith.addf %163, %162 : vector<2x32xf32>
    %165 = arith.divf %163, %164 : vector<2x32xf32>
    %166 = arith.mulf %157, %137 : vector<2x32xf32>
    %167 = arith.mulf %151, %159 : vector<2x32xf32>
    %168 = arith.addf %166, %167 : vector<2x32xf32>
    %169 = math.tanh %168 : vector<2x32xf32>
    %170 = arith.mulf %165, %169 : vector<2x32xf32>
    %cst_78 = arith.constant dense<0.000000e+00> : vector<2x128xf32>
    %171 = tpu.matmul %170, %39, %cst_78 {dimension_numbers = #tpu.dot_dimension_numbers<[1], [0], [0], [1], [0, 0, 1, 1], [], []>} : vector<2x32xf32>, vector<32x128xf32>, vector<2x128xf32> -> vector<2x128xf32>
    %172 = vector.broadcast %40 : vector<1x128xf32> to vector<2x128xf32>
    %173 = arith.addf %171, %172 : vector<2x128xf32>
    %174 = vector.extract_strided_slice %45 {offsets = [8, 0], sizes = [2, 128], strides = [1, 1]} : vector<32x128xf32> to vector<2x128xf32>
    %cst_79 = arith.constant dense<0.000000e+00> : vector<2x128xf32>
    %175 = tpu.matmul %170, %38, %cst_79 {dimension_numbers = #tpu.dot_dimension_numbers<[1], [0], [0], [1], [0, 0, 1, 1], [], []>} : vector<2x32xf32>, vector<32x128xf32>, vector<2x128xf32> -> vector<2x128xf32>
    %176 = arith.addf %174, %175 : vector<2x128xf32>
    %177 = vector.extract_strided_slice %176 {offsets = [0, 0], sizes = [2, 32], strides = [1, 1]} : vector<2x128xf32> to vector<2x32xf32>
    %178 = arith.negf %177 : vector<2x32xf32>
    %179 = math.exp %178 : vector<2x32xf32>
    %cst_80 = arith.constant 1.000000e+00 : f32
    %180 = vector.broadcast %cst_80 : f32 to vector<2x32xf32>
    %181 = arith.addf %180, %179 : vector<2x32xf32>
    %182 = arith.divf %180, %181 : vector<2x32xf32>
    %183 = vector.extract_strided_slice %176 {offsets = [0, 32], sizes = [2, 32], strides = [1, 1]} : vector<2x128xf32> to vector<2x32xf32>
    %184 = arith.negf %183 : vector<2x32xf32>
    %185 = math.exp %184 : vector<2x32xf32>
    %cst_81 = arith.constant 1.000000e+00 : f32
    %186 = vector.broadcast %cst_81 : f32 to vector<2x32xf32>
    %187 = arith.addf %186, %185 : vector<2x32xf32>
    %188 = arith.divf %186, %187 : vector<2x32xf32>
    %189 = vector.extract_strided_slice %176 {offsets = [0, 64], sizes = [2, 32], strides = [1, 1]} : vector<2x128xf32> to vector<2x32xf32>
    %190 = math.tanh %189 : vector<2x32xf32>
    %191 = vector.extract_strided_slice %176 {offsets = [0, 96], sizes = [2, 32], strides = [1, 1]} : vector<2x128xf32> to vector<2x32xf32>
    %192 = arith.negf %191 : vector<2x32xf32>
    %193 = math.exp %192 : vector<2x32xf32>
    %cst_82 = arith.constant 1.000000e+00 : f32
    %194 = vector.broadcast %cst_82 : f32 to vector<2x32xf32>
    %195 = arith.addf %194, %193 : vector<2x32xf32>
    %196 = arith.divf %194, %195 : vector<2x32xf32>
    %197 = arith.mulf %188, %168 : vector<2x32xf32>
    %198 = arith.mulf %182, %190 : vector<2x32xf32>
    %199 = arith.addf %197, %198 : vector<2x32xf32>
    %200 = math.tanh %199 : vector<2x32xf32>
    %201 = arith.mulf %196, %200 : vector<2x32xf32>
    %cst_83 = arith.constant dense<0.000000e+00> : vector<2x128xf32>
    %202 = tpu.matmul %201, %39, %cst_83 {dimension_numbers = #tpu.dot_dimension_numbers<[1], [0], [0], [1], [0, 0, 1, 1], [], []>} : vector<2x32xf32>, vector<32x128xf32>, vector<2x128xf32> -> vector<2x128xf32>
    %203 = vector.broadcast %40 : vector<1x128xf32> to vector<2x128xf32>
    %204 = arith.addf %202, %203 : vector<2x128xf32>
    %205 = vector.extract_strided_slice %45 {offsets = [10, 0], sizes = [2, 128], strides = [1, 1]} : vector<32x128xf32> to vector<2x128xf32>
    %cst_84 = arith.constant dense<0.000000e+00> : vector<2x128xf32>
    %206 = tpu.matmul %201, %38, %cst_84 {dimension_numbers = #tpu.dot_dimension_numbers<[1], [0], [0], [1], [0, 0, 1, 1], [], []>} : vector<2x32xf32>, vector<32x128xf32>, vector<2x128xf32> -> vector<2x128xf32>
    %207 = arith.addf %205, %206 : vector<2x128xf32>
    %208 = vector.extract_strided_slice %207 {offsets = [0, 0], sizes = [2, 32], strides = [1, 1]} : vector<2x128xf32> to vector<2x32xf32>
    %209 = arith.negf %208 : vector<2x32xf32>
    %210 = math.exp %209 : vector<2x32xf32>
    %cst_85 = arith.constant 1.000000e+00 : f32
    %211 = vector.broadcast %cst_85 : f32 to vector<2x32xf32>
    %212 = arith.addf %211, %210 : vector<2x32xf32>
    %213 = arith.divf %211, %212 : vector<2x32xf32>
    %214 = vector.extract_strided_slice %207 {offsets = [0, 32], sizes = [2, 32], strides = [1, 1]} : vector<2x128xf32> to vector<2x32xf32>
    %215 = arith.negf %214 : vector<2x32xf32>
    %216 = math.exp %215 : vector<2x32xf32>
    %cst_86 = arith.constant 1.000000e+00 : f32
    %217 = vector.broadcast %cst_86 : f32 to vector<2x32xf32>
    %218 = arith.addf %217, %216 : vector<2x32xf32>
    %219 = arith.divf %217, %218 : vector<2x32xf32>
    %220 = vector.extract_strided_slice %207 {offsets = [0, 64], sizes = [2, 32], strides = [1, 1]} : vector<2x128xf32> to vector<2x32xf32>
    %221 = math.tanh %220 : vector<2x32xf32>
    %222 = vector.extract_strided_slice %207 {offsets = [0, 96], sizes = [2, 32], strides = [1, 1]} : vector<2x128xf32> to vector<2x32xf32>
    %223 = arith.negf %222 : vector<2x32xf32>
    %224 = math.exp %223 : vector<2x32xf32>
    %cst_87 = arith.constant 1.000000e+00 : f32
    %225 = vector.broadcast %cst_87 : f32 to vector<2x32xf32>
    %226 = arith.addf %225, %224 : vector<2x32xf32>
    %227 = arith.divf %225, %226 : vector<2x32xf32>
    %228 = arith.mulf %219, %199 : vector<2x32xf32>
    %229 = arith.mulf %213, %221 : vector<2x32xf32>
    %230 = arith.addf %228, %229 : vector<2x32xf32>
    %231 = math.tanh %230 : vector<2x32xf32>
    %232 = arith.mulf %227, %231 : vector<2x32xf32>
    %cst_88 = arith.constant dense<0.000000e+00> : vector<2x128xf32>
    %233 = tpu.matmul %232, %39, %cst_88 {dimension_numbers = #tpu.dot_dimension_numbers<[1], [0], [0], [1], [0, 0, 1, 1], [], []>} : vector<2x32xf32>, vector<32x128xf32>, vector<2x128xf32> -> vector<2x128xf32>
    %234 = vector.broadcast %40 : vector<1x128xf32> to vector<2x128xf32>
    %235 = arith.addf %233, %234 : vector<2x128xf32>
    %236 = vector.extract_strided_slice %45 {offsets = [12, 0], sizes = [2, 128], strides = [1, 1]} : vector<32x128xf32> to vector<2x128xf32>
    %cst_89 = arith.constant dense<0.000000e+00> : vector<2x128xf32>
    %237 = tpu.matmul %232, %38, %cst_89 {dimension_numbers = #tpu.dot_dimension_numbers<[1], [0], [0], [1], [0, 0, 1, 1], [], []>} : vector<2x32xf32>, vector<32x128xf32>, vector<2x128xf32> -> vector<2x128xf32>
    %238 = arith.addf %236, %237 : vector<2x128xf32>
    %239 = vector.extract_strided_slice %238 {offsets = [0, 0], sizes = [2, 32], strides = [1, 1]} : vector<2x128xf32> to vector<2x32xf32>
    %240 = arith.negf %239 : vector<2x32xf32>
    %241 = math.exp %240 : vector<2x32xf32>
    %cst_90 = arith.constant 1.000000e+00 : f32
    %242 = vector.broadcast %cst_90 : f32 to vector<2x32xf32>
    %243 = arith.addf %242, %241 : vector<2x32xf32>
    %244 = arith.divf %242, %243 : vector<2x32xf32>
    %245 = vector.extract_strided_slice %238 {offsets = [0, 32], sizes = [2, 32], strides = [1, 1]} : vector<2x128xf32> to vector<2x32xf32>
    %246 = arith.negf %245 : vector<2x32xf32>
    %247 = math.exp %246 : vector<2x32xf32>
    %cst_91 = arith.constant 1.000000e+00 : f32
    %248 = vector.broadcast %cst_91 : f32 to vector<2x32xf32>
    %249 = arith.addf %248, %247 : vector<2x32xf32>
    %250 = arith.divf %248, %249 : vector<2x32xf32>
    %251 = vector.extract_strided_slice %238 {offsets = [0, 64], sizes = [2, 32], strides = [1, 1]} : vector<2x128xf32> to vector<2x32xf32>
    %252 = math.tanh %251 : vector<2x32xf32>
    %253 = vector.extract_strided_slice %238 {offsets = [0, 96], sizes = [2, 32], strides = [1, 1]} : vector<2x128xf32> to vector<2x32xf32>
    %254 = arith.negf %253 : vector<2x32xf32>
    %255 = math.exp %254 : vector<2x32xf32>
    %cst_92 = arith.constant 1.000000e+00 : f32
    %256 = vector.broadcast %cst_92 : f32 to vector<2x32xf32>
    %257 = arith.addf %256, %255 : vector<2x32xf32>
    %258 = arith.divf %256, %257 : vector<2x32xf32>
    %259 = arith.mulf %250, %230 : vector<2x32xf32>
    %260 = arith.mulf %244, %252 : vector<2x32xf32>
    %261 = arith.addf %259, %260 : vector<2x32xf32>
    %262 = math.tanh %261 : vector<2x32xf32>
    %263 = arith.mulf %258, %262 : vector<2x32xf32>
    %cst_93 = arith.constant dense<0.000000e+00> : vector<2x128xf32>
    %264 = tpu.matmul %263, %39, %cst_93 {dimension_numbers = #tpu.dot_dimension_numbers<[1], [0], [0], [1], [0, 0, 1, 1], [], []>} : vector<2x32xf32>, vector<32x128xf32>, vector<2x128xf32> -> vector<2x128xf32>
    %265 = vector.broadcast %40 : vector<1x128xf32> to vector<2x128xf32>
    %266 = arith.addf %264, %265 : vector<2x128xf32>
    %267 = vector.extract_strided_slice %45 {offsets = [14, 0], sizes = [2, 128], strides = [1, 1]} : vector<32x128xf32> to vector<2x128xf32>
    %cst_94 = arith.constant dense<0.000000e+00> : vector<2x128xf32>
    %268 = tpu.matmul %263, %38, %cst_94 {dimension_numbers = #tpu.dot_dimension_numbers<[1], [0], [0], [1], [0, 0, 1, 1], [], []>} : vector<2x32xf32>, vector<32x128xf32>, vector<2x128xf32> -> vector<2x128xf32>
    %269 = arith.addf %267, %268 : vector<2x128xf32>
    %270 = vector.extract_strided_slice %269 {offsets = [0, 0], sizes = [2, 32], strides = [1, 1]} : vector<2x128xf32> to vector<2x32xf32>
    %271 = arith.negf %270 : vector<2x32xf32>
    %272 = math.exp %271 : vector<2x32xf32>
    %cst_95 = arith.constant 1.000000e+00 : f32
    %273 = vector.broadcast %cst_95 : f32 to vector<2x32xf32>
    %274 = arith.addf %273, %272 : vector<2x32xf32>
    %275 = arith.divf %273, %274 : vector<2x32xf32>
    %276 = vector.extract_strided_slice %269 {offsets = [0, 32], sizes = [2, 32], strides = [1, 1]} : vector<2x128xf32> to vector<2x32xf32>
    %277 = arith.negf %276 : vector<2x32xf32>
    %278 = math.exp %277 : vector<2x32xf32>
    %cst_96 = arith.constant 1.000000e+00 : f32
    %279 = vector.broadcast %cst_96 : f32 to vector<2x32xf32>
    %280 = arith.addf %279, %278 : vector<2x32xf32>
    %281 = arith.divf %279, %280 : vector<2x32xf32>
    %282 = vector.extract_strided_slice %269 {offsets = [0, 64], sizes = [2, 32], strides = [1, 1]} : vector<2x128xf32> to vector<2x32xf32>
    %283 = math.tanh %282 : vector<2x32xf32>
    %284 = vector.extract_strided_slice %269 {offsets = [0, 96], sizes = [2, 32], strides = [1, 1]} : vector<2x128xf32> to vector<2x32xf32>
    %285 = arith.negf %284 : vector<2x32xf32>
    %286 = math.exp %285 : vector<2x32xf32>
    %cst_97 = arith.constant 1.000000e+00 : f32
    %287 = vector.broadcast %cst_97 : f32 to vector<2x32xf32>
    %288 = arith.addf %287, %286 : vector<2x32xf32>
    %289 = arith.divf %287, %288 : vector<2x32xf32>
    %290 = arith.mulf %281, %261 : vector<2x32xf32>
    %291 = arith.mulf %275, %283 : vector<2x32xf32>
    %292 = arith.addf %290, %291 : vector<2x32xf32>
    %293 = math.tanh %292 : vector<2x32xf32>
    %294 = arith.mulf %289, %293 : vector<2x32xf32>
    %cst_98 = arith.constant dense<0.000000e+00> : vector<2x128xf32>
    %295 = tpu.matmul %294, %39, %cst_98 {dimension_numbers = #tpu.dot_dimension_numbers<[1], [0], [0], [1], [0, 0, 1, 1], [], []>} : vector<2x32xf32>, vector<32x128xf32>, vector<2x128xf32> -> vector<2x128xf32>
    %296 = vector.broadcast %40 : vector<1x128xf32> to vector<2x128xf32>
    %297 = arith.addf %295, %296 : vector<2x128xf32>
    %298 = vector.extract_strided_slice %45 {offsets = [16, 0], sizes = [2, 128], strides = [1, 1]} : vector<32x128xf32> to vector<2x128xf32>
    %cst_99 = arith.constant dense<0.000000e+00> : vector<2x128xf32>
    %299 = tpu.matmul %294, %38, %cst_99 {dimension_numbers = #tpu.dot_dimension_numbers<[1], [0], [0], [1], [0, 0, 1, 1], [], []>} : vector<2x32xf32>, vector<32x128xf32>, vector<2x128xf32> -> vector<2x128xf32>
    %300 = arith.addf %298, %299 : vector<2x128xf32>
    %301 = vector.extract_strided_slice %300 {offsets = [0, 0], sizes = [2, 32], strides = [1, 1]} : vector<2x128xf32> to vector<2x32xf32>
    %302 = arith.negf %301 : vector<2x32xf32>
    %303 = math.exp %302 : vector<2x32xf32>
    %cst_100 = arith.constant 1.000000e+00 : f32
    %304 = vector.broadcast %cst_100 : f32 to vector<2x32xf32>
    %305 = arith.addf %304, %303 : vector<2x32xf32>
    %306 = arith.divf %304, %305 : vector<2x32xf32>
    %307 = vector.extract_strided_slice %300 {offsets = [0, 32], sizes = [2, 32], strides = [1, 1]} : vector<2x128xf32> to vector<2x32xf32>
    %308 = arith.negf %307 : vector<2x32xf32>
    %309 = math.exp %308 : vector<2x32xf32>
    %cst_101 = arith.constant 1.000000e+00 : f32
    %310 = vector.broadcast %cst_101 : f32 to vector<2x32xf32>
    %311 = arith.addf %310, %309 : vector<2x32xf32>
    %312 = arith.divf %310, %311 : vector<2x32xf32>
    %313 = vector.extract_strided_slice %300 {offsets = [0, 64], sizes = [2, 32], strides = [1, 1]} : vector<2x128xf32> to vector<2x32xf32>
    %314 = math.tanh %313 : vector<2x32xf32>
    %315 = vector.extract_strided_slice %300 {offsets = [0, 96], sizes = [2, 32], strides = [1, 1]} : vector<2x128xf32> to vector<2x32xf32>
    %316 = arith.negf %315 : vector<2x32xf32>
    %317 = math.exp %316 : vector<2x32xf32>
    %cst_102 = arith.constant 1.000000e+00 : f32
    %318 = vector.broadcast %cst_102 : f32 to vector<2x32xf32>
    %319 = arith.addf %318, %317 : vector<2x32xf32>
    %320 = arith.divf %318, %319 : vector<2x32xf32>
    %321 = arith.mulf %312, %292 : vector<2x32xf32>
    %322 = arith.mulf %306, %314 : vector<2x32xf32>
    %323 = arith.addf %321, %322 : vector<2x32xf32>
    %324 = math.tanh %323 : vector<2x32xf32>
    %325 = arith.mulf %320, %324 : vector<2x32xf32>
    %cst_103 = arith.constant dense<0.000000e+00> : vector<2x128xf32>
    %326 = tpu.matmul %325, %39, %cst_103 {dimension_numbers = #tpu.dot_dimension_numbers<[1], [0], [0], [1], [0, 0, 1, 1], [], []>} : vector<2x32xf32>, vector<32x128xf32>, vector<2x128xf32> -> vector<2x128xf32>
    %327 = vector.broadcast %40 : vector<1x128xf32> to vector<2x128xf32>
    %328 = arith.addf %326, %327 : vector<2x128xf32>
    %329 = vector.extract_strided_slice %45 {offsets = [18, 0], sizes = [2, 128], strides = [1, 1]} : vector<32x128xf32> to vector<2x128xf32>
    %cst_104 = arith.constant dense<0.000000e+00> : vector<2x128xf32>
    %330 = tpu.matmul %325, %38, %cst_104 {dimension_numbers = #tpu.dot_dimension_numbers<[1], [0], [0], [1], [0, 0, 1, 1], [], []>} : vector<2x32xf32>, vector<32x128xf32>, vector<2x128xf32> -> vector<2x128xf32>
    %331 = arith.addf %329, %330 : vector<2x128xf32>
    %332 = vector.extract_strided_slice %331 {offsets = [0, 0], sizes = [2, 32], strides = [1, 1]} : vector<2x128xf32> to vector<2x32xf32>
    %333 = arith.negf %332 : vector<2x32xf32>
    %334 = math.exp %333 : vector<2x32xf32>
    %cst_105 = arith.constant 1.000000e+00 : f32
    %335 = vector.broadcast %cst_105 : f32 to vector<2x32xf32>
    %336 = arith.addf %335, %334 : vector<2x32xf32>
    %337 = arith.divf %335, %336 : vector<2x32xf32>
    %338 = vector.extract_strided_slice %331 {offsets = [0, 32], sizes = [2, 32], strides = [1, 1]} : vector<2x128xf32> to vector<2x32xf32>
    %339 = arith.negf %338 : vector<2x32xf32>
    %340 = math.exp %339 : vector<2x32xf32>
    %cst_106 = arith.constant 1.000000e+00 : f32
    %341 = vector.broadcast %cst_106 : f32 to vector<2x32xf32>
    %342 = arith.addf %341, %340 : vector<2x32xf32>
    %343 = arith.divf %341, %342 : vector<2x32xf32>
    %344 = vector.extract_strided_slice %331 {offsets = [0, 64], sizes = [2, 32], strides = [1, 1]} : vector<2x128xf32> to vector<2x32xf32>
    %345 = math.tanh %344 : vector<2x32xf32>
    %346 = vector.extract_strided_slice %331 {offsets = [0, 96], sizes = [2, 32], strides = [1, 1]} : vector<2x128xf32> to vector<2x32xf32>
    %347 = arith.negf %346 : vector<2x32xf32>
    %348 = math.exp %347 : vector<2x32xf32>
    %cst_107 = arith.constant 1.000000e+00 : f32
    %349 = vector.broadcast %cst_107 : f32 to vector<2x32xf32>
    %350 = arith.addf %349, %348 : vector<2x32xf32>
    %351 = arith.divf %349, %350 : vector<2x32xf32>
    %352 = arith.mulf %343, %323 : vector<2x32xf32>
    %353 = arith.mulf %337, %345 : vector<2x32xf32>
    %354 = arith.addf %352, %353 : vector<2x32xf32>
    %355 = math.tanh %354 : vector<2x32xf32>
    %356 = arith.mulf %351, %355 : vector<2x32xf32>
    %cst_108 = arith.constant dense<0.000000e+00> : vector<2x128xf32>
    %357 = tpu.matmul %356, %39, %cst_108 {dimension_numbers = #tpu.dot_dimension_numbers<[1], [0], [0], [1], [0, 0, 1, 1], [], []>} : vector<2x32xf32>, vector<32x128xf32>, vector<2x128xf32> -> vector<2x128xf32>
    %358 = vector.broadcast %40 : vector<1x128xf32> to vector<2x128xf32>
    %359 = arith.addf %357, %358 : vector<2x128xf32>
    %360 = vector.extract_strided_slice %45 {offsets = [20, 0], sizes = [2, 128], strides = [1, 1]} : vector<32x128xf32> to vector<2x128xf32>
    %cst_109 = arith.constant dense<0.000000e+00> : vector<2x128xf32>
    %361 = tpu.matmul %356, %38, %cst_109 {dimension_numbers = #tpu.dot_dimension_numbers<[1], [0], [0], [1], [0, 0, 1, 1], [], []>} : vector<2x32xf32>, vector<32x128xf32>, vector<2x128xf32> -> vector<2x128xf32>
    %362 = arith.addf %360, %361 : vector<2x128xf32>
    %363 = vector.extract_strided_slice %362 {offsets = [0, 0], sizes = [2, 32], strides = [1, 1]} : vector<2x128xf32> to vector<2x32xf32>
    %364 = arith.negf %363 : vector<2x32xf32>
    %365 = math.exp %364 : vector<2x32xf32>
    %cst_110 = arith.constant 1.000000e+00 : f32
    %366 = vector.broadcast %cst_110 : f32 to vector<2x32xf32>
    %367 = arith.addf %366, %365 : vector<2x32xf32>
    %368 = arith.divf %366, %367 : vector<2x32xf32>
    %369 = vector.extract_strided_slice %362 {offsets = [0, 32], sizes = [2, 32], strides = [1, 1]} : vector<2x128xf32> to vector<2x32xf32>
    %370 = arith.negf %369 : vector<2x32xf32>
    %371 = math.exp %370 : vector<2x32xf32>
    %cst_111 = arith.constant 1.000000e+00 : f32
    %372 = vector.broadcast %cst_111 : f32 to vector<2x32xf32>
    %373 = arith.addf %372, %371 : vector<2x32xf32>
    %374 = arith.divf %372, %373 : vector<2x32xf32>
    %375 = vector.extract_strided_slice %362 {offsets = [0, 64], sizes = [2, 32], strides = [1, 1]} : vector<2x128xf32> to vector<2x32xf32>
    %376 = math.tanh %375 : vector<2x32xf32>
    %377 = vector.extract_strided_slice %362 {offsets = [0, 96], sizes = [2, 32], strides = [1, 1]} : vector<2x128xf32> to vector<2x32xf32>
    %378 = arith.negf %377 : vector<2x32xf32>
    %379 = math.exp %378 : vector<2x32xf32>
    %cst_112 = arith.constant 1.000000e+00 : f32
    %380 = vector.broadcast %cst_112 : f32 to vector<2x32xf32>
    %381 = arith.addf %380, %379 : vector<2x32xf32>
    %382 = arith.divf %380, %381 : vector<2x32xf32>
    %383 = arith.mulf %374, %354 : vector<2x32xf32>
    %384 = arith.mulf %368, %376 : vector<2x32xf32>
    %385 = arith.addf %383, %384 : vector<2x32xf32>
    %386 = math.tanh %385 : vector<2x32xf32>
    %387 = arith.mulf %382, %386 : vector<2x32xf32>
    %cst_113 = arith.constant dense<0.000000e+00> : vector<2x128xf32>
    %388 = tpu.matmul %387, %39, %cst_113 {dimension_numbers = #tpu.dot_dimension_numbers<[1], [0], [0], [1], [0, 0, 1, 1], [], []>} : vector<2x32xf32>, vector<32x128xf32>, vector<2x128xf32> -> vector<2x128xf32>
    %389 = vector.broadcast %40 : vector<1x128xf32> to vector<2x128xf32>
    %390 = arith.addf %388, %389 : vector<2x128xf32>
    %391 = vector.extract_strided_slice %45 {offsets = [22, 0], sizes = [2, 128], strides = [1, 1]} : vector<32x128xf32> to vector<2x128xf32>
    %cst_114 = arith.constant dense<0.000000e+00> : vector<2x128xf32>
    %392 = tpu.matmul %387, %38, %cst_114 {dimension_numbers = #tpu.dot_dimension_numbers<[1], [0], [0], [1], [0, 0, 1, 1], [], []>} : vector<2x32xf32>, vector<32x128xf32>, vector<2x128xf32> -> vector<2x128xf32>
    %393 = arith.addf %391, %392 : vector<2x128xf32>
    %394 = vector.extract_strided_slice %393 {offsets = [0, 0], sizes = [2, 32], strides = [1, 1]} : vector<2x128xf32> to vector<2x32xf32>
    %395 = arith.negf %394 : vector<2x32xf32>
    %396 = math.exp %395 : vector<2x32xf32>
    %cst_115 = arith.constant 1.000000e+00 : f32
    %397 = vector.broadcast %cst_115 : f32 to vector<2x32xf32>
    %398 = arith.addf %397, %396 : vector<2x32xf32>
    %399 = arith.divf %397, %398 : vector<2x32xf32>
    %400 = vector.extract_strided_slice %393 {offsets = [0, 32], sizes = [2, 32], strides = [1, 1]} : vector<2x128xf32> to vector<2x32xf32>
    %401 = arith.negf %400 : vector<2x32xf32>
    %402 = math.exp %401 : vector<2x32xf32>
    %cst_116 = arith.constant 1.000000e+00 : f32
    %403 = vector.broadcast %cst_116 : f32 to vector<2x32xf32>
    %404 = arith.addf %403, %402 : vector<2x32xf32>
    %405 = arith.divf %403, %404 : vector<2x32xf32>
    %406 = vector.extract_strided_slice %393 {offsets = [0, 64], sizes = [2, 32], strides = [1, 1]} : vector<2x128xf32> to vector<2x32xf32>
    %407 = math.tanh %406 : vector<2x32xf32>
    %408 = vector.extract_strided_slice %393 {offsets = [0, 96], sizes = [2, 32], strides = [1, 1]} : vector<2x128xf32> to vector<2x32xf32>
    %409 = arith.negf %408 : vector<2x32xf32>
    %410 = math.exp %409 : vector<2x32xf32>
    %cst_117 = arith.constant 1.000000e+00 : f32
    %411 = vector.broadcast %cst_117 : f32 to vector<2x32xf32>
    %412 = arith.addf %411, %410 : vector<2x32xf32>
    %413 = arith.divf %411, %412 : vector<2x32xf32>
    %414 = arith.mulf %405, %385 : vector<2x32xf32>
    %415 = arith.mulf %399, %407 : vector<2x32xf32>
    %416 = arith.addf %414, %415 : vector<2x32xf32>
    %417 = math.tanh %416 : vector<2x32xf32>
    %418 = arith.mulf %413, %417 : vector<2x32xf32>
    %cst_118 = arith.constant dense<0.000000e+00> : vector<2x128xf32>
    %419 = tpu.matmul %418, %39, %cst_118 {dimension_numbers = #tpu.dot_dimension_numbers<[1], [0], [0], [1], [0, 0, 1, 1], [], []>} : vector<2x32xf32>, vector<32x128xf32>, vector<2x128xf32> -> vector<2x128xf32>
    %420 = vector.broadcast %40 : vector<1x128xf32> to vector<2x128xf32>
    %421 = arith.addf %419, %420 : vector<2x128xf32>
    %422 = vector.extract_strided_slice %45 {offsets = [24, 0], sizes = [2, 128], strides = [1, 1]} : vector<32x128xf32> to vector<2x128xf32>
    %cst_119 = arith.constant dense<0.000000e+00> : vector<2x128xf32>
    %423 = tpu.matmul %418, %38, %cst_119 {dimension_numbers = #tpu.dot_dimension_numbers<[1], [0], [0], [1], [0, 0, 1, 1], [], []>} : vector<2x32xf32>, vector<32x128xf32>, vector<2x128xf32> -> vector<2x128xf32>
    %424 = arith.addf %422, %423 : vector<2x128xf32>
    %425 = vector.extract_strided_slice %424 {offsets = [0, 0], sizes = [2, 32], strides = [1, 1]} : vector<2x128xf32> to vector<2x32xf32>
    %426 = arith.negf %425 : vector<2x32xf32>
    %427 = math.exp %426 : vector<2x32xf32>
    %cst_120 = arith.constant 1.000000e+00 : f32
    %428 = vector.broadcast %cst_120 : f32 to vector<2x32xf32>
    %429 = arith.addf %428, %427 : vector<2x32xf32>
    %430 = arith.divf %428, %429 : vector<2x32xf32>
    %431 = vector.extract_strided_slice %424 {offsets = [0, 32], sizes = [2, 32], strides = [1, 1]} : vector<2x128xf32> to vector<2x32xf32>
    %432 = arith.negf %431 : vector<2x32xf32>
    %433 = math.exp %432 : vector<2x32xf32>
    %cst_121 = arith.constant 1.000000e+00 : f32
    %434 = vector.broadcast %cst_121 : f32 to vector<2x32xf32>
    %435 = arith.addf %434, %433 : vector<2x32xf32>
    %436 = arith.divf %434, %435 : vector<2x32xf32>
    %437 = vector.extract_strided_slice %424 {offsets = [0, 64], sizes = [2, 32], strides = [1, 1]} : vector<2x128xf32> to vector<2x32xf32>
    %438 = math.tanh %437 : vector<2x32xf32>
    %439 = vector.extract_strided_slice %424 {offsets = [0, 96], sizes = [2, 32], strides = [1, 1]} : vector<2x128xf32> to vector<2x32xf32>
    %440 = arith.negf %439 : vector<2x32xf32>
    %441 = math.exp %440 : vector<2x32xf32>
    %cst_122 = arith.constant 1.000000e+00 : f32
    %442 = vector.broadcast %cst_122 : f32 to vector<2x32xf32>
    %443 = arith.addf %442, %441 : vector<2x32xf32>
    %444 = arith.divf %442, %443 : vector<2x32xf32>
    %445 = arith.mulf %436, %416 : vector<2x32xf32>
    %446 = arith.mulf %430, %438 : vector<2x32xf32>
    %447 = arith.addf %445, %446 : vector<2x32xf32>
    %448 = math.tanh %447 : vector<2x32xf32>
    %449 = arith.mulf %444, %448 : vector<2x32xf32>
    %cst_123 = arith.constant dense<0.000000e+00> : vector<2x128xf32>
    %450 = tpu.matmul %449, %39, %cst_123 {dimension_numbers = #tpu.dot_dimension_numbers<[1], [0], [0], [1], [0, 0, 1, 1], [], []>} : vector<2x32xf32>, vector<32x128xf32>, vector<2x128xf32> -> vector<2x128xf32>
    %451 = vector.broadcast %40 : vector<1x128xf32> to vector<2x128xf32>
    %452 = arith.addf %450, %451 : vector<2x128xf32>
    %453 = vector.extract_strided_slice %45 {offsets = [26, 0], sizes = [2, 128], strides = [1, 1]} : vector<32x128xf32> to vector<2x128xf32>
    %cst_124 = arith.constant dense<0.000000e+00> : vector<2x128xf32>
    %454 = tpu.matmul %449, %38, %cst_124 {dimension_numbers = #tpu.dot_dimension_numbers<[1], [0], [0], [1], [0, 0, 1, 1], [], []>} : vector<2x32xf32>, vector<32x128xf32>, vector<2x128xf32> -> vector<2x128xf32>
    %455 = arith.addf %453, %454 : vector<2x128xf32>
    %456 = vector.extract_strided_slice %455 {offsets = [0, 0], sizes = [2, 32], strides = [1, 1]} : vector<2x128xf32> to vector<2x32xf32>
    %457 = arith.negf %456 : vector<2x32xf32>
    %458 = math.exp %457 : vector<2x32xf32>
    %cst_125 = arith.constant 1.000000e+00 : f32
    %459 = vector.broadcast %cst_125 : f32 to vector<2x32xf32>
    %460 = arith.addf %459, %458 : vector<2x32xf32>
    %461 = arith.divf %459, %460 : vector<2x32xf32>
    %462 = vector.extract_strided_slice %455 {offsets = [0, 32], sizes = [2, 32], strides = [1, 1]} : vector<2x128xf32> to vector<2x32xf32>
    %463 = arith.negf %462 : vector<2x32xf32>
    %464 = math.exp %463 : vector<2x32xf32>
    %cst_126 = arith.constant 1.000000e+00 : f32
    %465 = vector.broadcast %cst_126 : f32 to vector<2x32xf32>
    %466 = arith.addf %465, %464 : vector<2x32xf32>
    %467 = arith.divf %465, %466 : vector<2x32xf32>
    %468 = vector.extract_strided_slice %455 {offsets = [0, 64], sizes = [2, 32], strides = [1, 1]} : vector<2x128xf32> to vector<2x32xf32>
    %469 = math.tanh %468 : vector<2x32xf32>
    %470 = vector.extract_strided_slice %455 {offsets = [0, 96], sizes = [2, 32], strides = [1, 1]} : vector<2x128xf32> to vector<2x32xf32>
    %471 = arith.negf %470 : vector<2x32xf32>
    %472 = math.exp %471 : vector<2x32xf32>
    %cst_127 = arith.constant 1.000000e+00 : f32
    %473 = vector.broadcast %cst_127 : f32 to vector<2x32xf32>
    %474 = arith.addf %473, %472 : vector<2x32xf32>
    %475 = arith.divf %473, %474 : vector<2x32xf32>
    %476 = arith.mulf %467, %447 : vector<2x32xf32>
    %477 = arith.mulf %461, %469 : vector<2x32xf32>
    %478 = arith.addf %476, %477 : vector<2x32xf32>
    %479 = math.tanh %478 : vector<2x32xf32>
    %480 = arith.mulf %475, %479 : vector<2x32xf32>
    %cst_128 = arith.constant dense<0.000000e+00> : vector<2x128xf32>
    %481 = tpu.matmul %480, %39, %cst_128 {dimension_numbers = #tpu.dot_dimension_numbers<[1], [0], [0], [1], [0, 0, 1, 1], [], []>} : vector<2x32xf32>, vector<32x128xf32>, vector<2x128xf32> -> vector<2x128xf32>
    %482 = vector.broadcast %40 : vector<1x128xf32> to vector<2x128xf32>
    %483 = arith.addf %481, %482 : vector<2x128xf32>
    %484 = vector.extract_strided_slice %45 {offsets = [28, 0], sizes = [2, 128], strides = [1, 1]} : vector<32x128xf32> to vector<2x128xf32>
    %cst_129 = arith.constant dense<0.000000e+00> : vector<2x128xf32>
    %485 = tpu.matmul %480, %38, %cst_129 {dimension_numbers = #tpu.dot_dimension_numbers<[1], [0], [0], [1], [0, 0, 1, 1], [], []>} : vector<2x32xf32>, vector<32x128xf32>, vector<2x128xf32> -> vector<2x128xf32>
    %486 = arith.addf %484, %485 : vector<2x128xf32>
    %487 = vector.extract_strided_slice %486 {offsets = [0, 0], sizes = [2, 32], strides = [1, 1]} : vector<2x128xf32> to vector<2x32xf32>
    %488 = arith.negf %487 : vector<2x32xf32>
    %489 = math.exp %488 : vector<2x32xf32>
    %cst_130 = arith.constant 1.000000e+00 : f32
    %490 = vector.broadcast %cst_130 : f32 to vector<2x32xf32>
    %491 = arith.addf %490, %489 : vector<2x32xf32>
    %492 = arith.divf %490, %491 : vector<2x32xf32>
    %493 = vector.extract_strided_slice %486 {offsets = [0, 32], sizes = [2, 32], strides = [1, 1]} : vector<2x128xf32> to vector<2x32xf32>
    %494 = arith.negf %493 : vector<2x32xf32>
    %495 = math.exp %494 : vector<2x32xf32>
    %cst_131 = arith.constant 1.000000e+00 : f32
    %496 = vector.broadcast %cst_131 : f32 to vector<2x32xf32>
    %497 = arith.addf %496, %495 : vector<2x32xf32>
    %498 = arith.divf %496, %497 : vector<2x32xf32>
    %499 = vector.extract_strided_slice %486 {offsets = [0, 64], sizes = [2, 32], strides = [1, 1]} : vector<2x128xf32> to vector<2x32xf32>
    %500 = math.tanh %499 : vector<2x32xf32>
    %501 = vector.extract_strided_slice %486 {offsets = [0, 96], sizes = [2, 32], strides = [1, 1]} : vector<2x128xf32> to vector<2x32xf32>
    %502 = arith.negf %501 : vector<2x32xf32>
    %503 = math.exp %502 : vector<2x32xf32>
    %cst_132 = arith.constant 1.000000e+00 : f32
    %504 = vector.broadcast %cst_132 : f32 to vector<2x32xf32>
    %505 = arith.addf %504, %503 : vector<2x32xf32>
    %506 = arith.divf %504, %505 : vector<2x32xf32>
    %507 = arith.mulf %498, %478 : vector<2x32xf32>
    %508 = arith.mulf %492, %500 : vector<2x32xf32>
    %509 = arith.addf %507, %508 : vector<2x32xf32>
    %510 = math.tanh %509 : vector<2x32xf32>
    %511 = arith.mulf %506, %510 : vector<2x32xf32>
    %cst_133 = arith.constant dense<0.000000e+00> : vector<2x128xf32>
    %512 = tpu.matmul %511, %39, %cst_133 {dimension_numbers = #tpu.dot_dimension_numbers<[1], [0], [0], [1], [0, 0, 1, 1], [], []>} : vector<2x32xf32>, vector<32x128xf32>, vector<2x128xf32> -> vector<2x128xf32>
    %513 = vector.broadcast %40 : vector<1x128xf32> to vector<2x128xf32>
    %514 = arith.addf %512, %513 : vector<2x128xf32>
    %515 = vector.extract_strided_slice %45 {offsets = [30, 0], sizes = [2, 128], strides = [1, 1]} : vector<32x128xf32> to vector<2x128xf32>
    %cst_134 = arith.constant dense<0.000000e+00> : vector<2x128xf32>
    %516 = tpu.matmul %511, %38, %cst_134 {dimension_numbers = #tpu.dot_dimension_numbers<[1], [0], [0], [1], [0, 0, 1, 1], [], []>} : vector<2x32xf32>, vector<32x128xf32>, vector<2x128xf32> -> vector<2x128xf32>
    %517 = arith.addf %515, %516 : vector<2x128xf32>
    %518 = vector.extract_strided_slice %517 {offsets = [0, 0], sizes = [2, 32], strides = [1, 1]} : vector<2x128xf32> to vector<2x32xf32>
    %519 = arith.negf %518 : vector<2x32xf32>
    %520 = math.exp %519 : vector<2x32xf32>
    %cst_135 = arith.constant 1.000000e+00 : f32
    %521 = vector.broadcast %cst_135 : f32 to vector<2x32xf32>
    %522 = arith.addf %521, %520 : vector<2x32xf32>
    %523 = arith.divf %521, %522 : vector<2x32xf32>
    %524 = vector.extract_strided_slice %517 {offsets = [0, 32], sizes = [2, 32], strides = [1, 1]} : vector<2x128xf32> to vector<2x32xf32>
    %525 = arith.negf %524 : vector<2x32xf32>
    %526 = math.exp %525 : vector<2x32xf32>
    %cst_136 = arith.constant 1.000000e+00 : f32
    %527 = vector.broadcast %cst_136 : f32 to vector<2x32xf32>
    %528 = arith.addf %527, %526 : vector<2x32xf32>
    %529 = arith.divf %527, %528 : vector<2x32xf32>
    %530 = vector.extract_strided_slice %517 {offsets = [0, 64], sizes = [2, 32], strides = [1, 1]} : vector<2x128xf32> to vector<2x32xf32>
    %531 = math.tanh %530 : vector<2x32xf32>
    %532 = vector.extract_strided_slice %517 {offsets = [0, 96], sizes = [2, 32], strides = [1, 1]} : vector<2x128xf32> to vector<2x32xf32>
    %533 = arith.negf %532 : vector<2x32xf32>
    %534 = math.exp %533 : vector<2x32xf32>
    %cst_137 = arith.constant 1.000000e+00 : f32
    %535 = vector.broadcast %cst_137 : f32 to vector<2x32xf32>
    %536 = arith.addf %535, %534 : vector<2x32xf32>
    %537 = arith.divf %535, %536 : vector<2x32xf32>
    %538 = arith.mulf %529, %509 : vector<2x32xf32>
    %539 = arith.mulf %523, %531 : vector<2x32xf32>
    %540 = arith.addf %538, %539 : vector<2x32xf32>
    %541 = math.tanh %540 : vector<2x32xf32>
    %542 = arith.mulf %537, %541 : vector<2x32xf32>
    %cst_138 = arith.constant dense<0.000000e+00> : vector<2x128xf32>
    %543 = tpu.matmul %542, %39, %cst_138 {dimension_numbers = #tpu.dot_dimension_numbers<[1], [0], [0], [1], [0, 0, 1, 1], [], []>} : vector<2x32xf32>, vector<32x128xf32>, vector<2x128xf32> -> vector<2x128xf32>
    %544 = vector.broadcast %40 : vector<1x128xf32> to vector<2x128xf32>
    %545 = arith.addf %543, %544 : vector<2x128xf32>
    %c0_139 = arith.constant 0 : index
    %c64_140 = arith.constant 64 : index
    %546 = vector.load %arg14[%c0_139, %c64_140] : memref<32x128xf32, #tpu.memory_space<vmem>>, vector<2x32xf32>
    tpu.vector_store %arg14[%c0_139, %c64_140], %542 {strides = array<i32>} : memref<32x128xf32, #tpu.memory_space<vmem>>, vector<2x32xf32>,
    %c0_141 = arith.constant 0 : index
    %c96 = arith.constant 96 : index
    %547 = vector.load %arg14[%c0_141, %c96] : memref<32x128xf32, #tpu.memory_space<vmem>>, vector<2x32xf32>
    tpu.vector_store %arg14[%c0_141, %c96], %540 {strides = array<i32>} : memref<32x128xf32, #tpu.memory_space<vmem>>, vector<2x32xf32>,
    %c0_142 = arith.constant 0 : index
    %c0_143 = arith.constant 0 : index
    %548 = vector.load %arg9[%c0_142, %c0_143] : memref<32x128xf32, #tpu.memory_space<vmem>>, vector<32x128xf32>
    %c0_144 = arith.constant 0 : index
    %c0_145 = arith.constant 0 : index
    %549 = vector.load %arg11[%c0_144, %c0_145] : memref<32x32xf32, #tpu.memory_space<vmem>>, vector<32x32xf32>
    %c0_146 = arith.constant 0 : index
    %c0_147 = arith.constant 0 : index
    %550 = vector.load %arg12[%c0_146, %c0_147] : memref<1x32xf32, #tpu.memory_space<vmem>>, vector<1x32xf32>
    %c1_148 = arith.constant 1 : index
    %c0_149 = arith.constant 0 : index
    %c0_150 = arith.constant 0 : index
    %c0_151 = arith.constant 0 : index
    %c0_152 = arith.constant 0 : index
    %551 = vector.load %arg13[%c1_148, %c0_149, %c0_150, %c0_151, %c0_152] : memref<2x2x1x2x32xf32, #tpu.memory_space<vmem>>, vector<1x1x1x2x32xf32>
    %552 = vector.shape_cast %551 : vector<1x1x1x2x32xf32> to vector<2x32xf32>
    %c1_153 = arith.constant 1 : index
    %c1_154 = arith.constant 1 : index
    %c0_155 = arith.constant 0 : index
    %c0_156 = arith.constant 0 : index
    %c0_157 = arith.constant 0 : index
    %553 = vector.load %arg13[%c1_153, %c1_154, %c0_155, %c0_156, %c0_157] : memref<2x2x1x2x32xf32, #tpu.memory_space<vmem>>, vector<1x1x1x2x32xf32>
    %554 = vector.shape_cast %553 : vector<1x1x1x2x32xf32> to vector<2x32xf32>
    %cst_158 = arith.constant dense<0.000000e+00> : vector<2x128xf32>
    %555 = tpu.matmul %552, %548, %cst_158 {dimension_numbers = #tpu.dot_dimension_numbers<[1], [0], [0], [1], [0, 0, 1, 1], [], []>} : vector<2x32xf32>, vector<32x128xf32>, vector<2x128xf32> -> vector<2x128xf32>
    %556 = arith.addf %80, %555 : vector<2x128xf32>
    %557 = vector.extract_strided_slice %556 {offsets = [0, 0], sizes = [2, 32], strides = [1, 1]} : vector<2x128xf32> to vector<2x32xf32>
    %558 = arith.negf %557 : vector<2x32xf32>
    %559 = math.exp %558 : vector<2x32xf32>
    %cst_159 = arith.constant 1.000000e+00 : f32
    %560 = vector.broadcast %cst_159 : f32 to vector<2x32xf32>
    %561 = arith.addf %560, %559 : vector<2x32xf32>
    %562 = arith.divf %560, %561 : vector<2x32xf32>
    %563 = vector.extract_strided_slice %556 {offsets = [0, 32], sizes = [2, 32], strides = [1, 1]} : vector<2x128xf32> to vector<2x32xf32>
    %564 = arith.negf %563 : vector<2x32xf32>
    %565 = math.exp %564 : vector<2x32xf32>
    %cst_160 = arith.constant 1.000000e+00 : f32
    %566 = vector.broadcast %cst_160 : f32 to vector<2x32xf32>
    %567 = arith.addf %566, %565 : vector<2x32xf32>
    %568 = arith.divf %566, %567 : vector<2x32xf32>
    %569 = vector.extract_strided_slice %556 {offsets = [0, 64], sizes = [2, 32], strides = [1, 1]} : vector<2x128xf32> to vector<2x32xf32>
    %570 = math.tanh %569 : vector<2x32xf32>
    %571 = vector.extract_strided_slice %556 {offsets = [0, 96], sizes = [2, 32], strides = [1, 1]} : vector<2x128xf32> to vector<2x32xf32>
    %572 = arith.negf %571 : vector<2x32xf32>
    %573 = math.exp %572 : vector<2x32xf32>
    %cst_161 = arith.constant 1.000000e+00 : f32
    %574 = vector.broadcast %cst_161 : f32 to vector<2x32xf32>
    %575 = arith.addf %574, %573 : vector<2x32xf32>
    %576 = arith.divf %574, %575 : vector<2x32xf32>
    %577 = arith.mulf %568, %554 : vector<2x32xf32>
    %578 = arith.mulf %562, %570 : vector<2x32xf32>
    %579 = arith.addf %577, %578 : vector<2x32xf32>
    %580 = math.tanh %579 : vector<2x32xf32>
    %581 = arith.mulf %576, %580 : vector<2x32xf32>
    %cst_162 = arith.constant dense<0.000000e+00> : vector<2x32xf32>
    %582 = tpu.matmul %581, %549, %cst_162 {dimension_numbers = #tpu.dot_dimension_numbers<[1], [0], [0], [1], [0, 0, 1, 1], [], []>} : vector<2x32xf32>, vector<32x32xf32>, vector<2x32xf32> -> vector<2x32xf32>
    %583 = vector.broadcast %550 : vector<1x32xf32> to vector<2x32xf32>
    %584 = arith.addf %582, %583 : vector<2x32xf32>
    %cst_163 = arith.constant dense<0xFF800000> : vector<2xf32>
    %585 = vector.multi_reduction <maximumf>, %584, %cst_163 [1] : vector<2x32xf32> to vector<2xf32>
    %586 = vector.shape_cast %585 : vector<2xf32> to vector<2x1xf32>
    %587 = vector.broadcast %586 : vector<2x1xf32> to vector<2x32xf32>
    %588 = arith.subf %584, %587 : vector<2x32xf32>
    %589 = math.exp %588 : vector<2x32xf32>
    %cst_164 = arith.constant dense<0.000000e+00> : vector<2xf32>
    %590 = vector.multi_reduction <add>, %589, %cst_164 [1] : vector<2x32xf32> to vector<2xf32>
    %591 = vector.shape_cast %590 : vector<2xf32> to vector<2x1xf32>
    %592 = math.log %591 : vector<2x1xf32>
    %593 = arith.addf %592, %586 : vector<2x1xf32>
    %594 = vector.broadcast %593 : vector<2x1xf32> to vector<2x32xf32>
    %595 = arith.subf %584, %594 : vector<2x32xf32>
    %c0_165 = arith.constant 0 : index
    %c0_166 = arith.constant 0 : index
    %596 = vector.load %arg14[%c0_165, %c0_166] : memref<32x128xf32, #tpu.memory_space<vmem>>, vector<2x32xf32>
    tpu.vector_store %arg14[%c0_165, %c0_166], %595 {strides = array<i32>} : memref<32x128xf32, #tpu.memory_space<vmem>>, vector<2x32xf32>,
    %cst_167 = arith.constant dense<0.000000e+00> : vector<2x128xf32>
    %597 = tpu.matmul %581, %548, %cst_167 {dimension_numbers = #tpu.dot_dimension_numbers<[1], [0], [0], [1], [0, 0, 1, 1], [], []>} : vector<2x32xf32>, vector<32x128xf32>, vector<2x128xf32> -> vector<2x128xf32>
    %598 = arith.addf %111, %597 : vector<2x128xf32>
    %599 = vector.extract_strided_slice %598 {offsets = [0, 0], sizes = [2, 32], strides = [1, 1]} : vector<2x128xf32> to vector<2x32xf32>
    %600 = arith.negf %599 : vector<2x32xf32>
    %601 = math.exp %600 : vector<2x32xf32>
    %cst_168 = arith.constant 1.000000e+00 : f32
    %602 = vector.broadcast %cst_168 : f32 to vector<2x32xf32>
    %603 = arith.addf %602, %601 : vector<2x32xf32>
    %604 = arith.divf %602, %603 : vector<2x32xf32>
    %605 = vector.extract_strided_slice %598 {offsets = [0, 32], sizes = [2, 32], strides = [1, 1]} : vector<2x128xf32> to vector<2x32xf32>
    %606 = arith.negf %605 : vector<2x32xf32>
    %607 = math.exp %606 : vector<2x32xf32>
    %cst_169 = arith.constant 1.000000e+00 : f32
    %608 = vector.broadcast %cst_169 : f32 to vector<2x32xf32>
    %609 = arith.addf %608, %607 : vector<2x32xf32>
    %610 = arith.divf %608, %609 : vector<2x32xf32>
    %611 = vector.extract_strided_slice %598 {offsets = [0, 64], sizes = [2, 32], strides = [1, 1]} : vector<2x128xf32> to vector<2x32xf32>
    %612 = math.tanh %611 : vector<2x32xf32>
    %613 = vector.extract_strided_slice %598 {offsets = [0, 96], sizes = [2, 32], strides = [1, 1]} : vector<2x128xf32> to vector<2x32xf32>
    %614 = arith.negf %613 : vector<2x32xf32>
    %615 = math.exp %614 : vector<2x32xf32>
    %cst_170 = arith.constant 1.000000e+00 : f32
    %616 = vector.broadcast %cst_170 : f32 to vector<2x32xf32>
    %617 = arith.addf %616, %615 : vector<2x32xf32>
    %618 = arith.divf %616, %617 : vector<2x32xf32>
    %619 = arith.mulf %610, %579 : vector<2x32xf32>
    %620 = arith.mulf %604, %612 : vector<2x32xf32>
    %621 = arith.addf %619, %620 : vector<2x32xf32>
    %622 = math.tanh %621 : vector<2x32xf32>
    %623 = arith.mulf %618, %622 : vector<2x32xf32>
    %cst_171 = arith.constant dense<0.000000e+00> : vector<2x32xf32>
    %624 = tpu.matmul %623, %549, %cst_171 {dimension_numbers = #tpu.dot_dimension_numbers<[1], [0], [0], [1], [0, 0, 1, 1], [], []>} : vector<2x32xf32>, vector<32x32xf32>, vector<2x32xf32> -> vector<2x32xf32>
    %625 = vector.broadcast %550 : vector<1x32xf32> to vector<2x32xf32>
    %626 = arith.addf %624, %625 : vector<2x32xf32>
    %cst_172 = arith.constant dense<0xFF800000> : vector<2xf32>
    %627 = vector.multi_reduction <maximumf>, %626, %cst_172 [1] : vector<2x32xf32> to vector<2xf32>
    %628 = vector.shape_cast %627 : vector<2xf32> to vector<2x1xf32>
    %629 = vector.broadcast %628 : vector<2x1xf32> to vector<2x32xf32>
    %630 = arith.subf %626, %629 : vector<2x32xf32>
    %631 = math.exp %630 : vector<2x32xf32>
    %cst_173 = arith.constant dense<0.000000e+00> : vector<2xf32>
    %632 = vector.multi_reduction <add>, %631, %cst_173 [1] : vector<2x32xf32> to vector<2xf32>
    %633 = vector.shape_cast %632 : vector<2xf32> to vector<2x1xf32>
    %634 = math.log %633 : vector<2x1xf32>
    %635 = arith.addf %634, %628 : vector<2x1xf32>
    %636 = vector.broadcast %635 : vector<2x1xf32> to vector<2x32xf32>
    %637 = arith.subf %626, %636 : vector<2x32xf32>
    %c2_174 = arith.constant 2 : index
    %c0_175 = arith.constant 0 : index
    %638 = vector.load %arg14[%c2_174, %c0_175] : memref<32x128xf32, #tpu.memory_space<vmem>>, vector<2x32xf32>
    tpu.vector_store %arg14[%c2_174, %c0_175], %637 {strides = array<i32>} : memref<32x128xf32, #tpu.memory_space<vmem>>, vector<2x32xf32>,
    %cst_176 = arith.constant dense<0.000000e+00> : vector<2x128xf32>
    %639 = tpu.matmul %623, %548, %cst_176 {dimension_numbers = #tpu.dot_dimension_numbers<[1], [0], [0], [1], [0, 0, 1, 1], [], []>} : vector<2x32xf32>, vector<32x128xf32>, vector<2x128xf32> -> vector<2x128xf32>
    %640 = arith.addf %142, %639 : vector<2x128xf32>
    %641 = vector.extract_strided_slice %640 {offsets = [0, 0], sizes = [2, 32], strides = [1, 1]} : vector<2x128xf32> to vector<2x32xf32>
    %642 = arith.negf %641 : vector<2x32xf32>
    %643 = math.exp %642 : vector<2x32xf32>
    %cst_177 = arith.constant 1.000000e+00 : f32
    %644 = vector.broadcast %cst_177 : f32 to vector<2x32xf32>
    %645 = arith.addf %644, %643 : vector<2x32xf32>
    %646 = arith.divf %644, %645 : vector<2x32xf32>
    %647 = vector.extract_strided_slice %640 {offsets = [0, 32], sizes = [2, 32], strides = [1, 1]} : vector<2x128xf32> to vector<2x32xf32>
    %648 = arith.negf %647 : vector<2x32xf32>
    %649 = math.exp %648 : vector<2x32xf32>
    %cst_178 = arith.constant 1.000000e+00 : f32
    %650 = vector.broadcast %cst_178 : f32 to vector<2x32xf32>
    %651 = arith.addf %650, %649 : vector<2x32xf32>
    %652 = arith.divf %650, %651 : vector<2x32xf32>
    %653 = vector.extract_strided_slice %640 {offsets = [0, 64], sizes = [2, 32], strides = [1, 1]} : vector<2x128xf32> to vector<2x32xf32>
    %654 = math.tanh %653 : vector<2x32xf32>
    %655 = vector.extract_strided_slice %640 {offsets = [0, 96], sizes = [2, 32], strides = [1, 1]} : vector<2x128xf32> to vector<2x32xf32>
    %656 = arith.negf %655 : vector<2x32xf32>
    %657 = math.exp %656 : vector<2x32xf32>
    %cst_179 = arith.constant 1.000000e+00 : f32
    %658 = vector.broadcast %cst_179 : f32 to vector<2x32xf32>
    %659 = arith.addf %658, %657 : vector<2x32xf32>
    %660 = arith.divf %658, %659 : vector<2x32xf32>
    %661 = arith.mulf %652, %621 : vector<2x32xf32>
    %662 = arith.mulf %646, %654 : vector<2x32xf32>
    %663 = arith.addf %661, %662 : vector<2x32xf32>
    %664 = math.tanh %663 : vector<2x32xf32>
    %665 = arith.mulf %660, %664 : vector<2x32xf32>
    %cst_180 = arith.constant dense<0.000000e+00> : vector<2x32xf32>
    %666 = tpu.matmul %665, %549, %cst_180 {dimension_numbers = #tpu.dot_dimension_numbers<[1], [0], [0], [1], [0, 0, 1, 1], [], []>} : vector<2x32xf32>, vector<32x32xf32>, vector<2x32xf32> -> vector<2x32xf32>
    %667 = vector.broadcast %550 : vector<1x32xf32> to vector<2x32xf32>
    %668 = arith.addf %666, %667 : vector<2x32xf32>
    %cst_181 = arith.constant dense<0xFF800000> : vector<2xf32>
    %669 = vector.multi_reduction <maximumf>, %668, %cst_181 [1] : vector<2x32xf32> to vector<2xf32>
    %670 = vector.shape_cast %669 : vector<2xf32> to vector<2x1xf32>
    %671 = vector.broadcast %670 : vector<2x1xf32> to vector<2x32xf32>
    %672 = arith.subf %668, %671 : vector<2x32xf32>
    %673 = math.exp %672 : vector<2x32xf32>
    %cst_182 = arith.constant dense<0.000000e+00> : vector<2xf32>
    %674 = vector.multi_reduction <add>, %673, %cst_182 [1] : vector<2x32xf32> to vector<2xf32>
    %675 = vector.shape_cast %674 : vector<2xf32> to vector<2x1xf32>
    %676 = math.log %675 : vector<2x1xf32>
    %677 = arith.addf %676, %670 : vector<2x1xf32>
    %678 = vector.broadcast %677 : vector<2x1xf32> to vector<2x32xf32>
    %679 = arith.subf %668, %678 : vector<2x32xf32>
    %c4 = arith.constant 4 : index
    %c0_183 = arith.constant 0 : index
    %680 = vector.load %arg14[%c4, %c0_183] : memref<32x128xf32, #tpu.memory_space<vmem>>, vector<2x32xf32>
    tpu.vector_store %arg14[%c4, %c0_183], %679 {strides = array<i32>} : memref<32x128xf32, #tpu.memory_space<vmem>>, vector<2x32xf32>,
    %cst_184 = arith.constant dense<0.000000e+00> : vector<2x128xf32>
    %681 = tpu.matmul %665, %548, %cst_184 {dimension_numbers = #tpu.dot_dimension_numbers<[1], [0], [0], [1], [0, 0, 1, 1], [], []>} : vector<2x32xf32>, vector<32x128xf32>, vector<2x128xf32> -> vector<2x128xf32>
    %682 = arith.addf %173, %681 : vector<2x128xf32>
    %683 = vector.extract_strided_slice %682 {offsets = [0, 0], sizes = [2, 32], strides = [1, 1]} : vector<2x128xf32> to vector<2x32xf32>
    %684 = arith.negf %683 : vector<2x32xf32>
    %685 = math.exp %684 : vector<2x32xf32>
    %cst_185 = arith.constant 1.000000e+00 : f32
    %686 = vector.broadcast %cst_185 : f32 to vector<2x32xf32>
    %687 = arith.addf %686, %685 : vector<2x32xf32>
    %688 = arith.divf %686, %687 : vector<2x32xf32>
    %689 = vector.extract_strided_slice %682 {offsets = [0, 32], sizes = [2, 32], strides = [1, 1]} : vector<2x128xf32> to vector<2x32xf32>
    %690 = arith.negf %689 : vector<2x32xf32>
    %691 = math.exp %690 : vector<2x32xf32>
    %cst_186 = arith.constant 1.000000e+00 : f32
    %692 = vector.broadcast %cst_186 : f32 to vector<2x32xf32>
    %693 = arith.addf %692, %691 : vector<2x32xf32>
    %694 = arith.divf %692, %693 : vector<2x32xf32>
    %695 = vector.extract_strided_slice %682 {offsets = [0, 64], sizes = [2, 32], strides = [1, 1]} : vector<2x128xf32> to vector<2x32xf32>
    %696 = math.tanh %695 : vector<2x32xf32>
    %697 = vector.extract_strided_slice %682 {offsets = [0, 96], sizes = [2, 32], strides = [1, 1]} : vector<2x128xf32> to vector<2x32xf32>
    %698 = arith.negf %697 : vector<2x32xf32>
    %699 = math.exp %698 : vector<2x32xf32>
    %cst_187 = arith.constant 1.000000e+00 : f32
    %700 = vector.broadcast %cst_187 : f32 to vector<2x32xf32>
    %701 = arith.addf %700, %699 : vector<2x32xf32>
    %702 = arith.divf %700, %701 : vector<2x32xf32>
    %703 = arith.mulf %694, %663 : vector<2x32xf32>
    %704 = arith.mulf %688, %696 : vector<2x32xf32>
    %705 = arith.addf %703, %704 : vector<2x32xf32>
    %706 = math.tanh %705 : vector<2x32xf32>
    %707 = arith.mulf %702, %706 : vector<2x32xf32>
    %cst_188 = arith.constant dense<0.000000e+00> : vector<2x32xf32>
    %708 = tpu.matmul %707, %549, %cst_188 {dimension_numbers = #tpu.dot_dimension_numbers<[1], [0], [0], [1], [0, 0, 1, 1], [], []>} : vector<2x32xf32>, vector<32x32xf32>, vector<2x32xf32> -> vector<2x32xf32>
    %709 = vector.broadcast %550 : vector<1x32xf32> to vector<2x32xf32>
    %710 = arith.addf %708, %709 : vector<2x32xf32>
    %cst_189 = arith.constant dense<0xFF800000> : vector<2xf32>
    %711 = vector.multi_reduction <maximumf>, %710, %cst_189 [1] : vector<2x32xf32> to vector<2xf32>
    %712 = vector.shape_cast %711 : vector<2xf32> to vector<2x1xf32>
    %713 = vector.broadcast %712 : vector<2x1xf32> to vector<2x32xf32>
    %714 = arith.subf %710, %713 : vector<2x32xf32>
    %715 = math.exp %714 : vector<2x32xf32>
    %cst_190 = arith.constant dense<0.000000e+00> : vector<2xf32>
    %716 = vector.multi_reduction <add>, %715, %cst_190 [1] : vector<2x32xf32> to vector<2xf32>
    %717 = vector.shape_cast %716 : vector<2xf32> to vector<2x1xf32>
    %718 = math.log %717 : vector<2x1xf32>
    %719 = arith.addf %718, %712 : vector<2x1xf32>
    %720 = vector.broadcast %719 : vector<2x1xf32> to vector<2x32xf32>
    %721 = arith.subf %710, %720 : vector<2x32xf32>
    %c6 = arith.constant 6 : index
    %c0_191 = arith.constant 0 : index
    %722 = vector.load %arg14[%c6, %c0_191] : memref<32x128xf32, #tpu.memory_space<vmem>>, vector<2x32xf32>
    tpu.vector_store %arg14[%c6, %c0_191], %721 {strides = array<i32>} : memref<32x128xf32, #tpu.memory_space<vmem>>, vector<2x32xf32>,
    %cst_192 = arith.constant dense<0.000000e+00> : vector<2x128xf32>
    %723 = tpu.matmul %707, %548, %cst_192 {dimension_numbers = #tpu.dot_dimension_numbers<[1], [0], [0], [1], [0, 0, 1, 1], [], []>} : vector<2x32xf32>, vector<32x128xf32>, vector<2x128xf32> -> vector<2x128xf32>
    %724 = arith.addf %204, %723 : vector<2x128xf32>
    %725 = vector.extract_strided_slice %724 {offsets = [0, 0], sizes = [2, 32], strides = [1, 1]} : vector<2x128xf32> to vector<2x32xf32>
    %726 = arith.negf %725 : vector<2x32xf32>
    %727 = math.exp %726 : vector<2x32xf32>
    %cst_193 = arith.constant 1.000000e+00 : f32
    %728 = vector.broadcast %cst_193 : f32 to vector<2x32xf32>
    %729 = arith.addf %728, %727 : vector<2x32xf32>
    %730 = arith.divf %728, %729 : vector<2x32xf32>
    %731 = vector.extract_strided_slice %724 {offsets = [0, 32], sizes = [2, 32], strides = [1, 1]} : vector<2x128xf32> to vector<2x32xf32>
    %732 = arith.negf %731 : vector<2x32xf32>
    %733 = math.exp %732 : vector<2x32xf32>
    %cst_194 = arith.constant 1.000000e+00 : f32
    %734 = vector.broadcast %cst_194 : f32 to vector<2x32xf32>
    %735 = arith.addf %734, %733 : vector<2x32xf32>
    %736 = arith.divf %734, %735 : vector<2x32xf32>
    %737 = vector.extract_strided_slice %724 {offsets = [0, 64], sizes = [2, 32], strides = [1, 1]} : vector<2x128xf32> to vector<2x32xf32>
    %738 = math.tanh %737 : vector<2x32xf32>
    %739 = vector.extract_strided_slice %724 {offsets = [0, 96], sizes = [2, 32], strides = [1, 1]} : vector<2x128xf32> to vector<2x32xf32>
    %740 = arith.negf %739 : vector<2x32xf32>
    %741 = math.exp %740 : vector<2x32xf32>
    %cst_195 = arith.constant 1.000000e+00 : f32
    %742 = vector.broadcast %cst_195 : f32 to vector<2x32xf32>
    %743 = arith.addf %742, %741 : vector<2x32xf32>
    %744 = arith.divf %742, %743 : vector<2x32xf32>
    %745 = arith.mulf %736, %705 : vector<2x32xf32>
    %746 = arith.mulf %730, %738 : vector<2x32xf32>
    %747 = arith.addf %745, %746 : vector<2x32xf32>
    %748 = math.tanh %747 : vector<2x32xf32>
    %749 = arith.mulf %744, %748 : vector<2x32xf32>
    %cst_196 = arith.constant dense<0.000000e+00> : vector<2x32xf32>
    %750 = tpu.matmul %749, %549, %cst_196 {dimension_numbers = #tpu.dot_dimension_numbers<[1], [0], [0], [1], [0, 0, 1, 1], [], []>} : vector<2x32xf32>, vector<32x32xf32>, vector<2x32xf32> -> vector<2x32xf32>
    %751 = vector.broadcast %550 : vector<1x32xf32> to vector<2x32xf32>
    %752 = arith.addf %750, %751 : vector<2x32xf32>
    %cst_197 = arith.constant dense<0xFF800000> : vector<2xf32>
    %753 = vector.multi_reduction <maximumf>, %752, %cst_197 [1] : vector<2x32xf32> to vector<2xf32>
    %754 = vector.shape_cast %753 : vector<2xf32> to vector<2x1xf32>
    %755 = vector.broadcast %754 : vector<2x1xf32> to vector<2x32xf32>
    %756 = arith.subf %752, %755 : vector<2x32xf32>
    %757 = math.exp %756 : vector<2x32xf32>
    %cst_198 = arith.constant dense<0.000000e+00> : vector<2xf32>
    %758 = vector.multi_reduction <add>, %757, %cst_198 [1] : vector<2x32xf32> to vector<2xf32>
    %759 = vector.shape_cast %758 : vector<2xf32> to vector<2x1xf32>
    %760 = math.log %759 : vector<2x1xf32>
    %761 = arith.addf %760, %754 : vector<2x1xf32>
    %762 = vector.broadcast %761 : vector<2x1xf32> to vector<2x32xf32>
    %763 = arith.subf %752, %762 : vector<2x32xf32>
    %c8 = arith.constant 8 : index
    %c0_199 = arith.constant 0 : index
    %764 = vector.load %arg14[%c8, %c0_199] : memref<32x128xf32, #tpu.memory_space<vmem>>, vector<2x32xf32>
    tpu.vector_store %arg14[%c8, %c0_199], %763 {strides = array<i32>} : memref<32x128xf32, #tpu.memory_space<vmem>>, vector<2x32xf32>,
    %cst_200 = arith.constant dense<0.000000e+00> : vector<2x128xf32>
    %765 = tpu.matmul %749, %548, %cst_200 {dimension_numbers = #tpu.dot_dimension_numbers<[1], [0], [0], [1], [0, 0, 1, 1], [], []>} : vector<2x32xf32>, vector<32x128xf32>, vector<2x128xf32> -> vector<2x128xf32>
    %766 = arith.addf %235, %765 : vector<2x128xf32>
    %767 = vector.extract_strided_slice %766 {offsets = [0, 0], sizes = [2, 32], strides = [1, 1]} : vector<2x128xf32> to vector<2x32xf32>
    %768 = arith.negf %767 : vector<2x32xf32>
    %769 = math.exp %768 : vector<2x32xf32>
    %cst_201 = arith.constant 1.000000e+00 : f32
    %770 = vector.broadcast %cst_201 : f32 to vector<2x32xf32>
    %771 = arith.addf %770, %769 : vector<2x32xf32>
    %772 = arith.divf %770, %771 : vector<2x32xf32>
    %773 = vector.extract_strided_slice %766 {offsets = [0, 32], sizes = [2, 32], strides = [1, 1]} : vector<2x128xf32> to vector<2x32xf32>
    %774 = arith.negf %773 : vector<2x32xf32>
    %775 = math.exp %774 : vector<2x32xf32>
    %cst_202 = arith.constant 1.000000e+00 : f32
    %776 = vector.broadcast %cst_202 : f32 to vector<2x32xf32>
    %777 = arith.addf %776, %775 : vector<2x32xf32>
    %778 = arith.divf %776, %777 : vector<2x32xf32>
    %779 = vector.extract_strided_slice %766 {offsets = [0, 64], sizes = [2, 32], strides = [1, 1]} : vector<2x128xf32> to vector<2x32xf32>
    %780 = math.tanh %779 : vector<2x32xf32>
    %781 = vector.extract_strided_slice %766 {offsets = [0, 96], sizes = [2, 32], strides = [1, 1]} : vector<2x128xf32> to vector<2x32xf32>
    %782 = arith.negf %781 : vector<2x32xf32>
    %783 = math.exp %782 : vector<2x32xf32>
    %cst_203 = arith.constant 1.000000e+00 : f32
    %784 = vector.broadcast %cst_203 : f32 to vector<2x32xf32>
    %785 = arith.addf %784, %783 : vector<2x32xf32>
    %786 = arith.divf %784, %785 : vector<2x32xf32>
    %787 = arith.mulf %778, %747 : vector<2x32xf32>
    %788 = arith.mulf %772, %780 : vector<2x32xf32>
    %789 = arith.addf %787, %788 : vector<2x32xf32>
    %790 = math.tanh %789 : vector<2x32xf32>
    %791 = arith.mulf %786, %790 : vector<2x32xf32>
    %cst_204 = arith.constant dense<0.000000e+00> : vector<2x32xf32>
    %792 = tpu.matmul %791, %549, %cst_204 {dimension_numbers = #tpu.dot_dimension_numbers<[1], [0], [0], [1], [0, 0, 1, 1], [], []>} : vector<2x32xf32>, vector<32x32xf32>, vector<2x32xf32> -> vector<2x32xf32>
    %793 = vector.broadcast %550 : vector<1x32xf32> to vector<2x32xf32>
    %794 = arith.addf %792, %793 : vector<2x32xf32>
    %cst_205 = arith.constant dense<0xFF800000> : vector<2xf32>
    %795 = vector.multi_reduction <maximumf>, %794, %cst_205 [1] : vector<2x32xf32> to vector<2xf32>
    %796 = vector.shape_cast %795 : vector<2xf32> to vector<2x1xf32>
    %797 = vector.broadcast %796 : vector<2x1xf32> to vector<2x32xf32>
    %798 = arith.subf %794, %797 : vector<2x32xf32>
    %799 = math.exp %798 : vector<2x32xf32>
    %cst_206 = arith.constant dense<0.000000e+00> : vector<2xf32>
    %800 = vector.multi_reduction <add>, %799, %cst_206 [1] : vector<2x32xf32> to vector<2xf32>
    %801 = vector.shape_cast %800 : vector<2xf32> to vector<2x1xf32>
    %802 = math.log %801 : vector<2x1xf32>
    %803 = arith.addf %802, %796 : vector<2x1xf32>
    %804 = vector.broadcast %803 : vector<2x1xf32> to vector<2x32xf32>
    %805 = arith.subf %794, %804 : vector<2x32xf32>
    %c10 = arith.constant 10 : index
    %c0_207 = arith.constant 0 : index
    %806 = vector.load %arg14[%c10, %c0_207] : memref<32x128xf32, #tpu.memory_space<vmem>>, vector<2x32xf32>
    tpu.vector_store %arg14[%c10, %c0_207], %805 {strides = array<i32>} : memref<32x128xf32, #tpu.memory_space<vmem>>, vector<2x32xf32>,
    %cst_208 = arith.constant dense<0.000000e+00> : vector<2x128xf32>
    %807 = tpu.matmul %791, %548, %cst_208 {dimension_numbers = #tpu.dot_dimension_numbers<[1], [0], [0], [1], [0, 0, 1, 1], [], []>} : vector<2x32xf32>, vector<32x128xf32>, vector<2x128xf32> -> vector<2x128xf32>
    %808 = arith.addf %266, %807 : vector<2x128xf32>
    %809 = vector.extract_strided_slice %808 {offsets = [0, 0], sizes = [2, 32], strides = [1, 1]} : vector<2x128xf32> to vector<2x32xf32>
    %810 = arith.negf %809 : vector<2x32xf32>
    %811 = math.exp %810 : vector<2x32xf32>
    %cst_209 = arith.constant 1.000000e+00 : f32
    %812 = vector.broadcast %cst_209 : f32 to vector<2x32xf32>
    %813 = arith.addf %812, %811 : vector<2x32xf32>
    %814 = arith.divf %812, %813 : vector<2x32xf32>
    %815 = vector.extract_strided_slice %808 {offsets = [0, 32], sizes = [2, 32], strides = [1, 1]} : vector<2x128xf32> to vector<2x32xf32>
    %816 = arith.negf %815 : vector<2x32xf32>
    %817 = math.exp %816 : vector<2x32xf32>
    %cst_210 = arith.constant 1.000000e+00 : f32
    %818 = vector.broadcast %cst_210 : f32 to vector<2x32xf32>
    %819 = arith.addf %818, %817 : vector<2x32xf32>
    %820 = arith.divf %818, %819 : vector<2x32xf32>
    %821 = vector.extract_strided_slice %808 {offsets = [0, 64], sizes = [2, 32], strides = [1, 1]} : vector<2x128xf32> to vector<2x32xf32>
    %822 = math.tanh %821 : vector<2x32xf32>
    %823 = vector.extract_strided_slice %808 {offsets = [0, 96], sizes = [2, 32], strides = [1, 1]} : vector<2x128xf32> to vector<2x32xf32>
    %824 = arith.negf %823 : vector<2x32xf32>
    %825 = math.exp %824 : vector<2x32xf32>
    %cst_211 = arith.constant 1.000000e+00 : f32
    %826 = vector.broadcast %cst_211 : f32 to vector<2x32xf32>
    %827 = arith.addf %826, %825 : vector<2x32xf32>
    %828 = arith.divf %826, %827 : vector<2x32xf32>
    %829 = arith.mulf %820, %789 : vector<2x32xf32>
    %830 = arith.mulf %814, %822 : vector<2x32xf32>
    %831 = arith.addf %829, %830 : vector<2x32xf32>
    %832 = math.tanh %831 : vector<2x32xf32>
    %833 = arith.mulf %828, %832 : vector<2x32xf32>
    %cst_212 = arith.constant dense<0.000000e+00> : vector<2x32xf32>
    %834 = tpu.matmul %833, %549, %cst_212 {dimension_numbers = #tpu.dot_dimension_numbers<[1], [0], [0], [1], [0, 0, 1, 1], [], []>} : vector<2x32xf32>, vector<32x32xf32>, vector<2x32xf32> -> vector<2x32xf32>
    %835 = vector.broadcast %550 : vector<1x32xf32> to vector<2x32xf32>
    %836 = arith.addf %834, %835 : vector<2x32xf32>
    %cst_213 = arith.constant dense<0xFF800000> : vector<2xf32>
    %837 = vector.multi_reduction <maximumf>, %836, %cst_213 [1] : vector<2x32xf32> to vector<2xf32>
    %838 = vector.shape_cast %837 : vector<2xf32> to vector<2x1xf32>
    %839 = vector.broadcast %838 : vector<2x1xf32> to vector<2x32xf32>
    %840 = arith.subf %836, %839 : vector<2x32xf32>
    %841 = math.exp %840 : vector<2x32xf32>
    %cst_214 = arith.constant dense<0.000000e+00> : vector<2xf32>
    %842 = vector.multi_reduction <add>, %841, %cst_214 [1] : vector<2x32xf32> to vector<2xf32>
    %843 = vector.shape_cast %842 : vector<2xf32> to vector<2x1xf32>
    %844 = math.log %843 : vector<2x1xf32>
    %845 = arith.addf %844, %838 : vector<2x1xf32>
    %846 = vector.broadcast %845 : vector<2x1xf32> to vector<2x32xf32>
    %847 = arith.subf %836, %846 : vector<2x32xf32>
    %c12 = arith.constant 12 : index
    %c0_215 = arith.constant 0 : index
    %848 = vector.load %arg14[%c12, %c0_215] : memref<32x128xf32, #tpu.memory_space<vmem>>, vector<2x32xf32>
    tpu.vector_store %arg14[%c12, %c0_215], %847 {strides = array<i32>} : memref<32x128xf32, #tpu.memory_space<vmem>>, vector<2x32xf32>,
    %cst_216 = arith.constant dense<0.000000e+00> : vector<2x128xf32>
    %849 = tpu.matmul %833, %548, %cst_216 {dimension_numbers = #tpu.dot_dimension_numbers<[1], [0], [0], [1], [0, 0, 1, 1], [], []>} : vector<2x32xf32>, vector<32x128xf32>, vector<2x128xf32> -> vector<2x128xf32>
    %850 = arith.addf %297, %849 : vector<2x128xf32>
    %851 = vector.extract_strided_slice %850 {offsets = [0, 0], sizes = [2, 32], strides = [1, 1]} : vector<2x128xf32> to vector<2x32xf32>
    %852 = arith.negf %851 : vector<2x32xf32>
    %853 = math.exp %852 : vector<2x32xf32>
    %cst_217 = arith.constant 1.000000e+00 : f32
    %854 = vector.broadcast %cst_217 : f32 to vector<2x32xf32>
    %855 = arith.addf %854, %853 : vector<2x32xf32>
    %856 = arith.divf %854, %855 : vector<2x32xf32>
    %857 = vector.extract_strided_slice %850 {offsets = [0, 32], sizes = [2, 32], strides = [1, 1]} : vector<2x128xf32> to vector<2x32xf32>
    %858 = arith.negf %857 : vector<2x32xf32>
    %859 = math.exp %858 : vector<2x32xf32>
    %cst_218 = arith.constant 1.000000e+00 : f32
    %860 = vector.broadcast %cst_218 : f32 to vector<2x32xf32>
    %861 = arith.addf %860, %859 : vector<2x32xf32>
    %862 = arith.divf %860, %861 : vector<2x32xf32>
    %863 = vector.extract_strided_slice %850 {offsets = [0, 64], sizes = [2, 32], strides = [1, 1]} : vector<2x128xf32> to vector<2x32xf32>
    %864 = math.tanh %863 : vector<2x32xf32>
    %865 = vector.extract_strided_slice %850 {offsets = [0, 96], sizes = [2, 32], strides = [1, 1]} : vector<2x128xf32> to vector<2x32xf32>
    %866 = arith.negf %865 : vector<2x32xf32>
    %867 = math.exp %866 : vector<2x32xf32>
    %cst_219 = arith.constant 1.000000e+00 : f32
    %868 = vector.broadcast %cst_219 : f32 to vector<2x32xf32>
    %869 = arith.addf %868, %867 : vector<2x32xf32>
    %870 = arith.divf %868, %869 : vector<2x32xf32>
    %871 = arith.mulf %862, %831 : vector<2x32xf32>
    %872 = arith.mulf %856, %864 : vector<2x32xf32>
    %873 = arith.addf %871, %872 : vector<2x32xf32>
    %874 = math.tanh %873 : vector<2x32xf32>
    %875 = arith.mulf %870, %874 : vector<2x32xf32>
    %cst_220 = arith.constant dense<0.000000e+00> : vector<2x32xf32>
    %876 = tpu.matmul %875, %549, %cst_220 {dimension_numbers = #tpu.dot_dimension_numbers<[1], [0], [0], [1], [0, 0, 1, 1], [], []>} : vector<2x32xf32>, vector<32x32xf32>, vector<2x32xf32> -> vector<2x32xf32>
    %877 = vector.broadcast %550 : vector<1x32xf32> to vector<2x32xf32>
    %878 = arith.addf %876, %877 : vector<2x32xf32>
    %cst_221 = arith.constant dense<0xFF800000> : vector<2xf32>
    %879 = vector.multi_reduction <maximumf>, %878, %cst_221 [1] : vector<2x32xf32> to vector<2xf32>
    %880 = vector.shape_cast %879 : vector<2xf32> to vector<2x1xf32>
    %881 = vector.broadcast %880 : vector<2x1xf32> to vector<2x32xf32>
    %882 = arith.subf %878, %881 : vector<2x32xf32>
    %883 = math.exp %882 : vector<2x32xf32>
    %cst_222 = arith.constant dense<0.000000e+00> : vector<2xf32>
    %884 = vector.multi_reduction <add>, %883, %cst_222 [1] : vector<2x32xf32> to vector<2xf32>
    %885 = vector.shape_cast %884 : vector<2xf32> to vector<2x1xf32>
    %886 = math.log %885 : vector<2x1xf32>
    %887 = arith.addf %886, %880 : vector<2x1xf32>
    %888 = vector.broadcast %887 : vector<2x1xf32> to vector<2x32xf32>
    %889 = arith.subf %878, %888 : vector<2x32xf32>
    %c14 = arith.constant 14 : index
    %c0_223 = arith.constant 0 : index
    %890 = vector.load %arg14[%c14, %c0_223] : memref<32x128xf32, #tpu.memory_space<vmem>>, vector<2x32xf32>
    tpu.vector_store %arg14[%c14, %c0_223], %889 {strides = array<i32>} : memref<32x128xf32, #tpu.memory_space<vmem>>, vector<2x32xf32>,
    %cst_224 = arith.constant dense<0.000000e+00> : vector<2x128xf32>
    %891 = tpu.matmul %875, %548, %cst_224 {dimension_numbers = #tpu.dot_dimension_numbers<[1], [0], [0], [1], [0, 0, 1, 1], [], []>} : vector<2x32xf32>, vector<32x128xf32>, vector<2x128xf32> -> vector<2x128xf32>
    %892 = arith.addf %328, %891 : vector<2x128xf32>
    %893 = vector.extract_strided_slice %892 {offsets = [0, 0], sizes = [2, 32], strides = [1, 1]} : vector<2x128xf32> to vector<2x32xf32>
    %894 = arith.negf %893 : vector<2x32xf32>
    %895 = math.exp %894 : vector<2x32xf32>
    %cst_225 = arith.constant 1.000000e+00 : f32
    %896 = vector.broadcast %cst_225 : f32 to vector<2x32xf32>
    %897 = arith.addf %896, %895 : vector<2x32xf32>
    %898 = arith.divf %896, %897 : vector<2x32xf32>
    %899 = vector.extract_strided_slice %892 {offsets = [0, 32], sizes = [2, 32], strides = [1, 1]} : vector<2x128xf32> to vector<2x32xf32>
    %900 = arith.negf %899 : vector<2x32xf32>
    %901 = math.exp %900 : vector<2x32xf32>
    %cst_226 = arith.constant 1.000000e+00 : f32
    %902 = vector.broadcast %cst_226 : f32 to vector<2x32xf32>
    %903 = arith.addf %902, %901 : vector<2x32xf32>
    %904 = arith.divf %902, %903 : vector<2x32xf32>
    %905 = vector.extract_strided_slice %892 {offsets = [0, 64], sizes = [2, 32], strides = [1, 1]} : vector<2x128xf32> to vector<2x32xf32>
    %906 = math.tanh %905 : vector<2x32xf32>
    %907 = vector.extract_strided_slice %892 {offsets = [0, 96], sizes = [2, 32], strides = [1, 1]} : vector<2x128xf32> to vector<2x32xf32>
    %908 = arith.negf %907 : vector<2x32xf32>
    %909 = math.exp %908 : vector<2x32xf32>
    %cst_227 = arith.constant 1.000000e+00 : f32
    %910 = vector.broadcast %cst_227 : f32 to vector<2x32xf32>
    %911 = arith.addf %910, %909 : vector<2x32xf32>
    %912 = arith.divf %910, %911 : vector<2x32xf32>
    %913 = arith.mulf %904, %873 : vector<2x32xf32>
    %914 = arith.mulf %898, %906 : vector<2x32xf32>
    %915 = arith.addf %913, %914 : vector<2x32xf32>
    %916 = math.tanh %915 : vector<2x32xf32>
    %917 = arith.mulf %912, %916 : vector<2x32xf32>
    %cst_228 = arith.constant dense<0.000000e+00> : vector<2x32xf32>
    %918 = tpu.matmul %917, %549, %cst_228 {dimension_numbers = #tpu.dot_dimension_numbers<[1], [0], [0], [1], [0, 0, 1, 1], [], []>} : vector<2x32xf32>, vector<32x32xf32>, vector<2x32xf32> -> vector<2x32xf32>
    %919 = vector.broadcast %550 : vector<1x32xf32> to vector<2x32xf32>
    %920 = arith.addf %918, %919 : vector<2x32xf32>
    %cst_229 = arith.constant dense<0xFF800000> : vector<2xf32>
    %921 = vector.multi_reduction <maximumf>, %920, %cst_229 [1] : vector<2x32xf32> to vector<2xf32>
    %922 = vector.shape_cast %921 : vector<2xf32> to vector<2x1xf32>
    %923 = vector.broadcast %922 : vector<2x1xf32> to vector<2x32xf32>
    %924 = arith.subf %920, %923 : vector<2x32xf32>
    %925 = math.exp %924 : vector<2x32xf32>
    %cst_230 = arith.constant dense<0.000000e+00> : vector<2xf32>
    %926 = vector.multi_reduction <add>, %925, %cst_230 [1] : vector<2x32xf32> to vector<2xf32>
    %927 = vector.shape_cast %926 : vector<2xf32> to vector<2x1xf32>
    %928 = math.log %927 : vector<2x1xf32>
    %929 = arith.addf %928, %922 : vector<2x1xf32>
    %930 = vector.broadcast %929 : vector<2x1xf32> to vector<2x32xf32>
    %931 = arith.subf %920, %930 : vector<2x32xf32>
    %c16_231 = arith.constant 16 : index
    %c0_232 = arith.constant 0 : index
    %932 = vector.load %arg14[%c16_231, %c0_232] : memref<32x128xf32, #tpu.memory_space<vmem>>, vector<2x32xf32>
    tpu.vector_store %arg14[%c16_231, %c0_232], %931 {strides = array<i32>} : memref<32x128xf32, #tpu.memory_space<vmem>>, vector<2x32xf32>,
    %cst_233 = arith.constant dense<0.000000e+00> : vector<2x128xf32>
    %933 = tpu.matmul %917, %548, %cst_233 {dimension_numbers = #tpu.dot_dimension_numbers<[1], [0], [0], [1], [0, 0, 1, 1], [], []>} : vector<2x32xf32>, vector<32x128xf32>, vector<2x128xf32> -> vector<2x128xf32>
    %934 = arith.addf %359, %933 : vector<2x128xf32>
    %935 = vector.extract_strided_slice %934 {offsets = [0, 0], sizes = [2, 32], strides = [1, 1]} : vector<2x128xf32> to vector<2x32xf32>
    %936 = arith.negf %935 : vector<2x32xf32>
    %937 = math.exp %936 : vector<2x32xf32>
    %cst_234 = arith.constant 1.000000e+00 : f32
    %938 = vector.broadcast %cst_234 : f32 to vector<2x32xf32>
    %939 = arith.addf %938, %937 : vector<2x32xf32>
    %940 = arith.divf %938, %939 : vector<2x32xf32>
    %941 = vector.extract_strided_slice %934 {offsets = [0, 32], sizes = [2, 32], strides = [1, 1]} : vector<2x128xf32> to vector<2x32xf32>
    %942 = arith.negf %941 : vector<2x32xf32>
    %943 = math.exp %942 : vector<2x32xf32>
    %cst_235 = arith.constant 1.000000e+00 : f32
    %944 = vector.broadcast %cst_235 : f32 to vector<2x32xf32>
    %945 = arith.addf %944, %943 : vector<2x32xf32>
    %946 = arith.divf %944, %945 : vector<2x32xf32>
    %947 = vector.extract_strided_slice %934 {offsets = [0, 64], sizes = [2, 32], strides = [1, 1]} : vector<2x128xf32> to vector<2x32xf32>
    %948 = math.tanh %947 : vector<2x32xf32>
    %949 = vector.extract_strided_slice %934 {offsets = [0, 96], sizes = [2, 32], strides = [1, 1]} : vector<2x128xf32> to vector<2x32xf32>
    %950 = arith.negf %949 : vector<2x32xf32>
    %951 = math.exp %950 : vector<2x32xf32>
    %cst_236 = arith.constant 1.000000e+00 : f32
    %952 = vector.broadcast %cst_236 : f32 to vector<2x32xf32>
    %953 = arith.addf %952, %951 : vector<2x32xf32>
    %954 = arith.divf %952, %953 : vector<2x32xf32>
    %955 = arith.mulf %946, %915 : vector<2x32xf32>
    %956 = arith.mulf %940, %948 : vector<2x32xf32>
    %957 = arith.addf %955, %956 : vector<2x32xf32>
    %958 = math.tanh %957 : vector<2x32xf32>
    %959 = arith.mulf %954, %958 : vector<2x32xf32>
    %cst_237 = arith.constant dense<0.000000e+00> : vector<2x32xf32>
    %960 = tpu.matmul %959, %549, %cst_237 {dimension_numbers = #tpu.dot_dimension_numbers<[1], [0], [0], [1], [0, 0, 1, 1], [], []>} : vector<2x32xf32>, vector<32x32xf32>, vector<2x32xf32> -> vector<2x32xf32>
    %961 = vector.broadcast %550 : vector<1x32xf32> to vector<2x32xf32>
    %962 = arith.addf %960, %961 : vector<2x32xf32>
    %cst_238 = arith.constant dense<0xFF800000> : vector<2xf32>
    %963 = vector.multi_reduction <maximumf>, %962, %cst_238 [1] : vector<2x32xf32> to vector<2xf32>
    %964 = vector.shape_cast %963 : vector<2xf32> to vector<2x1xf32>
    %965 = vector.broadcast %964 : vector<2x1xf32> to vector<2x32xf32>
    %966 = arith.subf %962, %965 : vector<2x32xf32>
    %967 = math.exp %966 : vector<2x32xf32>
    %cst_239 = arith.constant dense<0.000000e+00> : vector<2xf32>
    %968 = vector.multi_reduction <add>, %967, %cst_239 [1] : vector<2x32xf32> to vector<2xf32>
    %969 = vector.shape_cast %968 : vector<2xf32> to vector<2x1xf32>
    %970 = math.log %969 : vector<2x1xf32>
    %971 = arith.addf %970, %964 : vector<2x1xf32>
    %972 = vector.broadcast %971 : vector<2x1xf32> to vector<2x32xf32>
    %973 = arith.subf %962, %972 : vector<2x32xf32>
    %c18 = arith.constant 18 : index
    %c0_240 = arith.constant 0 : index
    %974 = vector.load %arg14[%c18, %c0_240] : memref<32x128xf32, #tpu.memory_space<vmem>>, vector<2x32xf32>
    tpu.vector_store %arg14[%c18, %c0_240], %973 {strides = array<i32>} : memref<32x128xf32, #tpu.memory_space<vmem>>, vector<2x32xf32>,
    %cst_241 = arith.constant dense<0.000000e+00> : vector<2x128xf32>
    %975 = tpu.matmul %959, %548, %cst_241 {dimension_numbers = #tpu.dot_dimension_numbers<[1], [0], [0], [1], [0, 0, 1, 1], [], []>} : vector<2x32xf32>, vector<32x128xf32>, vector<2x128xf32> -> vector<2x128xf32>
    %976 = arith.addf %390, %975 : vector<2x128xf32>
    %977 = vector.extract_strided_slice %976 {offsets = [0, 0], sizes = [2, 32], strides = [1, 1]} : vector<2x128xf32> to vector<2x32xf32>
    %978 = arith.negf %977 : vector<2x32xf32>
    %979 = math.exp %978 : vector<2x32xf32>
    %cst_242 = arith.constant 1.000000e+00 : f32
    %980 = vector.broadcast %cst_242 : f32 to vector<2x32xf32>
    %981 = arith.addf %980, %979 : vector<2x32xf32>
    %982 = arith.divf %980, %981 : vector<2x32xf32>
    %983 = vector.extract_strided_slice %976 {offsets = [0, 32], sizes = [2, 32], strides = [1, 1]} : vector<2x128xf32> to vector<2x32xf32>
    %984 = arith.negf %983 : vector<2x32xf32>
    %985 = math.exp %984 : vector<2x32xf32>
    %cst_243 = arith.constant 1.000000e+00 : f32
    %986 = vector.broadcast %cst_243 : f32 to vector<2x32xf32>
    %987 = arith.addf %986, %985 : vector<2x32xf32>
    %988 = arith.divf %986, %987 : vector<2x32xf32>
    %989 = vector.extract_strided_slice %976 {offsets = [0, 64], sizes = [2, 32], strides = [1, 1]} : vector<2x128xf32> to vector<2x32xf32>
    %990 = math.tanh %989 : vector<2x32xf32>
    %991 = vector.extract_strided_slice %976 {offsets = [0, 96], sizes = [2, 32], strides = [1, 1]} : vector<2x128xf32> to vector<2x32xf32>
    %992 = arith.negf %991 : vector<2x32xf32>
    %993 = math.exp %992 : vector<2x32xf32>
    %cst_244 = arith.constant 1.000000e+00 : f32
    %994 = vector.broadcast %cst_244 : f32 to vector<2x32xf32>
    %995 = arith.addf %994, %993 : vector<2x32xf32>
    %996 = arith.divf %994, %995 : vector<2x32xf32>
    %997 = arith.mulf %988, %957 : vector<2x32xf32>
    %998 = arith.mulf %982, %990 : vector<2x32xf32>
    %999 = arith.addf %997, %998 : vector<2x32xf32>
    %1000 = math.tanh %999 : vector<2x32xf32>
    %1001 = arith.mulf %996, %1000 : vector<2x32xf32>
    %cst_245 = arith.constant dense<0.000000e+00> : vector<2x32xf32>
    %1002 = tpu.matmul %1001, %549, %cst_245 {dimension_numbers = #tpu.dot_dimension_numbers<[1], [0], [0], [1], [0, 0, 1, 1], [], []>} : vector<2x32xf32>, vector<32x32xf32>, vector<2x32xf32> -> vector<2x32xf32>
    %1003 = vector.broadcast %550 : vector<1x32xf32> to vector<2x32xf32>
    %1004 = arith.addf %1002, %1003 : vector<2x32xf32>
    %cst_246 = arith.constant dense<0xFF800000> : vector<2xf32>
    %1005 = vector.multi_reduction <maximumf>, %1004, %cst_246 [1] : vector<2x32xf32> to vector<2xf32>
    %1006 = vector.shape_cast %1005 : vector<2xf32> to vector<2x1xf32>
    %1007 = vector.broadcast %1006 : vector<2x1xf32> to vector<2x32xf32>
    %1008 = arith.subf %1004, %1007 : vector<2x32xf32>
    %1009 = math.exp %1008 : vector<2x32xf32>
    %cst_247 = arith.constant dense<0.000000e+00> : vector<2xf32>
    %1010 = vector.multi_reduction <add>, %1009, %cst_247 [1] : vector<2x32xf32> to vector<2xf32>
    %1011 = vector.shape_cast %1010 : vector<2xf32> to vector<2x1xf32>
    %1012 = math.log %1011 : vector<2x1xf32>
    %1013 = arith.addf %1012, %1006 : vector<2x1xf32>
    %1014 = vector.broadcast %1013 : vector<2x1xf32> to vector<2x32xf32>
    %1015 = arith.subf %1004, %1014 : vector<2x32xf32>
    %c20 = arith.constant 20 : index
    %c0_248 = arith.constant 0 : index
    %1016 = vector.load %arg14[%c20, %c0_248] : memref<32x128xf32, #tpu.memory_space<vmem>>, vector<2x32xf32>
    tpu.vector_store %arg14[%c20, %c0_248], %1015 {strides = array<i32>} : memref<32x128xf32, #tpu.memory_space<vmem>>, vector<2x32xf32>,
    %cst_249 = arith.constant dense<0.000000e+00> : vector<2x128xf32>
    %1017 = tpu.matmul %1001, %548, %cst_249 {dimension_numbers = #tpu.dot_dimension_numbers<[1], [0], [0], [1], [0, 0, 1, 1], [], []>} : vector<2x32xf32>, vector<32x128xf32>, vector<2x128xf32> -> vector<2x128xf32>
    %1018 = arith.addf %421, %1017 : vector<2x128xf32>
    %1019 = vector.extract_strided_slice %1018 {offsets = [0, 0], sizes = [2, 32], strides = [1, 1]} : vector<2x128xf32> to vector<2x32xf32>
    %1020 = arith.negf %1019 : vector<2x32xf32>
    %1021 = math.exp %1020 : vector<2x32xf32>
    %cst_250 = arith.constant 1.000000e+00 : f32
    %1022 = vector.broadcast %cst_250 : f32 to vector<2x32xf32>
    %1023 = arith.addf %1022, %1021 : vector<2x32xf32>
    %1024 = arith.divf %1022, %1023 : vector<2x32xf32>
    %1025 = vector.extract_strided_slice %1018 {offsets = [0, 32], sizes = [2, 32], strides = [1, 1]} : vector<2x128xf32> to vector<2x32xf32>
    %1026 = arith.negf %1025 : vector<2x32xf32>
    %1027 = math.exp %1026 : vector<2x32xf32>
    %cst_251 = arith.constant 1.000000e+00 : f32
    %1028 = vector.broadcast %cst_251 : f32 to vector<2x32xf32>
    %1029 = arith.addf %1028, %1027 : vector<2x32xf32>
    %1030 = arith.divf %1028, %1029 : vector<2x32xf32>
    %1031 = vector.extract_strided_slice %1018 {offsets = [0, 64], sizes = [2, 32], strides = [1, 1]} : vector<2x128xf32> to vector<2x32xf32>
    %1032 = math.tanh %1031 : vector<2x32xf32>
    %1033 = vector.extract_strided_slice %1018 {offsets = [0, 96], sizes = [2, 32], strides = [1, 1]} : vector<2x128xf32> to vector<2x32xf32>
    %1034 = arith.negf %1033 : vector<2x32xf32>
    %1035 = math.exp %1034 : vector<2x32xf32>
    %cst_252 = arith.constant 1.000000e+00 : f32
    %1036 = vector.broadcast %cst_252 : f32 to vector<2x32xf32>
    %1037 = arith.addf %1036, %1035 : vector<2x32xf32>
    %1038 = arith.divf %1036, %1037 : vector<2x32xf32>
    %1039 = arith.mulf %1030, %999 : vector<2x32xf32>
    %1040 = arith.mulf %1024, %1032 : vector<2x32xf32>
    %1041 = arith.addf %1039, %1040 : vector<2x32xf32>
    %1042 = math.tanh %1041 : vector<2x32xf32>
    %1043 = arith.mulf %1038, %1042 : vector<2x32xf32>
    %cst_253 = arith.constant dense<0.000000e+00> : vector<2x32xf32>
    %1044 = tpu.matmul %1043, %549, %cst_253 {dimension_numbers = #tpu.dot_dimension_numbers<[1], [0], [0], [1], [0, 0, 1, 1], [], []>} : vector<2x32xf32>, vector<32x32xf32>, vector<2x32xf32> -> vector<2x32xf32>
    %1045 = vector.broadcast %550 : vector<1x32xf32> to vector<2x32xf32>
    %1046 = arith.addf %1044, %1045 : vector<2x32xf32>
    %cst_254 = arith.constant dense<0xFF800000> : vector<2xf32>
    %1047 = vector.multi_reduction <maximumf>, %1046, %cst_254 [1] : vector<2x32xf32> to vector<2xf32>
    %1048 = vector.shape_cast %1047 : vector<2xf32> to vector<2x1xf32>
    %1049 = vector.broadcast %1048 : vector<2x1xf32> to vector<2x32xf32>
    %1050 = arith.subf %1046, %1049 : vector<2x32xf32>
    %1051 = math.exp %1050 : vector<2x32xf32>
    %cst_255 = arith.constant dense<0.000000e+00> : vector<2xf32>
    %1052 = vector.multi_reduction <add>, %1051, %cst_255 [1] : vector<2x32xf32> to vector<2xf32>
    %1053 = vector.shape_cast %1052 : vector<2xf32> to vector<2x1xf32>
    %1054 = math.log %1053 : vector<2x1xf32>
    %1055 = arith.addf %1054, %1048 : vector<2x1xf32>
    %1056 = vector.broadcast %1055 : vector<2x1xf32> to vector<2x32xf32>
    %1057 = arith.subf %1046, %1056 : vector<2x32xf32>
    %c22 = arith.constant 22 : index
    %c0_256 = arith.constant 0 : index
    %1058 = vector.load %arg14[%c22, %c0_256] : memref<32x128xf32, #tpu.memory_space<vmem>>, vector<2x32xf32>
    tpu.vector_store %arg14[%c22, %c0_256], %1057 {strides = array<i32>} : memref<32x128xf32, #tpu.memory_space<vmem>>, vector<2x32xf32>,
    %cst_257 = arith.constant dense<0.000000e+00> : vector<2x128xf32>
    %1059 = tpu.matmul %1043, %548, %cst_257 {dimension_numbers = #tpu.dot_dimension_numbers<[1], [0], [0], [1], [0, 0, 1, 1], [], []>} : vector<2x32xf32>, vector<32x128xf32>, vector<2x128xf32> -> vector<2x128xf32>
    %1060 = arith.addf %452, %1059 : vector<2x128xf32>
    %1061 = vector.extract_strided_slice %1060 {offsets = [0, 0], sizes = [2, 32], strides = [1, 1]} : vector<2x128xf32> to vector<2x32xf32>
    %1062 = arith.negf %1061 : vector<2x32xf32>
    %1063 = math.exp %1062 : vector<2x32xf32>
    %cst_258 = arith.constant 1.000000e+00 : f32
    %1064 = vector.broadcast %cst_258 : f32 to vector<2x32xf32>
    %1065 = arith.addf %1064, %1063 : vector<2x32xf32>
    %1066 = arith.divf %1064, %1065 : vector<2x32xf32>
    %1067 = vector.extract_strided_slice %1060 {offsets = [0, 32], sizes = [2, 32], strides = [1, 1]} : vector<2x128xf32> to vector<2x32xf32>
    %1068 = arith.negf %1067 : vector<2x32xf32>
    %1069 = math.exp %1068 : vector<2x32xf32>
    %cst_259 = arith.constant 1.000000e+00 : f32
    %1070 = vector.broadcast %cst_259 : f32 to vector<2x32xf32>
    %1071 = arith.addf %1070, %1069 : vector<2x32xf32>
    %1072 = arith.divf %1070, %1071 : vector<2x32xf32>
    %1073 = vector.extract_strided_slice %1060 {offsets = [0, 64], sizes = [2, 32], strides = [1, 1]} : vector<2x128xf32> to vector<2x32xf32>
    %1074 = math.tanh %1073 : vector<2x32xf32>
    %1075 = vector.extract_strided_slice %1060 {offsets = [0, 96], sizes = [2, 32], strides = [1, 1]} : vector<2x128xf32> to vector<2x32xf32>
    %1076 = arith.negf %1075 : vector<2x32xf32>
    %1077 = math.exp %1076 : vector<2x32xf32>
    %cst_260 = arith.constant 1.000000e+00 : f32
    %1078 = vector.broadcast %cst_260 : f32 to vector<2x32xf32>
    %1079 = arith.addf %1078, %1077 : vector<2x32xf32>
    %1080 = arith.divf %1078, %1079 : vector<2x32xf32>
    %1081 = arith.mulf %1072, %1041 : vector<2x32xf32>
    %1082 = arith.mulf %1066, %1074 : vector<2x32xf32>
    %1083 = arith.addf %1081, %1082 : vector<2x32xf32>
    %1084 = math.tanh %1083 : vector<2x32xf32>
    %1085 = arith.mulf %1080, %1084 : vector<2x32xf32>
    %cst_261 = arith.constant dense<0.000000e+00> : vector<2x32xf32>
    %1086 = tpu.matmul %1085, %549, %cst_261 {dimension_numbers = #tpu.dot_dimension_numbers<[1], [0], [0], [1], [0, 0, 1, 1], [], []>} : vector<2x32xf32>, vector<32x32xf32>, vector<2x32xf32> -> vector<2x32xf32>
    %1087 = vector.broadcast %550 : vector<1x32xf32> to vector<2x32xf32>
    %1088 = arith.addf %1086, %1087 : vector<2x32xf32>
    %cst_262 = arith.constant dense<0xFF800000> : vector<2xf32>
    %1089 = vector.multi_reduction <maximumf>, %1088, %cst_262 [1] : vector<2x32xf32> to vector<2xf32>
    %1090 = vector.shape_cast %1089 : vector<2xf32> to vector<2x1xf32>
    %1091 = vector.broadcast %1090 : vector<2x1xf32> to vector<2x32xf32>
    %1092 = arith.subf %1088, %1091 : vector<2x32xf32>
    %1093 = math.exp %1092 : vector<2x32xf32>
    %cst_263 = arith.constant dense<0.000000e+00> : vector<2xf32>
    %1094 = vector.multi_reduction <add>, %1093, %cst_263 [1] : vector<2x32xf32> to vector<2xf32>
    %1095 = vector.shape_cast %1094 : vector<2xf32> to vector<2x1xf32>
    %1096 = math.log %1095 : vector<2x1xf32>
    %1097 = arith.addf %1096, %1090 : vector<2x1xf32>
    %1098 = vector.broadcast %1097 : vector<2x1xf32> to vector<2x32xf32>
    %1099 = arith.subf %1088, %1098 : vector<2x32xf32>
    %c24 = arith.constant 24 : index
    %c0_264 = arith.constant 0 : index
    %1100 = vector.load %arg14[%c24, %c0_264] : memref<32x128xf32, #tpu.memory_space<vmem>>, vector<2x32xf32>
    tpu.vector_store %arg14[%c24, %c0_264], %1099 {strides = array<i32>} : memref<32x128xf32, #tpu.memory_space<vmem>>, vector<2x32xf32>,
    %cst_265 = arith.constant dense<0.000000e+00> : vector<2x128xf32>
    %1101 = tpu.matmul %1085, %548, %cst_265 {dimension_numbers = #tpu.dot_dimension_numbers<[1], [0], [0], [1], [0, 0, 1, 1], [], []>} : vector<2x32xf32>, vector<32x128xf32>, vector<2x128xf32> -> vector<2x128xf32>
    %1102 = arith.addf %483, %1101 : vector<2x128xf32>
    %1103 = vector.extract_strided_slice %1102 {offsets = [0, 0], sizes = [2, 32], strides = [1, 1]} : vector<2x128xf32> to vector<2x32xf32>
    %1104 = arith.negf %1103 : vector<2x32xf32>
    %1105 = math.exp %1104 : vector<2x32xf32>
    %cst_266 = arith.constant 1.000000e+00 : f32
    %1106 = vector.broadcast %cst_266 : f32 to vector<2x32xf32>
    %1107 = arith.addf %1106, %1105 : vector<2x32xf32>
    %1108 = arith.divf %1106, %1107 : vector<2x32xf32>
    %1109 = vector.extract_strided_slice %1102 {offsets = [0, 32], sizes = [2, 32], strides = [1, 1]} : vector<2x128xf32> to vector<2x32xf32>
    %1110 = arith.negf %1109 : vector<2x32xf32>
    %1111 = math.exp %1110 : vector<2x32xf32>
    %cst_267 = arith.constant 1.000000e+00 : f32
    %1112 = vector.broadcast %cst_267 : f32 to vector<2x32xf32>
    %1113 = arith.addf %1112, %1111 : vector<2x32xf32>
    %1114 = arith.divf %1112, %1113 : vector<2x32xf32>
    %1115 = vector.extract_strided_slice %1102 {offsets = [0, 64], sizes = [2, 32], strides = [1, 1]} : vector<2x128xf32> to vector<2x32xf32>
    %1116 = math.tanh %1115 : vector<2x32xf32>
    %1117 = vector.extract_strided_slice %1102 {offsets = [0, 96], sizes = [2, 32], strides = [1, 1]} : vector<2x128xf32> to vector<2x32xf32>
    %1118 = arith.negf %1117 : vector<2x32xf32>
    %1119 = math.exp %1118 : vector<2x32xf32>
    %cst_268 = arith.constant 1.000000e+00 : f32
    %1120 = vector.broadcast %cst_268 : f32 to vector<2x32xf32>
    %1121 = arith.addf %1120, %1119 : vector<2x32xf32>
    %1122 = arith.divf %1120, %1121 : vector<2x32xf32>
    %1123 = arith.mulf %1114, %1083 : vector<2x32xf32>
    %1124 = arith.mulf %1108, %1116 : vector<2x32xf32>
    %1125 = arith.addf %1123, %1124 : vector<2x32xf32>
    %1126 = math.tanh %1125 : vector<2x32xf32>
    %1127 = arith.mulf %1122, %1126 : vector<2x32xf32>
    %cst_269 = arith.constant dense<0.000000e+00> : vector<2x32xf32>
    %1128 = tpu.matmul %1127, %549, %cst_269 {dimension_numbers = #tpu.dot_dimension_numbers<[1], [0], [0], [1], [0, 0, 1, 1], [], []>} : vector<2x32xf32>, vector<32x32xf32>, vector<2x32xf32> -> vector<2x32xf32>
    %1129 = vector.broadcast %550 : vector<1x32xf32> to vector<2x32xf32>
    %1130 = arith.addf %1128, %1129 : vector<2x32xf32>
    %cst_270 = arith.constant dense<0xFF800000> : vector<2xf32>
    %1131 = vector.multi_reduction <maximumf>, %1130, %cst_270 [1] : vector<2x32xf32> to vector<2xf32>
    %1132 = vector.shape_cast %1131 : vector<2xf32> to vector<2x1xf32>
    %1133 = vector.broadcast %1132 : vector<2x1xf32> to vector<2x32xf32>
    %1134 = arith.subf %1130, %1133 : vector<2x32xf32>
    %1135 = math.exp %1134 : vector<2x32xf32>
    %cst_271 = arith.constant dense<0.000000e+00> : vector<2xf32>
    %1136 = vector.multi_reduction <add>, %1135, %cst_271 [1] : vector<2x32xf32> to vector<2xf32>
    %1137 = vector.shape_cast %1136 : vector<2xf32> to vector<2x1xf32>
    %1138 = math.log %1137 : vector<2x1xf32>
    %1139 = arith.addf %1138, %1132 : vector<2x1xf32>
    %1140 = vector.broadcast %1139 : vector<2x1xf32> to vector<2x32xf32>
    %1141 = arith.subf %1130, %1140 : vector<2x32xf32>
    %c26 = arith.constant 26 : index
    %c0_272 = arith.constant 0 : index
    %1142 = vector.load %arg14[%c26, %c0_272] : memref<32x128xf32, #tpu.memory_space<vmem>>, vector<2x32xf32>
    tpu.vector_store %arg14[%c26, %c0_272], %1141 {strides = array<i32>} : memref<32x128xf32, #tpu.memory_space<vmem>>, vector<2x32xf32>,
    %cst_273 = arith.constant dense<0.000000e+00> : vector<2x128xf32>
    %1143 = tpu.matmul %1127, %548, %cst_273 {dimension_numbers = #tpu.dot_dimension_numbers<[1], [0], [0], [1], [0, 0, 1, 1], [], []>} : vector<2x32xf32>, vector<32x128xf32>, vector<2x128xf32> -> vector<2x128xf32>
    %1144 = arith.addf %514, %1143 : vector<2x128xf32>
    %1145 = vector.extract_strided_slice %1144 {offsets = [0, 0], sizes = [2, 32], strides = [1, 1]} : vector<2x128xf32> to vector<2x32xf32>
    %1146 = arith.negf %1145 : vector<2x32xf32>
    %1147 = math.exp %1146 : vector<2x32xf32>
    %cst_274 = arith.constant 1.000000e+00 : f32
    %1148 = vector.broadcast %cst_274 : f32 to vector<2x32xf32>
    %1149 = arith.addf %1148, %1147 : vector<2x32xf32>
    %1150 = arith.divf %1148, %1149 : vector<2x32xf32>
    %1151 = vector.extract_strided_slice %1144 {offsets = [0, 32], sizes = [2, 32], strides = [1, 1]} : vector<2x128xf32> to vector<2x32xf32>
    %1152 = arith.negf %1151 : vector<2x32xf32>
    %1153 = math.exp %1152 : vector<2x32xf32>
    %cst_275 = arith.constant 1.000000e+00 : f32
    %1154 = vector.broadcast %cst_275 : f32 to vector<2x32xf32>
    %1155 = arith.addf %1154, %1153 : vector<2x32xf32>
    %1156 = arith.divf %1154, %1155 : vector<2x32xf32>
    %1157 = vector.extract_strided_slice %1144 {offsets = [0, 64], sizes = [2, 32], strides = [1, 1]} : vector<2x128xf32> to vector<2x32xf32>
    %1158 = math.tanh %1157 : vector<2x32xf32>
    %1159 = vector.extract_strided_slice %1144 {offsets = [0, 96], sizes = [2, 32], strides = [1, 1]} : vector<2x128xf32> to vector<2x32xf32>
    %1160 = arith.negf %1159 : vector<2x32xf32>
    %1161 = math.exp %1160 : vector<2x32xf32>
    %cst_276 = arith.constant 1.000000e+00 : f32
    %1162 = vector.broadcast %cst_276 : f32 to vector<2x32xf32>
    %1163 = arith.addf %1162, %1161 : vector<2x32xf32>
    %1164 = arith.divf %1162, %1163 : vector<2x32xf32>
    %1165 = arith.mulf %1156, %1125 : vector<2x32xf32>
    %1166 = arith.mulf %1150, %1158 : vector<2x32xf32>
    %1167 = arith.addf %1165, %1166 : vector<2x32xf32>
    %1168 = math.tanh %1167 : vector<2x32xf32>
    %1169 = arith.mulf %1164, %1168 : vector<2x32xf32>
    %cst_277 = arith.constant dense<0.000000e+00> : vector<2x32xf32>
    %1170 = tpu.matmul %1169, %549, %cst_277 {dimension_numbers = #tpu.dot_dimension_numbers<[1], [0], [0], [1], [0, 0, 1, 1], [], []>} : vector<2x32xf32>, vector<32x32xf32>, vector<2x32xf32> -> vector<2x32xf32>
    %1171 = vector.broadcast %550 : vector<1x32xf32> to vector<2x32xf32>
    %1172 = arith.addf %1170, %1171 : vector<2x32xf32>
    %cst_278 = arith.constant dense<0xFF800000> : vector<2xf32>
    %1173 = vector.multi_reduction <maximumf>, %1172, %cst_278 [1] : vector<2x32xf32> to vector<2xf32>
    %1174 = vector.shape_cast %1173 : vector<2xf32> to vector<2x1xf32>
    %1175 = vector.broadcast %1174 : vector<2x1xf32> to vector<2x32xf32>
    %1176 = arith.subf %1172, %1175 : vector<2x32xf32>
    %1177 = math.exp %1176 : vector<2x32xf32>
    %cst_279 = arith.constant dense<0.000000e+00> : vector<2xf32>
    %1178 = vector.multi_reduction <add>, %1177, %cst_279 [1] : vector<2x32xf32> to vector<2xf32>
    %1179 = vector.shape_cast %1178 : vector<2xf32> to vector<2x1xf32>
    %1180 = math.log %1179 : vector<2x1xf32>
    %1181 = arith.addf %1180, %1174 : vector<2x1xf32>
    %1182 = vector.broadcast %1181 : vector<2x1xf32> to vector<2x32xf32>
    %1183 = arith.subf %1172, %1182 : vector<2x32xf32>
    %c28 = arith.constant 28 : index
    %c0_280 = arith.constant 0 : index
    %1184 = vector.load %arg14[%c28, %c0_280] : memref<32x128xf32, #tpu.memory_space<vmem>>, vector<2x32xf32>
    tpu.vector_store %arg14[%c28, %c0_280], %1183 {strides = array<i32>} : memref<32x128xf32, #tpu.memory_space<vmem>>, vector<2x32xf32>,
    %cst_281 = arith.constant dense<0.000000e+00> : vector<2x128xf32>
    %1185 = tpu.matmul %1169, %548, %cst_281 {dimension_numbers = #tpu.dot_dimension_numbers<[1], [0], [0], [1], [0, 0, 1, 1], [], []>} : vector<2x32xf32>, vector<32x128xf32>, vector<2x128xf32> -> vector<2x128xf32>
    %1186 = arith.addf %545, %1185 : vector<2x128xf32>
    %1187 = vector.extract_strided_slice %1186 {offsets = [0, 0], sizes = [2, 32], strides = [1, 1]} : vector<2x128xf32> to vector<2x32xf32>
    %1188 = arith.negf %1187 : vector<2x32xf32>
    %1189 = math.exp %1188 : vector<2x32xf32>
    %cst_282 = arith.constant 1.000000e+00 : f32
    %1190 = vector.broadcast %cst_282 : f32 to vector<2x32xf32>
    %1191 = arith.addf %1190, %1189 : vector<2x32xf32>
    %1192 = arith.divf %1190, %1191 : vector<2x32xf32>
    %1193 = vector.extract_strided_slice %1186 {offsets = [0, 32], sizes = [2, 32], strides = [1, 1]} : vector<2x128xf32> to vector<2x32xf32>
    %1194 = arith.negf %1193 : vector<2x32xf32>
    %1195 = math.exp %1194 : vector<2x32xf32>
    %cst_283 = arith.constant 1.000000e+00 : f32
    %1196 = vector.broadcast %cst_283 : f32 to vector<2x32xf32>
    %1197 = arith.addf %1196, %1195 : vector<2x32xf32>
    %1198 = arith.divf %1196, %1197 : vector<2x32xf32>
    %1199 = vector.extract_strided_slice %1186 {offsets = [0, 64], sizes = [2, 32], strides = [1, 1]} : vector<2x128xf32> to vector<2x32xf32>
    %1200 = math.tanh %1199 : vector<2x32xf32>
    %1201 = vector.extract_strided_slice %1186 {offsets = [0, 96], sizes = [2, 32], strides = [1, 1]} : vector<2x128xf32> to vector<2x32xf32>
    %1202 = arith.negf %1201 : vector<2x32xf32>
    %1203 = math.exp %1202 : vector<2x32xf32>
    %cst_284 = arith.constant 1.000000e+00 : f32
    %1204 = vector.broadcast %cst_284 : f32 to vector<2x32xf32>
    %1205 = arith.addf %1204, %1203 : vector<2x32xf32>
    %1206 = arith.divf %1204, %1205 : vector<2x32xf32>
    %1207 = arith.mulf %1198, %1167 : vector<2x32xf32>
    %1208 = arith.mulf %1192, %1200 : vector<2x32xf32>
    %1209 = arith.addf %1207, %1208 : vector<2x32xf32>
    %1210 = math.tanh %1209 : vector<2x32xf32>
    %1211 = arith.mulf %1206, %1210 : vector<2x32xf32>
    %cst_285 = arith.constant dense<0.000000e+00> : vector<2x32xf32>
    %1212 = tpu.matmul %1211, %549, %cst_285 {dimension_numbers = #tpu.dot_dimension_numbers<[1], [0], [0], [1], [0, 0, 1, 1], [], []>} : vector<2x32xf32>, vector<32x32xf32>, vector<2x32xf32> -> vector<2x32xf32>
    %1213 = vector.broadcast %550 : vector<1x32xf32> to vector<2x32xf32>
    %1214 = arith.addf %1212, %1213 : vector<2x32xf32>
    %cst_286 = arith.constant dense<0xFF800000> : vector<2xf32>
    %1215 = vector.multi_reduction <maximumf>, %1214, %cst_286 [1] : vector<2x32xf32> to vector<2xf32>
    %1216 = vector.shape_cast %1215 : vector<2xf32> to vector<2x1xf32>
    %1217 = vector.broadcast %1216 : vector<2x1xf32> to vector<2x32xf32>
    %1218 = arith.subf %1214, %1217 : vector<2x32xf32>
    %1219 = math.exp %1218 : vector<2x32xf32>
    %cst_287 = arith.constant dense<0.000000e+00> : vector<2xf32>
    %1220 = vector.multi_reduction <add>, %1219, %cst_287 [1] : vector<2x32xf32> to vector<2xf32>
    %1221 = vector.shape_cast %1220 : vector<2xf32> to vector<2x1xf32>
    %1222 = math.log %1221 : vector<2x1xf32>
    %1223 = arith.addf %1222, %1216 : vector<2x1xf32>
    %1224 = vector.broadcast %1223 : vector<2x1xf32> to vector<2x32xf32>
    %1225 = arith.subf %1214, %1224 : vector<2x32xf32>
    %c30_288 = arith.constant 30 : index
    %c0_289 = arith.constant 0 : index
    %1226 = vector.load %arg14[%c30_288, %c0_289] : memref<32x128xf32, #tpu.memory_space<vmem>>, vector<2x32xf32>
    tpu.vector_store %arg14[%c30_288, %c0_289], %1225 {strides = array<i32>} : memref<32x128xf32, #tpu.memory_space<vmem>>, vector<2x32xf32>,
    %c2_290 = arith.constant 2 : index
    %c64_291 = arith.constant 64 : index
    %1227 = vector.load %arg14[%c2_290, %c64_291] : memref<32x128xf32, #tpu.memory_space<vmem>>, vector<2x32xf32>
    tpu.vector_store %arg14[%c2_290, %c64_291], %1211 {strides = array<i32>} : memref<32x128xf32, #tpu.memory_space<vmem>>, vector<2x32xf32>,
    %c2_292 = arith.constant 2 : index
    %c96_293 = arith.constant 96 : index
    %1228 = vector.load %arg14[%c2_292, %c96_293] : memref<32x128xf32, #tpu.memory_space<vmem>>, vector<2x32xf32>
    tpu.vector_store %arg14[%c2_292, %c96_293], %1209 {strides = array<i32>} : memref<32x128xf32, #tpu.memory_space<vmem>>, vector<2x32xf32>,
    return
  }
}

</mosaic_0001>

<llo_original>
// kernel: onnx_encoder_forward.1
$region0: #{onnx_encoder_forward.1}
  #allocation0 [shape = 'u32[]', space=smem, size = 0x4, offset = 0x4, fixed_abs, tag = 'smem constant byte address 0x4 - core index']
  #allocation1 [shape = 'u32[72,128]{1,0:T(1,128)}', space=vmem, size = 0x9000, scoped, tag = 'internal scratch']
  #allocation2 [shape = 'f32[32,48]{1,0:T(8,128)}', space=vmem, size = 0x4000, scoped, tag = 'scratch operand']
  #allocation3 [shape = 'f32[32,96]{1,0:T(8,128)}', space=vmem, size = 0x4000, scoped, tag = 'scratch operand']
  %s0 = inlined_call_operand.vmem [shape: f32[32,16], index: 0, kind: input, shape index: {}]
  %s1 = inlined_call_operand.vmem [shape: f32[48,32], index: 1, kind: input, shape index: {}]
  %s2 = inlined_call_operand.vmem [shape: f32[1,32], index: 2, kind: input, shape index: {}]
  %s3 = inlined_call_operand.vmem [shape: f32[96,32], index: 3, kind: input, shape index: {}]
  %s4 = inlined_call_operand.vmem [shape: f32[1,32], index: 4, kind: input, shape index: {}]
  %s5 = inlined_call_operand.vmem [shape: f32[32,128], index: 5, kind: input, shape index: {}]
  %s6 = inlined_call_operand.vmem [shape: f32[32,128], index: 6, kind: input, shape index: {}]
  %s7 = inlined_call_operand.vmem [shape: f32[1,128], index: 7, kind: input, shape index: {}]
  %s8 = inlined_call_operand.vmem [shape: f32[32,128], index: 8, kind: input, shape index: {}]
  %s9 = inlined_call_operand.vmem [shape: f32[32,128], index: 9, kind: input, shape index: {}]
  %s10 = inlined_call_operand.vmem [shape: f32[1,128], index: 10, kind: input, shape index: {}]
  %s11 = inlined_call_operand.vmem [shape: f32[32,32], index: 11, kind: input, shape index: {}]
  %s12 = inlined_call_operand.vmem [shape: f32[1,32], index: 12, kind: input, shape index: {}]
  %s13 = inlined_call_operand.vmem [shape: f32[2,2,1,2,32], index: 13, kind: input, shape index: {}]
  %s14 = inlined_call_operand.vmem [shape: f32[32,128], index: 14, kind: output, shape index: {}]
  %s15 = sld [smem:[#allocation0]]
  $region66: #{onnx_encoder_forward.1} parent=0
    _
  %s17 = ssub.s32 1, %s15
  %s18 = scalar_select 0, %s17, %s15
  // Predicated region
  $region2: #{onnx_encoder_forward.1} parent=0 // pred_check
    _
  $region3: #{onnx_encoder_forward.1} parent=0 // pred_check_branch
    %20 = sbr.rel (0) target = $region5
  $region4: #{onnx_encoder_forward.1} parent=0 // pred_region
    _
  $region5: #{onnx_encoder_forward.1} parent=0 // pred_fallthru
    _
  // Predicated region
  $region6: #{onnx_encoder_forward.1} parent=0 // pred_check
    _
  $region7: #{onnx_encoder_forward.1} parent=0 // pred_check_branch
    %22 = sbr.rel (0) target = $region9
  $region8: #{onnx_encoder_forward.1} parent=0 // pred_region
    _
  $region9: #{onnx_encoder_forward.1} parent=0 // pred_fallthru
    _
  // Predicated region
  $region10: #{onnx_encoder_forward.1} parent=0 // pred_check
    _
  $region11: #{onnx_encoder_forward.1} parent=0 // pred_check_branch
    %24 = sbr.rel (0) target = $region13
  $region12: #{onnx_encoder_forward.1} parent=0 // pred_region
    _
  $region13: #{onnx_encoder_forward.1} parent=0 // pred_fallthru
    _
  // Predicated region
  $region14: #{onnx_encoder_forward.1} parent=0 // pred_check
    _
  $region15: #{onnx_encoder_forward.1} parent=0 // pred_check_branch
    %26 = sbr.rel (0) target = $region17
  $region16: #{onnx_encoder_forward.1} parent=0 // pred_region
    _
  $region17: #{onnx_encoder_forward.1} parent=0 // pred_fallthru
    _
  // Predicated region
  $region18: #{onnx_encoder_forward.1} parent=0 // pred_check
    _
  $region19: #{onnx_encoder_forward.1} parent=0 // pred_check_branch
    %28 = sbr.rel (0) target = $region21
  $region20: #{onnx_encoder_forward.1} parent=0 // pred_region
    _
  $region21: #{onnx_encoder_forward.1} parent=0 // pred_fallthru
    _
  // Predicated region
  $region22: #{onnx_encoder_forward.1} parent=0 // pred_check
    _
  $region23: #{onnx_encoder_forward.1} parent=0 // pred_check_branch
    %30 = sbr.rel (0) target = $region25
  $region24: #{onnx_encoder_forward.1} parent=0 // pred_region
    _
  $region25: #{onnx_encoder_forward.1} parent=0 // pred_fallthru
    _
  // Predicated region
  $region26: #{onnx_encoder_forward.1} parent=0 // pred_check
    _
  $region27: #{onnx_encoder_forward.1} parent=0 // pred_check_branch
    %32 = sbr.rel (0) target = $region29
  $region28: #{onnx_encoder_forward.1} parent=0 // pred_region
    _
  $region29: #{onnx_encoder_forward.1} parent=0 // pred_fallthru
    _
  // Predicated region
  $region30: #{onnx_encoder_forward.1} parent=0 // pred_check
    _
  $region31: #{onnx_encoder_forward.1} parent=0 // pred_check_branch
    %34 = sbr.rel (0) target = $region33
  $region32: #{onnx_encoder_forward.1} parent=0 // pred_region
    _
  $region33: #{onnx_encoder_forward.1} parent=0 // pred_fallthru
    _
  // Predicated region
  $region34: #{onnx_encoder_forward.1} parent=0 // pred_check
    _
  $region35: #{onnx_encoder_forward.1} parent=0 // pred_check_branch
    %36 = sbr.rel (0) target = $region37
  $region36: #{onnx_encoder_forward.1} parent=0 // pred_region
    _
  $region37: #{onnx_encoder_forward.1} parent=0 // pred_fallthru
    _
  // Predicated region
  $region38: #{onnx_encoder_forward.1} parent=0 // pred_check
    _
  $region39: #{onnx_encoder_forward.1} parent=0 // pred_check_branch
    %38 = sbr.rel (0) target = $region41
  $region40: #{onnx_encoder_forward.1} parent=0 // pred_region
    _
  $region41: #{onnx_encoder_forward.1} parent=0 // pred_fallthru
    _
  // Predicated region
  $region42: #{onnx_encoder_forward.1} parent=0 // pred_check
    _
  $region43: #{onnx_encoder_forward.1} parent=0 // pred_check_branch
    %40 = sbr.rel (0) target = $region45
  $region44: #{onnx_encoder_forward.1} parent=0 // pred_region
    _
  $region45: #{onnx_encoder_forward.1} parent=0 // pred_fallthru
    _
  // Predicated region
  $region46: #{onnx_encoder_forward.1} parent=0 // pred_check
    _
  $region47: #{onnx_encoder_forward.1} parent=0 // pred_check_branch
    %42 = sbr.rel (0) target = $region49
  $region48: #{onnx_encoder_forward.1} parent=0 // pred_region
    _
  $region49: #{onnx_encoder_forward.1} parent=0 // pred_fallthru
    _
  // Predicated region
  $region50: #{onnx_encoder_forward.1} parent=0 // pred_check
    _
  $region51: #{onnx_encoder_forward.1} parent=0 // pred_check_branch
    %44 = sbr.rel (0) target = $region53
  $region52: #{onnx_encoder_forward.1} parent=0 // pred_region
    _
  $region53: #{onnx_encoder_forward.1} parent=0 // pred_fallthru
    _
  // Predicated region
  $region54: #{onnx_encoder_forward.1} parent=0 // pred_check
    _
  $region55: #{onnx_encoder_forward.1} parent=0 // pred_check_branch
    %46 = sbr.rel (0) target = $region57
  $region56: #{onnx_encoder_forward.1} parent=0 // pred_region
    _
  $region57: #{onnx_encoder_forward.1} parent=0 // pred_fallthru
    _
  %v47 = vld [vmem:[%s0] sm:$0xff]
  %v48 = vld [vmem:[%s0 + $0x8] sm:$0xff]
  %v49 = vld [vmem:[%s0 + $0x10] sm:$0xff]
  %v50 = vld [vmem:[%s0 + $0x18] sm:$0xff]
  %v51 = vmul.f32 %v47, 0.0
  %v52 = vmul.f32 %v48, 0.0
  %v53 = vmul.f32 %v49, 0.0
  %v54 = vmul.f32 %v50, 0.0
  %vm55 = vcmask 123904
  %56 = vst.msk [vmem:[#allocation2] sm:$0x3] %vm55, 0.0
  %vm57 = vcmask 130048
  %58 = vst.msk [vmem:[#allocation2 + $0x2] sm:$0xff] %vm57, %v51
  %59 = vst.msk [vmem:[#allocation2 + $0xa] sm:$0xff] %vm57, %v52
  %60 = vst.msk [vmem:[#allocation2 + $0x12] sm:$0xff] %vm57, %v53
  %vm61 = vcmask 128000
  %62 = vst.msk [vmem:[#allocation2 + $0x1a] sm:$0x3f] %vm61, %v54
  %67 = vrot.lane.b32.xlu0 %v51, 16
  %v68 = vpop.permute.xlu0 %67
  %69 = vrot.lane.b32.xlu0 %v52, 16
  %v70 = vpop.permute.xlu0 %69
  %71 = vrot.lane.b32.xlu0 %v53, 16
  %v72 = vpop.permute.xlu0 %71
  %73 = vrot.lane.b32.xlu0 %v54, 16
  %v74 = vpop.permute.xlu0 %73
  %vm79 = vcmask 261248
  %80 = vst.msk [vmem:[#allocation2] sm:$0xff] %vm79, %v68
  %81 = vst.msk [vmem:[#allocation2 + $0x8] sm:$0xff] %vm79, %v70
  %82 = vst.msk [vmem:[#allocation2 + $0x10] sm:$0xff] %vm79, %v72
  %83 = vst.msk [vmem:[#allocation2 + $0x18] sm:$0xff] %vm79, %v74
  %84 = vrot.lane.b32.xlu0 %v51, 32
  %v85 = vpop.permute.xlu0 %84
  %86 = vrot.lane.b32.xlu0 %v52, 32
  %v87 = vpop.permute.xlu0 %86
  %88 = vrot.lane.b32.xlu0 %v53, 32
  %v89 = vpop.permute.xlu0 %88
  %90 = vrot.lane.b32.xlu0 %v54, 32
  %v91 = vpop.permute.xlu0 %90
  %vm96 = vcmask 392450
  %97 = vst.msk [vmem:[#allocation2 - $0x2] sm:$0xfc] %vm96, %v85
  %vm98 = vcmask 392448
  %99 = vst.msk [vmem:[#allocation2 + $0x6] sm:$0xff] %vm98, %v87
  %100 = vst.msk [vmem:[#allocation2 + $0xe] sm:$0xff] %vm98, %v89
  %101 = vst.msk [vmem:[#allocation2 + $0x16] sm:$0xff] %vm98, %v91
  %vm102 = vcmask 386304
  %103 = vst.msk [vmem:[#allocation2 + $0x1e] sm:$0x3] %vm102, 0.0
  %v104 = vld [vmem:[#allocation2] sm:$0xff]
  %v105 = vld [vmem:[#allocation2 + $0x8] sm:$0xff]
  %v106 = vld [vmem:[#allocation2 + $0x10] sm:$0xff]
  %v107 = vld [vmem:[#allocation2 + $0x18] sm:$0xff]
  %v108 = vld [vmem:[%s1] sm:$0xff]
  %v109 = vld [vmem:[%s1 + $0x8] sm:$0xff]
  %v110 = vld [vmem:[%s1 + $0x10] sm:$0xff]
  %v111 = vld [vmem:[%s1 + $0x18] sm:$0xff]
  %v112 = vld [vmem:[%s1 + $0x20] sm:$0xff]
  %v113 = vld [vmem:[%s1 + $0x28] sm:$0xff]
  %v114 = vld [vmem:[%s2] sm:$0x1]
  %v116 = vperm.slane %v114, 0
  %vm118 = vcmask 392192
  %v120 = vsel %vm118, %v104, 0
  %v123 = vsel %vm118, %v105, 0
  %v126 = vsel %vm118, %v106, 0
  %v129 = vsel %vm118, %v107, 0
  %131 = vmatpush.msra.mxu0 0.0
  %132 = vmatpush.msra.mxu0 0.0
  %133 = vmatpush.msra.mxu0 0.0
  %134 = vmatpush.msra.mxu0 0.0
  %135 = vmatpush.msra.mxu0 0.0
  %136 = vmatpush.msra.mxu0 0.0
  %137 = vmatpush.msra.mxu0 0.0
  %138 = vmatpush.msra.mxu0 0.0
  %139 = vmatpush.msra.mxu0 0.0
  %140 = vmatpush.msra.mxu0 0.0
  %141 = vmatpush.msra.mxu0 %v113
  %142 = vmatpush.msra.mxu0 %v112
  %143 = vmatpush.msra.mxu0 %v111
  %144 = vmatpush.msra.mxu0 %v110
  %145 = vmatpush.msra.mxu0 %v109
  %146 = vmatpush.msra.mxu0 %v108
  %147 = vmatmul.f32.gmra.mxu0 %v120
  %v148 = vpop.f32.mrf.mxu0
  %v149 = vadd.f32 %v116, %v148
  %150 = vmatmul.f32.gmra.mxu0 %v123
  %v151 = vpop.f32.mrf.mxu0
  %v152 = vadd.f32 %v116, %v151
  %153 = vmatmul.f32.gmra.mxu0 %v126
  %v154 = vpop.f32.mrf.mxu0
  %v155 = vadd.f32 %v116, %v154
  %156 = vmatmul.f32.gmra.mxu0 %v129
  %v157 = vpop.f32.mrf.mxu0
  %v158 = vadd.f32 %v116, %v157
  %159 = vdwg.mxu0
  %v160 = vmax.f32 %v149, 0.0
  %v161 = vmax.f32 %v152, 0.0
  %v162 = vmax.f32 %v155, 0.0
  %v163 = vmax.f32 %v158, 0.0
  %vm164 = vcmask 254976
  %165 = vst.msk [vmem:[#allocation3] sm:$0x3] %vm164, 0.0
  %vm166 = vcmask 261120
  %167 = vst.msk [vmem:[#allocation3 + $0x2] sm:$0xff] %vm166, %v160
  %168 = vst.msk [vmem:[#allocation3 + $0xa] sm:$0xff] %vm166, %v161
  %169 = vst.msk [vmem:[#allocation3 + $0x12] sm:$0xff] %vm166, %v162
  %vm170 = vcmask 259072
  %171 = vst.msk [vmem:[#allocation3 + $0x1a] sm:$0x3f] %vm170, %v163
  %176 = vrot.lane.b32.xlu0 %v160, 32
  %v177 = vpop.permute.xlu0 %176
  %178 = vrot.lane.b32.xlu0 %v161, 32
  %v179 = vpop.permute.xlu0 %178
  %180 = vrot.lane.b32.xlu0 %v162, 32
  %v181 = vpop.permute.xlu0 %180
  %182 = vrot.lane.b32.xlu0 %v163, 32
  %v183 = vpop.permute.xlu0 %182
  %vm188 = vcmask 523520
  %189 = vst.msk [vmem:[#allocation3] sm:$0xff] %vm188, %v177
  %190 = vst.msk [vmem:[#allocation3 + $0x8] sm:$0xff] %vm188, %v179
  %191 = vst.msk [vmem:[#allocation3 + $0x10] sm:$0xff] %vm188, %v181
  %192 = vst.msk [vmem:[#allocation3 + $0x18] sm:$0xff] %vm188, %v183
  %193 = vrot.lane.b32.xlu0 %v160, 64
  %v194 = vpop.permute.xlu0 %193
  %195 = vrot.lane.b32.xlu0 %v161, 64
  %v196 = vpop.permute.xlu0 %195
  %197 = vrot.lane.b32.xlu0 %v162, 64
  %v198 = vpop.permute.xlu0 %197
  %199 = vrot.lane.b32.xlu0 %v163, 64
  %v200 = vpop.permute.xlu0 %199
  %vm205 = vcmask 785922
  %206 = vst.msk [vmem:[#allocation3 - $0x2] sm:$0xfc] %vm205, %v194
  %vm207 = vcmask 785920
  %208 = vst.msk [vmem:[#allocation3 + $0x6] sm:$0xff] %vm207, %v196
  %209 = vst.msk [vmem:[#allocation3 + $0xe] sm:$0xff] %vm207, %v198
  %210 = vst.msk [vmem:[#allocation3 + $0x16] sm:$0xff] %vm207, %v200
  %vm211 = vcmask 779776
  %212 = vst.msk [vmem:[#allocation3 + $0x1e] sm:$0x3] %vm211, 0.0
  %v213 = vld [vmem:[#allocation3] sm:$0xff]
  %v214 = vld [vmem:[#allocation3 + $0x8] sm:$0xff]
  %v215 = vld [vmem:[#allocation3 + $0x10] sm:$0xff]
  %v216 = vld [vmem:[#allocation3 + $0x18] sm:$0xff]
  %v217 = vld [vmem:[%s3] sm:$0xff]
  %v218 = vld [vmem:[%s3 + $0x8] sm:$0xff]
  %v219 = vld [vmem:[%s3 + $0x10] sm:$0xff]
  %v220 = vld [vmem:[%s3 + $0x18] sm:$0xff]
  %v221 = vld [vmem:[%s3 + $0x20] sm:$0xff]
  %v222 = vld [vmem:[%s3 + $0x28] sm:$0xff]
  %v223 = vld [vmem:[%s3 + $0x30] sm:$0xff]
  %v224 = vld [vmem:[%s3 + $0x38] sm:$0xff]
  %v225 = vld [vmem:[%s3 + $0x40] sm:$0xff]
  %v226 = vld [vmem:[%s3 + $0x48] sm:$0xff]
  %v227 = vld [vmem:[%s3 + $0x50] sm:$0xff]
  %v228 = vld [vmem:[%s3 + $0x58] sm:$0xff]
  %v229 = vld [vmem:[%s4] sm:$0x1]
  %v231 = vperm.slane %v229, 0
  %vm233 = vcmask 785408
  %v235 = vsel %vm233, %v213, 0
  %v238 = vsel %vm233, %v214, 0
  %v241 = vsel %vm233, %v215, 0
  %v244 = vsel %vm233, %v216, 0
  %246 = vmatpush.msra.mxu0 0.0
  %247 = vmatpush.msra.mxu0 0.0
  %248 = vmatpush.msra.mxu0 0.0
  %249 = vmatpush.msra.mxu0 0.0
  %250 = vmatpush.msra.mxu0 %v228
  %251 = vmatpush.msra.mxu0 %v227
  %252 = vmatpush.msra.mxu0 %v226
  %253 = vmatpush.msra.mxu0 %v225
  %254 = vmatpush.msra.mxu0 %v224
  %255 = vmatpush.msra.mxu0 %v223
  %256 = vmatpush.msra.mxu0 %v222
  %257 = vmatpush.msra.mxu0 %v221
  %258 = vmatpush.msra.mxu0 %v220
  %259 = vmatpush.msra.mxu0 %v219
  %260 = vmatpush.msra.mxu0 %v218
  %261 = vmatpush.msra.mxu0 %v217
  %262 = vmatmul.f32.gmra.mxu0 %v235
  %v263 = vpop.f32.mrf.mxu0
  %v264 = vadd.f32 %v231, %v263
  %265 = vmatmul.f32.gmra.mxu0 %v238
  %v266 = vpop.f32.mrf.mxu0
  %v267 = vadd.f32 %v231, %v266
  %268 = vmatmul.f32.gmra.mxu0 %v241
  %v269 = vpop.f32.mrf.mxu0
  %v270 = vadd.f32 %v231, %v269
  %271 = vmatmul.f32.gmra.mxu0 %v244
  %v272 = vpop.f32.mrf.mxu0
  %v273 = vadd.f32 %v231, %v272
  %274 = vdwg.mxu0
  %v275 = vmax.f32 %v264, 0.0
  %v276 = vmax.f32 %v267, 0.0
  %v277 = vmax.f32 %v270, 0.0
  %v278 = vmax.f32 %v273, 0.0
  %279 = vst [vmem:[%s14] sm:$0xff] 0.0
  %280 = vst [vmem:[%s14 + $0x8] sm:$0xff] 0.0
  %281 = vst [vmem:[%s14 + $0x10] sm:$0xff] 0.0
  %282 = vst [vmem:[%s14 + $0x18] sm:$0xff] 0.0
  %287 = vrot.lane.b32.xlu0 %v275, 32
  %v288 = vpop.permute.xlu0 %287
  %289 = vrot.lane.b32.xlu0 %v276, 32
  %v290 = vpop.permute.xlu0 %289
  %291 = vrot.lane.b32.xlu0 %v277, 32
  %v292 = vpop.permute.xlu0 %291
  %293 = vrot.lane.b32.xlu0 %v278, 32
  %v294 = vpop.permute.xlu0 %293
  %299 = vst.msk [vmem:[%s14] sm:$0xff] %vm188, %v288
  %300 = vst.msk [vmem:[%s14 + $0x8] sm:$0xff] %vm188, %v290
  %301 = vst.msk [vmem:[%s14 + $0x10] sm:$0xff] %vm188, %v292
  %302 = vst.msk [vmem:[%s14 + $0x18] sm:$0xff] %vm188, %v294
  %v303 = vld [vmem:[%s6] sm:$0xff]
  %v304 = vld [vmem:[%s6 + $0x8] sm:$0xff]
  %v305 = vld [vmem:[%s6 + $0x10] sm:$0xff]
  %v306 = vld [vmem:[%s6 + $0x18] sm:$0xff]
  %v307 = vld [vmem:[%s8] sm:$0xff]
  %v308 = vld [vmem:[%s8 + $0x8] sm:$0xff]
  %v309 = vld [vmem:[%s8 + $0x10] sm:$0xff]
  %v310 = vld [vmem:[%s8 + $0x18] sm:$0xff]
  %v311 = vld [vmem:[%s10] sm:$0x1]
  %v312 = vld [vmem:[%s5] sm:$0xff]
  %v313 = vld [vmem:[%s5 + $0x8] sm:$0xff]
  %v314 = vld [vmem:[%s5 + $0x10] sm:$0xff]
  %v315 = vld [vmem:[%s5 + $0x18] sm:$0xff]
  %v316 = vld [vmem:[%s7] sm:$0x1]
  %v318 = vperm.slane %v316, 0
  %v320 = vsel %vm166, %v275, 0
  %v322 = vsel %vm166, %v276, 0
  %v324 = vsel %vm166, %v277, 0
  %v326 = vsel %vm166, %v278, 0
  %328 = vmatpush.msra.mxu0 0.0
  %329 = vmatpush.msra.mxu0 0.0
  %330 = vmatpush.msra.mxu0 0.0
  %331 = vmatpush.msra.mxu0 0.0
  %332 = vmatpush.msra.mxu0 0.0
  %333 = vmatpush.msra.mxu0 0.0
  %334 = vmatpush.msra.mxu0 0.0
  %335 = vmatpush.msra.mxu0 0.0
  %336 = vmatpush.msra.mxu0 0.0
  %337 = vmatpush.msra.mxu0 0.0
  %338 = vmatpush.msra.mxu0 0.0
  %339 = vmatpush.msra.mxu0 0.0
  %340 = vmatpush.msra.mxu0 %v315
  %341 = vmatpush.msra.mxu0 %v314
  %342 = vmatpush.msra.mxu0 %v313
  %343 = vmatpush.msra.mxu0 %v312
  %344 = vmatmul.f32.gmra.mxu0 %v320
  %v345 = vpop.f32.mrf.mxu0
  %v346 = vadd.f32 %v318, %v345
  %347 = vmatmul.f32.gmra.mxu0 %v322
  %v348 = vpop.f32.mrf.mxu0
  %v349 = vadd.f32 %v318, %v348
  %350 = vmatmul.f32.gmra.mxu0 %v324
  %v351 = vpop.f32.mrf.mxu0
  %v352 = vadd.f32 %v318, %v351
  %353 = vmatmul.f32.gmra.mxu0 %v326
  %v354 = vpop.f32.mrf.mxu0
  %v355 = vadd.f32 %v318, %v354
  %356 = vdwg.mxu0
  %v357 = vld [vmem:[%s13] sm:$0x3]
  %s358 = scalar_lea.vmem %s13, 2
  %v359 = vld [vmem:[%s358] sm:$0x3]
  %v361 = vsel %vm166, %v357, 0
  %363 = vmatpush.msra.mxu0 0.0
  %364 = vmatpush.msra.mxu0 0.0
  %365 = vmatpush.msra.mxu0 0.0
  %366 = vmatpush.msra.mxu0 0.0
  %367 = vmatpush.msra.mxu0 0.0
  %368 = vmatpush.msra.mxu0 0.0
  %369 = vmatpush.msra.mxu0 0.0
  %370 = vmatpush.msra.mxu0 0.0
  %371 = vmatpush.msra.mxu0 0.0
  %372 = vmatpush.msra.mxu0 0.0
  %373 = vmatpush.msra.mxu0 0.0
  %374 = vmatpush.msra.mxu0 0.0
  %375 = vmatpush.msra.mxu0 %v306
  %376 = vmatpush.msra.mxu0 %v305
  %377 = vmatpush.msra.mxu0 %v304
  %378 = vmatpush.msra.mxu0 %v303
  %379 = vmatmul.f32.gmra.mxu0 %v361
  %v380 = vpop.f32.mrf.mxu0
  %v381 = vadd.f32 0.0, %v380
  %382 = vdwg.mxu0
  %v383 = vadd.f32 %v346, %v381
  %v384 = vxor.u32 %v383, 2147483648
  %v385 = vmul.f32 %v384, 1.442695
  %v386 = vpow.pop %v385
  %v387 = vadd.f32 %v386, 1.0
  %v388 = vrcp.pop %v387
  %v389 = vmul.f32 %v387, %v388
  %v390 = vsub.f32 1.0, %v389
  %v391 = vmul.f32 %v388, %v390
  %v392 = vadd.f32 %v388, %v391
  %vm393 = vweird.f32 %v387
  %vm394 = vweird.f32 %v388
  %vm395 = vmor %vm393, %vm394
  %v396 = vsel %vm395, %v388, %v392
  %v397 = vand.u32 2147483647, %v387
  %vm398 = vcmp.eq.f32.partialorder %v397, 8.507059e+37
  %v399 = vand.u32 %v387, 2147483648
  %v400 = vor.u32 1.1754944e-38, %v399
  %v401 = vsel %vm398, %v400, %v396
  %v402 = vmul.f32 1.0, %v401
  %v403 = vtanh.pop %v383
  %405 = vrot.lane.b32.xlu0 %v359, 32
  %v406 = vpop.permute.xlu0 %405
  %v408 = vmul.f32 %v402, %v406
  %410 = vrot.lane.b32.xlu0 %v403, 64
  %v411 = vpop.permute.xlu0 %410
  %v413 = vmul.f32 %v402, %v411
  %415 = vrot.lane.b32.xlu0 %v413, 32
  %v416 = vpop.permute.xlu0 %415
  %v418 = vadd.f32 %v408, %v416
  %v419 = vtanh.pop %v418
  %421 = vrot.lane.b32.xlu0 %v419, 64
  %v422 = vpop.permute.xlu0 %421
  %v424 = vmul.f32 %v402, %v422
  %v426 = vperm.slane %v311, 0
  %429 = vrot.lane.b32.xlu0 %v424, 32
  %v430 = vpop.permute.xlu0 %429
  %v431 = vsel %vm166, %v430, 0
  %433 = vmatpush.msra.mxu0 0.0
  %434 = vmatpush.msra.mxu0 0.0
  %435 = vmatpush.msra.mxu0 0.0
  %436 = vmatpush.msra.mxu0 0.0
  %437 = vmatpush.msra.mxu0 0.0
  %438 = vmatpush.msra.mxu0 0.0
  %439 = vmatpush.msra.mxu0 0.0
  %440 = vmatpush.msra.mxu0 0.0
  %441 = vmatpush.msra.mxu0 0.0
  %442 = vmatpush.msra.mxu0 0.0
  %443 = vmatpush.msra.mxu0 0.0
  %444 = vmatpush.msra.mxu0 0.0
  %445 = vmatpush.msra.mxu0 %v310
  %446 = vmatpush.msra.mxu0 %v309
  %447 = vmatpush.msra.mxu0 %v308
  %448 = vmatpush.msra.mxu0 %v307
  %449 = vmatmul.f32.gmra.mxu0 %v431
  %v450 = vpop.f32.mrf.mxu0
  %v451 = vadd.f32 %v426, %v450
  %452 = vdwg.mxu0
  %453 = vmatpush.msra.mxu0 0.0
  %454 = vmatpush.msra.mxu0 0.0
  %455 = vmatpush.msra.mxu0 0.0
  %456 = vmatpush.msra.mxu0 0.0
  %457 = vmatpush.msra.mxu0 0.0
  %458 = vmatpush.msra.mxu0 0.0
  %459 = vmatpush.msra.mxu0 0.0
  %460 = vmatpush.msra.mxu0 0.0
  %461 = vmatpush.msra.mxu0 0.0
  %462 = vmatpush.msra.mxu0 0.0
  %463 = vmatpush.msra.mxu0 0.0
  %464 = vmatpush.msra.mxu0 0.0
  %465 = vmatpush.msra.mxu0 %v306
  %466 = vmatpush.msra.mxu0 %v305
  %467 = vmatpush.msra.mxu0 %v304
  %468 = vmatpush.msra.mxu0 %v303
  %469 = vmatmul.f32.gmra.mxu0 %v431
  %v470 = vpop.f32.mrf.mxu0
  %v471 = vadd.f32 0.0, %v470
  %472 = vdwg.mxu0
  %v474 = vrot.slane %v471, 6
  %v476 = vadd.f32 %v346, %v474
  %v477 = vxor.u32 %v476, 2147483648
  %v478 = vmul.f32 %v477, 1.442695
  %v479 = vpow.pop %v478
  %v480 = vadd.f32 %v479, 1.0
  %v481 = vrcp.pop %v480
  %v482 = vmul.f32 %v480, %v481
  %v483 = vsub.f32 1.0, %v482
  %v484 = vmul.f32 %v481, %v483
  %v485 = vadd.f32 %v481, %v484
  %vm486 = vweird.f32 %v480
  %vm487 = vweird.f32 %v481
  %vm488 = vmor %vm486, %vm487
  %v489 = vsel %vm488, %v481, %v485
  %v490 = vand.u32 2147483647, %v480
  %vm491 = vcmp.eq.f32.partialorder %v490, 8.507059e+37
  %v492 = vand.u32 %v480, 2147483648
  %v493 = vor.u32 1.1754944e-38, %v492
  %v494 = vsel %vm491, %v493, %v489
  %v495 = vmul.f32 1.0, %v494
  %v496 = vtanh.pop %v476
  %v498 = vrot.slane %v418, 6
  %v500 = vmul.f32 %v495, %v498
  %502 = vrot.lane.b32.xlu0 %v496, 64
  %v503 = vpop.permute.xlu0 %502
  %v505 = vmul.f32 %v495, %v503
  %507 = vrot.lane.b32.xlu0 %v505, 32
  %v508 = vpop.permute.xlu0 %507
  %v510 = vadd.f32 %v500, %v508
  %v511 = vtanh.pop %v510
  %513 = vrot.lane.b32.xlu0 %v511, 64
  %v514 = vpop.permute.xlu0 %513
  %v516 = vmul.f32 %v495, %v514
  %v518 = vrot.slane %v516, 2
  %519 = vrot.lane.b32.xlu0 %v518, 32
  %v520 = vpop.permute.xlu0 %519
  %v521 = vsel %vm166, %v520, 0
  %523 = vmatpush.msra.mxu0 0.0
  %524 = vmatpush.msra.mxu0 0.0
  %525 = vmatpush.msra.mxu0 0.0
  %526 = vmatpush.msra.mxu0 0.0
  %527 = vmatpush.msra.mxu0 0.0
  %528 = vmatpush.msra.mxu0 0.0
  %529 = vmatpush.msra.mxu0 0.0
  %530 = vmatpush.msra.mxu0 0.0
  %531 = vmatpush.msra.mxu0 0.0
  %532 = vmatpush.msra.mxu0 0.0
  %533 = vmatpush.msra.mxu0 0.0
  %534 = vmatpush.msra.mxu0 0.0
  %535 = vmatpush.msra.mxu0 %v310
  %536 = vmatpush.msra.mxu0 %v309
  %537 = vmatpush.msra.mxu0 %v308
  %538 = vmatpush.msra.mxu0 %v307
  %539 = vmatmul.f32.gmra.mxu0 %v521
  %v540 = vpop.f32.mrf.mxu0
  %v541 = vadd.f32 %v426, %v540
  %542 = vdwg.mxu0
  %543 = vmatpush.msra.mxu0 0.0
  %544 = vmatpush.msra.mxu0 0.0
  %545 = vmatpush.msra.mxu0 0.0
  %546 = vmatpush.msra.mxu0 0.0
  %547 = vmatpush.msra.mxu0 0.0
  %548 = vmatpush.msra.mxu0 0.0
  %549 = vmatpush.msra.mxu0 0.0
  %550 = vmatpush.msra.mxu0 0.0
  %551 = vmatpush.msra.mxu0 0.0
  %552 = vmatpush.msra.mxu0 0.0
  %553 = vmatpush.msra.mxu0 0.0
  %554 = vmatpush.msra.mxu0 0.0
  %555 = vmatpush.msra.mxu0 %v306
  %556 = vmatpush.msra.mxu0 %v305
  %557 = vmatpush.msra.mxu0 %v304
  %558 = vmatpush.msra.mxu0 %v303
  %559 = vmatmul.f32.gmra.mxu0 %v521
  %v560 = vpop.f32.mrf.mxu0
  %v561 = vadd.f32 0.0, %v560
  %562 = vdwg.mxu0
  %v564 = vrot.slane %v561, 4
  %v566 = vadd.f32 %v346, %v564
  %v567 = vxor.u32 %v566, 2147483648
  %v568 = vmul.f32 %v567, 1.442695
  %v569 = vpow.pop %v568
  %v570 = vadd.f32 %v569, 1.0
  %v571 = vrcp.pop %v570
  %v572 = vmul.f32 %v570, %v571
  %v573 = vsub.f32 1.0, %v572
  %v574 = vmul.f32 %v571, %v573
  %v575 = vadd.f32 %v571, %v574
  %vm576 = vweird.f32 %v570
  %vm577 = vweird.f32 %v571
  %vm578 = vmor %vm576, %vm577
  %v579 = vsel %vm578, %v571, %v575
  %v580 = vand.u32 2147483647, %v570
  %vm581 = vcmp.eq.f32.partialorder %v580, 8.507059e+37
  %v582 = vand.u32 %v570, 2147483648
  %v583 = vor.u32 1.1754944e-38, %v582
  %v584 = vsel %vm581, %v583, %v579
  %v585 = vmul.f32 1.0, %v584
  %v586 = vtanh.pop %v566
  %v588 = vrot.slane %v510, 6
  %v590 = vmul.f32 %v585, %v588
  %592 = vrot.lane.b32.xlu0 %v586, 64
  %v593 = vpop.permute.xlu0 %592
  %v595 = vmul.f32 %v585, %v593
  %597 = vrot.lane.b32.xlu0 %v595, 32
  %v598 = vpop.permute.xlu0 %597
  %v600 = vadd.f32 %v590, %v598
  %v601 = vtanh.pop %v600
  %603 = vrot.lane.b32.xlu0 %v601, 64
  %v604 = vpop.permute.xlu0 %603
  %v606 = vmul.f32 %v585, %v604
  %v608 = vrot.slane %v606, 4
  %609 = vrot.lane.b32.xlu0 %v608, 32
  %v610 = vpop.permute.xlu0 %609
  %v611 = vsel %vm166, %v610, 0
  %613 = vmatpush.msra.mxu0 0.0
  %614 = vmatpush.msra.mxu0 0.0
  %615 = vmatpush.msra.mxu0 0.0
  %616 = vmatpush.msra.mxu0 0.0
  %617 = vmatpush.msra.mxu0 0.0
  %618 = vmatpush.msra.mxu0 0.0
  %619 = vmatpush.msra.mxu0 0.0
  %620 = vmatpush.msra.mxu0 0.0
  %621 = vmatpush.msra.mxu0 0.0
  %622 = vmatpush.msra.mxu0 0.0
  %623 = vmatpush.msra.mxu0 0.0
  %624 = vmatpush.msra.mxu0 0.0
  %625 = vmatpush.msra.mxu0 %v310
  %626 = vmatpush.msra.mxu0 %v309
  %627 = vmatpush.msra.mxu0 %v308
  %628 = vmatpush.msra.mxu0 %v307
  %629 = vmatmul.f32.gmra.mxu0 %v611
  %v630 = vpop.f32.mrf.mxu0
  %v631 = vadd.f32 %v426, %v630
  %632 = vdwg.mxu0
  %633 = vmatpush.msra.mxu0 0.0
  %634 = vmatpush.msra.mxu0 0.0
  %635 = vmatpush.msra.mxu0 0.0
  %636 = vmatpush.msra.mxu0 0.0
  %637 = vmatpush.msra.mxu0 0.0
  %638 = vmatpush.msra.mxu0 0.0
  %639 = vmatpush.msra.mxu0 0.0
  %640 = vmatpush.msra.mxu0 0.0
  %641 = vmatpush.msra.mxu0 0.0
  %642 = vmatpush.msra.mxu0 0.0
  %643 = vmatpush.msra.mxu0 0.0
  %644 = vmatpush.msra.mxu0 0.0
  %645 = vmatpush.msra.mxu0 %v306
  %646 = vmatpush.msra.mxu0 %v305
  %647 = vmatpush.msra.mxu0 %v304
  %648 = vmatpush.msra.mxu0 %v303
  %649 = vmatmul.f32.gmra.mxu0 %v611
  %v650 = vpop.f32.mrf.mxu0
  %v651 = vadd.f32 0.0, %v650
  %652 = vdwg.mxu0
  %v654 = vrot.slane %v651, 2
  %v656 = vadd.f32 %v346, %v654
  %v657 = vxor.u32 %v656, 2147483648
  %v658 = vmul.f32 %v657, 1.442695
  %v659 = vpow.pop %v658
  %v660 = vadd.f32 %v659, 1.0
  %v661 = vrcp.pop %v660
  %v662 = vmul.f32 %v660, %v661
  %v663 = vsub.f32 1.0, %v662
  %v664 = vmul.f32 %v661, %v663
  %v665 = vadd.f32 %v661, %v664
  %vm666 = vweird.f32 %v660
  %vm667 = vweird.f32 %v661
  %vm668 = vmor %vm666, %vm667
  %v669 = vsel %vm668, %v661, %v665
  %v670 = vand.u32 2147483647, %v660
  %vm671 = vcmp.eq.f32.partialorder %v670, 8.507059e+37
  %v672 = vand.u32 %v660, 2147483648
  %v673 = vor.u32 1.1754944e-38, %v672
  %v674 = vsel %vm671, %v673, %v669
  %v675 = vmul.f32 1.0, %v674
  %v676 = vtanh.pop %v656
  %v678 = vrot.slane %v600, 6
  %v680 = vmul.f32 %v675, %v678
  %682 = vrot.lane.b32.xlu0 %v676, 64
  %v683 = vpop.permute.xlu0 %682
  %v685 = vmul.f32 %v675, %v683
  %687 = vrot.lane.b32.xlu0 %v685, 32
  %v688 = vpop.permute.xlu0 %687
  %v690 = vadd.f32 %v680, %v688
  %v691 = vtanh.pop %v690
  %693 = vrot.lane.b32.xlu0 %v691, 64
  %v694 = vpop.permute.xlu0 %693
  %v696 = vmul.f32 %v675, %v694
  %v698 = vrot.slane %v696, 6
  %699 = vrot.lane.b32.xlu0 %v698, 32
  %v700 = vpop.permute.xlu0 %699
  %v701 = vsel %vm166, %v700, 0
  %703 = vmatpush.msra.mxu0 0.0
  %704 = vmatpush.msra.mxu0 0.0
  %705 = vmatpush.msra.mxu0 0.0
  %706 = vmatpush.msra.mxu0 0.0
  %707 = vmatpush.msra.mxu0 0.0
  %708 = vmatpush.msra.mxu0 0.0
  %709 = vmatpush.msra.mxu0 0.0
  %710 = vmatpush.msra.mxu0 0.0
  %711 = vmatpush.msra.mxu0 0.0
  %712 = vmatpush.msra.mxu0 0.0
  %713 = vmatpush.msra.mxu0 0.0
  %714 = vmatpush.msra.mxu0 0.0
  %715 = vmatpush.msra.mxu0 %v310
  %716 = vmatpush.msra.mxu0 %v309
  %717 = vmatpush.msra.mxu0 %v308
  %718 = vmatpush.msra.mxu0 %v307
  %719 = vmatmul.f32.gmra.mxu0 %v701
  %v720 = vpop.f32.mrf.mxu0
  %v721 = vadd.f32 %v426, %v720
  %722 = vdwg.mxu0
  %723 = vmatpush.msra.mxu0 0.0
  %724 = vmatpush.msra.mxu0 0.0
  %725 = vmatpush.msra.mxu0 0.0
  %726 = vmatpush.msra.mxu0 0.0
  %727 = vmatpush.msra.mxu0 0.0
  %728 = vmatpush.msra.mxu0 0.0
  %729 = vmatpush.msra.mxu0 0.0
  %730 = vmatpush.msra.mxu0 0.0
  %731 = vmatpush.msra.mxu0 0.0
  %732 = vmatpush.msra.mxu0 0.0
  %733 = vmatpush.msra.mxu0 0.0
  %734 = vmatpush.msra.mxu0 0.0
  %735 = vmatpush.msra.mxu0 %v306
  %736 = vmatpush.msra.mxu0 %v305
  %737 = vmatpush.msra.mxu0 %v304
  %738 = vmatpush.msra.mxu0 %v303
  %739 = vmatmul.f32.gmra.mxu0 %v701
  %v740 = vpop.f32.mrf.mxu0
  %v741 = vadd.f32 0.0, %v740
  %742 = vdwg.mxu0
  %v743 = vadd.f32 %v349, %v741
  %v744 = vxor.u32 %v743, 2147483648
  %v745 = vmul.f32 %v744, 1.442695
  %v746 = vpow.pop %v745
  %v747 = vadd.f32 %v746, 1.0
  %v748 = vrcp.pop %v747
  %v749 = vmul.f32 %v747, %v748
  %v750 = vsub.f32 1.0, %v749
  %v751 = vmul.f32 %v748, %v750
  %v752 = vadd.f32 %v748, %v751
  %vm753 = vweird.f32 %v747
  %vm754 = vweird.f32 %v748
  %vm755 = vmor %vm753, %vm754
  %v756 = vsel %vm755, %v748, %v752
  %v757 = vand.u32 2147483647, %v747
  %vm758 = vcmp.eq.f32.partialorder %v757, 8.507059e+37
  %v759 = vand.u32 %v747, 2147483648
  %v760 = vor.u32 1.1754944e-38, %v759
  %v761 = vsel %vm758, %v760, %v756
  %v762 = vmul.f32 1.0, %v761
  %v763 = vtanh.pop %v743
  %v765 = vrot.slane %v690, 6
  %v767 = vmul.f32 %v762, %v765
  %769 = vrot.lane.b32.xlu0 %v763, 64
  %v770 = vpop.permute.xlu0 %769
  %v772 = vmul.f32 %v762, %v770
  %774 = vrot.lane.b32.xlu0 %v772, 32
  %v775 = vpop.permute.xlu0 %774
  %v777 = vadd.f32 %v767, %v775
  %v778 = vtanh.pop %v777
  %780 = vrot.lane.b32.xlu0 %v778, 64
  %v781 = vpop.permute.xlu0 %780
  %v783 = vmul.f32 %v762, %v781
  %785 = vrot.lane.b32.xlu0 %v783, 32
  %v786 = vpop.permute.xlu0 %785
  %v787 = vsel %vm166, %v786, 0
  %789 = vmatpush.msra.mxu0 0.0
  %790 = vmatpush.msra.mxu0 0.0
  %791 = vmatpush.msra.mxu0 0.0
  %792 = vmatpush.msra.mxu0 0.0
  %793 = vmatpush.msra.mxu0 0.0
  %794 = vmatpush.msra.mxu0 0.0
  %795 = vmatpush.msra.mxu0 0.0
  %796 = vmatpush.msra.mxu0 0.0
  %797 = vmatpush.msra.mxu0 0.0
  %798 = vmatpush.msra.mxu0 0.0
  %799 = vmatpush.msra.mxu0 0.0
  %800 = vmatpush.msra.mxu0 0.0
  %801 = vmatpush.msra.mxu0 %v310
  %802 = vmatpush.msra.mxu0 %v309
  %803 = vmatpush.msra.mxu0 %v308
  %804 = vmatpush.msra.mxu0 %v307
  %805 = vmatmul.f32.gmra.mxu0 %v787
  %v806 = vpop.f32.mrf.mxu0
  %v807 = vadd.f32 %v426, %v806
  %808 = vdwg.mxu0
  %809 = vmatpush.msra.mxu0 0.0
  %810 = vmatpush.msra.mxu0 0.0
  %811 = vmatpush.msra.mxu0 0.0
  %812 = vmatpush.msra.mxu0 0.0
  %813 = vmatpush.msra.mxu0 0.0
  %814 = vmatpush.msra.mxu0 0.0
  %815 = vmatpush.msra.mxu0 0.0
  %816 = vmatpush.msra.mxu0 0.0
  %817 = vmatpush.msra.mxu0 0.0
  %818 = vmatpush.msra.mxu0 0.0
  %819 = vmatpush.msra.mxu0 0.0
  %820 = vmatpush.msra.mxu0 0.0
  %821 = vmatpush.msra.mxu0 %v306
  %822 = vmatpush.msra.mxu0 %v305
  %823 = vmatpush.msra.mxu0 %v304
  %824 = vmatpush.msra.mxu0 %v303
  %825 = vmatmul.f32.gmra.mxu0 %v787
  %v826 = vpop.f32.mrf.mxu0
  %v827 = vadd.f32 0.0, %v826
  %828 = vdwg.mxu0
  %v830 = vrot.slane %v827, 6
  %v832 = vadd.f32 %v349, %v830
  %v833 = vxor.u32 %v832, 2147483648
  %v834 = vmul.f32 %v833, 1.442695
  %v835 = vpow.pop %v834
  %v836 = vadd.f32 %v835, 1.0
  %v837 = vrcp.pop %v836
  %v838 = vmul.f32 %v836, %v837
  %v839 = vsub.f32 1.0, %v838
  %v840 = vmul.f32 %v837, %v839
  %v841 = vadd.f32 %v837, %v840
  %vm842 = vweird.f32 %v836
  %vm843 = vweird.f32 %v837
  %vm844 = vmor %vm842, %vm843
  %v845 = vsel %vm844, %v837, %v841
  %v846 = vand.u32 2147483647, %v836
  %vm847 = vcmp.eq.f32.partialorder %v846, 8.507059e+37
  %v848 = vand.u32 %v836, 2147483648
  %v849 = vor.u32 1.1754944e-38, %v848
  %v850 = vsel %vm847, %v849, %v845
  %v851 = vmul.f32 1.0, %v850
  %v852 = vtanh.pop %v832
  %v854 = vrot.slane %v777, 6
  %v856 = vmul.f32 %v851, %v854
  %858 = vrot.lane.b32.xlu0 %v852, 64
  %v859 = vpop.permute.xlu0 %858
  %v861 = vmul.f32 %v851, %v859
  %863 = vrot.lane.b32.xlu0 %v861, 32
  %v864 = vpop.permute.xlu0 %863
  %v866 = vadd.f32 %v856, %v864
  %v867 = vtanh.pop %v866
  %869 = vrot.lane.b32.xlu0 %v867, 64
  %v870 = vpop.permute.xlu0 %869
  %v872 = vmul.f32 %v851, %v870
  %v874 = vrot.slane %v872, 2
  %875 = vrot.lane.b32.xlu0 %v874, 32
  %v876 = vpop.permute.xlu0 %875
  %v877 = vsel %vm166, %v876, 0
  %879 = vmatpush.msra.mxu0 0.0
  %880 = vmatpush.msra.mxu0 0.0
  %881 = vmatpush.msra.mxu0 0.0
  %882 = vmatpush.msra.mxu0 0.0
  %883 = vmatpush.msra.mxu0 0.0
  %884 = vmatpush.msra.mxu0 0.0
  %885 = vmatpush.msra.mxu0 0.0
  %886 = vmatpush.msra.mxu0 0.0
  %887 = vmatpush.msra.mxu0 0.0
  %888 = vmatpush.msra.mxu0 0.0
  %889 = vmatpush.msra.mxu0 0.0
  %890 = vmatpush.msra.mxu0 0.0
  %891 = vmatpush.msra.mxu0 %v310
  %892 = vmatpush.msra.mxu0 %v309
  %893 = vmatpush.msra.mxu0 %v308
  %894 = vmatpush.msra.mxu0 %v307
  %895 = vmatmul.f32.gmra.mxu0 %v877
  %v896 = vpop.f32.mrf.mxu0
  %v897 = vadd.f32 %v426, %v896
  %898 = vdwg.mxu0
  %899 = vmatpush.msra.mxu0 0.0
  %900 = vmatpush.msra.mxu0 0.0
  %901 = vmatpush.msra.mxu0 0.0
  %902 = vmatpush.msra.mxu0 0.0
  %903 = vmatpush.msra.mxu0 0.0
  %904 = vmatpush.msra.mxu0 0.0
  %905 = vmatpush.msra.mxu0 0.0
  %906 = vmatpush.msra.mxu0 0.0
  %907 = vmatpush.msra.mxu0 0.0
  %908 = vmatpush.msra.mxu0 0.0
  %909 = vmatpush.msra.mxu0 0.0
  %910 = vmatpush.msra.mxu0 0.0
  %911 = vmatpush.msra.mxu0 %v306
  %912 = vmatpush.msra.mxu0 %v305
  %913 = vmatpush.msra.mxu0 %v304
  %914 = vmatpush.msra.mxu0 %v303
  %915 = vmatmul.f32.gmra.mxu0 %v877
  %v916 = vpop.f32.mrf.mxu0
  %v917 = vadd.f32 0.0, %v916
  %918 = vdwg.mxu0
  %v920 = vrot.slane %v917, 4
  %v922 = vadd.f32 %v349, %v920
  %v923 = vxor.u32 %v922, 2147483648
  %v924 = vmul.f32 %v923, 1.442695
  %v925 = vpow.pop %v924
  %v926 = vadd.f32 %v925, 1.0
  %v927 = vrcp.pop %v926
  %v928 = vmul.f32 %v926, %v927
  %v929 = vsub.f32 1.0, %v928
  %v930 = vmul.f32 %v927, %v929
  %v931 = vadd.f32 %v927, %v930
  %vm932 = vweird.f32 %v926
  %vm933 = vweird.f32 %v927
  %vm934 = vmor %vm932, %vm933
  %v935 = vsel %vm934, %v927, %v931
  %v936 = vand.u32 2147483647, %v926
  %vm937 = vcmp.eq.f32.partialorder %v936, 8.507059e+37
  %v938 = vand.u32 %v926, 2147483648
  %v939 = vor.u32 1.1754944e-38, %v938
  %v940 = vsel %vm937, %v939, %v935
  %v941 = vmul.f32 1.0, %v940
  %v942 = vtanh.pop %v922
  %v944 = vrot.slane %v866, 6
  %v946 = vmul.f32 %v941, %v944
  %948 = vrot.lane.b32.xlu0 %v942, 64
  %v949 = vpop.permute.xlu0 %948
  %v951 = vmul.f32 %v941, %v949
  %953 = vrot.lane.b32.xlu0 %v951, 32
  %v954 = vpop.permute.xlu0 %953
  %v956 = vadd.f32 %v946, %v954
  %v957 = vtanh.pop %v956
  %959 = vrot.lane.b32.xlu0 %v957, 64
  %v960 = vpop.permute.xlu0 %959
  %v962 = vmul.f32 %v941, %v960
  %v964 = vrot.slane %v962, 4
  %965 = vrot.lane.b32.xlu0 %v964, 32
  %v966 = vpop.permute.xlu0 %965
  %v967 = vsel %vm166, %v966, 0
  %969 = vmatpush.msra.mxu0 0.0
  %970 = vmatpush.msra.mxu0 0.0
  %971 = vmatpush.msra.mxu0 0.0
  %972 = vmatpush.msra.mxu0 0.0
  %973 = vmatpush.msra.mxu0 0.0
  %974 = vmatpush.msra.mxu0 0.0
  %975 = vmatpush.msra.mxu0 0.0
  %976 = vmatpush.msra.mxu0 0.0
  %977 = vmatpush.msra.mxu0 0.0
  %978 = vmatpush.msra.mxu0 0.0
  %979 = vmatpush.msra.mxu0 0.0
  %980 = vmatpush.msra.mxu0 0.0
  %981 = vmatpush.msra.mxu0 %v310
  %982 = vmatpush.msra.mxu0 %v309
  %983 = vmatpush.msra.mxu0 %v308
  %984 = vmatpush.msra.mxu0 %v307
  %985 = vmatmul.f32.gmra.mxu0 %v967
  %v986 = vpop.f32.mrf.mxu0
  %v987 = vadd.f32 %v426, %v986
  %988 = vdwg.mxu0
  %989 = vmatpush.msra.mxu0 0.0
  %990 = vmatpush.msra.mxu0 0.0
  %991 = vmatpush.msra.mxu0 0.0
  %992 = vmatpush.msra.mxu0 0.0
  %993 = vmatpush.msra.mxu0 0.0
  %994 = vmatpush.msra.mxu0 0.0
  %995 = vmatpush.msra.mxu0 0.0
  %996 = vmatpush.msra.mxu0 0.0
  %997 = vmatpush.msra.mxu0 0.0
  %998 = vmatpush.msra.mxu0 0.0
  %999 = vmatpush.msra.mxu0 0.0
  %1000 = vmatpush.msra.mxu0 0.0
  %1001 = vmatpush.msra.mxu0 %v306
  %1002 = vmatpush.msra.mxu0 %v305
  %1003 = vmatpush.msra.mxu0 %v304
  %1004 = vmatpush.msra.mxu0 %v303
  %1005 = vmatmul.f32.gmra.mxu0 %v967
  %v1006 = vpop.f32.mrf.mxu0
  %v1007 = vadd.f32 0.0, %v1006
  %1008 = vdwg.mxu0
  %v1010 = vrot.slane %v1007, 2
  %v1012 = vadd.f32 %v349, %v1010
  %v1013 = vxor.u32 %v1012, 2147483648
  %v1014 = vmul.f32 %v1013, 1.442695
  %v1015 = vpow.pop %v1014
  %v1016 = vadd.f32 %v1015, 1.0
  %v1017 = vrcp.pop %v1016
  %v1018 = vmul.f32 %v1016, %v1017
  %v1019 = vsub.f32 1.0, %v1018
  %v1020 = vmul.f32 %v1017, %v1019
  %v1021 = vadd.f32 %v1017, %v1020
  %vm1022 = vweird.f32 %v1016
  %vm1023 = vweird.f32 %v1017
  %vm1024 = vmor %vm1022, %vm1023
  %v1025 = vsel %vm1024, %v1017, %v1021
  %v1026 = vand.u32 2147483647, %v1016
  %vm1027 = vcmp.eq.f32.partialorder %v1026, 8.507059e+37
  %v1028 = vand.u32 %v1016, 2147483648
  %v1029 = vor.u32 1.1754944e-38, %v1028
  %v1030 = vsel %vm1027, %v1029, %v1025
  %v1031 = vmul.f32 1.0, %v1030
  %v1032 = vtanh.pop %v1012
  %v1034 = vrot.slane %v956, 6
  %v1036 = vmul.f32 %v1031, %v1034
  %1038 = vrot.lane.b32.xlu0 %v1032, 64
  %v1039 = vpop.permute.xlu0 %1038
  %v1041 = vmul.f32 %v1031, %v1039
  %1043 = vrot.lane.b32.xlu0 %v1041, 32
  %v1044 = vpop.permute.xlu0 %1043
  %v1046 = vadd.f32 %v1036, %v1044
  %v1047 = vtanh.pop %v1046
  %1049 = vrot.lane.b32.xlu0 %v1047, 64
  %v1050 = vpop.permute.xlu0 %1049
  %v1052 = vmul.f32 %v1031, %v1050
  %v1054 = vrot.slane %v1052, 6
  %1055 = vrot.lane.b32.xlu0 %v1054, 32
  %v1056 = vpop.permute.xlu0 %1055
  %v1057 = vsel %vm166, %v1056, 0
  %1059 = vmatpush.msra.mxu0 0.0
  %1060 = vmatpush.msra.mxu0 0.0
  %1061 = vmatpush.msra.mxu0 0.0
  %1062 = vmatpush.msra.mxu0 0.0
  %1063 = vmatpush.msra.mxu0 0.0
  %1064 = vmatpush.msra.mxu0 0.0
  %1065 = vmatpush.msra.mxu0 0.0
  %1066 = vmatpush.msra.mxu0 0.0
  %1067 = vmatpush.msra.mxu0 0.0
  %1068 = vmatpush.msra.mxu0 0.0
  %1069 = vmatpush.msra.mxu0 0.0
  %1070 = vmatpush.msra.mxu0 0.0
  %1071 = vmatpush.msra.mxu0 %v310
  %1072 = vmatpush.msra.mxu0 %v309
  %1073 = vmatpush.msra.mxu0 %v308
  %1074 = vmatpush.msra.mxu0 %v307
  %1075 = vmatmul.f32.gmra.mxu0 %v1057
  %v1076 = vpop.f32.mrf.mxu0
  %v1077 = vadd.f32 %v426, %v1076
  %1078 = vdwg.mxu0
  %1079 = vmatpush.msra.mxu0 0.0
  %1080 = vmatpush.msra.mxu0 0.0
  %1081 = vmatpush.msra.mxu0 0.0
  %1082 = vmatpush.msra.mxu0 0.0
  %1083 = vmatpush.msra.mxu0 0.0
  %1084 = vmatpush.msra.mxu0 0.0
  %1085 = vmatpush.msra.mxu0 0.0
  %1086 = vmatpush.msra.mxu0 0.0
  %1087 = vmatpush.msra.mxu0 0.0
  %1088 = vmatpush.msra.mxu0 0.0
  %1089 = vmatpush.msra.mxu0 0.0
  %1090 = vmatpush.msra.mxu0 0.0
  %1091 = vmatpush.msra.mxu0 %v306
  %1092 = vmatpush.msra.mxu0 %v305
  %1093 = vmatpush.msra.mxu0 %v304
  %1094 = vmatpush.msra.mxu0 %v303
  %1095 = vmatmul.f32.gmra.mxu0 %v1057
  %v1096 = vpop.f32.mrf.mxu0
  %v1097 = vadd.f32 0.0, %v1096
  %1098 = vdwg.mxu0
  %v1099 = vadd.f32 %v352, %v1097
  %v1100 = vxor.u32 %v1099, 2147483648
  %v1101 = vmul.f32 %v1100, 1.442695
  %v1102 = vpow.pop %v1101
  %v1103 = vadd.f32 %v1102, 1.0
  %v1104 = vrcp.pop %v1103
  %v1105 = vmul.f32 %v1103, %v1104
  %v1106 = vsub.f32 1.0, %v1105
  %v1107 = vmul.f32 %v1104, %v1106
  %v1108 = vadd.f32 %v1104, %v1107
  %vm1109 = vweird.f32 %v1103
  %vm1110 = vweird.f32 %v1104
  %vm1111 = vmor %vm1109, %vm1110
  %v1112 = vsel %vm1111, %v1104, %v1108
  %v1113 = vand.u32 2147483647, %v1103
  %vm1114 = vcmp.eq.f32.partialorder %v1113, 8.507059e+37
  %v1115 = vand.u32 %v1103, 2147483648
  %v1116 = vor.u32 1.1754944e-38, %v1115
  %v1117 = vsel %vm1114, %v1116, %v1112
  %v1118 = vmul.f32 1.0, %v1117
  %v1119 = vtanh.pop %v1099
  %v1121 = vrot.slane %v1046, 6
  %v1123 = vmul.f32 %v1118, %v1121
  %1125 = vrot.lane.b32.xlu0 %v1119, 64
  %v1126 = vpop.permute.xlu0 %1125
  %v1128 = vmul.f32 %v1118, %v1126
  %1130 = vrot.lane.b32.xlu0 %v1128, 32
  %v1131 = vpop.permute.xlu0 %1130
  %v1133 = vadd.f32 %v1123, %v1131
  %v1134 = vtanh.pop %v1133
  %1136 = vrot.lane.b32.xlu0 %v1134, 64
  %v1137 = vpop.permute.xlu0 %1136
  %v1139 = vmul.f32 %v1118, %v1137
  %1141 = vrot.lane.b32.xlu0 %v1139, 32
  %v1142 = vpop.permute.xlu0 %1141
  %v1143 = vsel %vm166, %v1142, 0
  %1145 = vmatpush.msra.mxu0 0.0
  %1146 = vmatpush.msra.mxu0 0.0
  %1147 = vmatpush.msra.mxu0 0.0
  %1148 = vmatpush.msra.mxu0 0.0
  %1149 = vmatpush.msra.mxu0 0.0
  %1150 = vmatpush.msra.mxu0 0.0
  %1151 = vmatpush.msra.mxu0 0.0
  %1152 = vmatpush.msra.mxu0 0.0
  %1153 = vmatpush.msra.mxu0 0.0
  %1154 = vmatpush.msra.mxu0 0.0
  %1155 = vmatpush.msra.mxu0 0.0
  %1156 = vmatpush.msra.mxu0 0.0
  %1157 = vmatpush.msra.mxu0 %v310
  %1158 = vmatpush.msra.mxu0 %v309
  %1159 = vmatpush.msra.mxu0 %v308
  %1160 = vmatpush.msra.mxu0 %v307
  %1161 = vmatmul.f32.gmra.mxu0 %v1143
  %v1162 = vpop.f32.mrf.mxu0
  %v1163 = vadd.f32 %v426, %v1162
  %1164 = vdwg.mxu0
  %1165 = vmatpush.msra.mxu0 0.0
  %1166 = vmatpush.msra.mxu0 0.0
  %1167 = vmatpush.msra.mxu0 0.0
  %1168 = vmatpush.msra.mxu0 0.0
  %1169 = vmatpush.msra.mxu0 0.0
  %1170 = vmatpush.msra.mxu0 0.0
  %1171 = vmatpush.msra.mxu0 0.0
  %1172 = vmatpush.msra.mxu0 0.0
  %1173 = vmatpush.msra.mxu0 0.0
  %1174 = vmatpush.msra.mxu0 0.0
  %1175 = vmatpush.msra.mxu0 0.0
  %1176 = vmatpush.msra.mxu0 0.0
  %1177 = vmatpush.msra.mxu0 %v306
  %1178 = vmatpush.msra.mxu0 %v305
  %1179 = vmatpush.msra.mxu0 %v304
  %1180 = vmatpush.msra.mxu0 %v303
  %1181 = vmatmul.f32.gmra.mxu0 %v1143
  %v1182 = vpop.f32.mrf.mxu0
  %v1183 = vadd.f32 0.0, %v1182
  %1184 = vdwg.mxu0
  %v1186 = vrot.slane %v1183, 6
  %v1188 = vadd.f32 %v352, %v1186
  %v1189 = vxor.u32 %v1188, 2147483648
  %v1190 = vmul.f32 %v1189, 1.442695
  %v1191 = vpow.pop %v1190
  %v1192 = vadd.f32 %v1191, 1.0
  %v1193 = vrcp.pop %v1192
  %v1194 = vmul.f32 %v1192, %v1193
  %v1195 = vsub.f32 1.0, %v1194
  %v1196 = vmul.f32 %v1193, %v1195
  %v1197 = vadd.f32 %v1193, %v1196
  %vm1198 = vweird.f32 %v1192
  %vm1199 = vweird.f32 %v1193
  %vm1200 = vmor %vm1198, %vm1199
  %v1201 = vsel %vm1200, %v1193, %v1197
  %v1202 = vand.u32 2147483647, %v1192
  %vm1203 = vcmp.eq.f32.partialorder %v1202, 8.507059e+37
  %v1204 = vand.u32 %v1192, 2147483648
  %v1205 = vor.u32 1.1754944e-38, %v1204
  %v1206 = vsel %vm1203, %v1205, %v1201
  %v1207 = vmul.f32 1.0, %v1206
  %v1208 = vtanh.pop %v1188
  %v1210 = vrot.slane %v1133, 6
  %v1212 = vmul.f32 %v1207, %v1210
  %1214 = vrot.lane.b32.xlu0 %v1208, 64
  %v1215 = vpop.permute.xlu0 %1214
  %v1217 = vmul.f32 %v1207, %v1215
  %1219 = vrot.lane.b32.xlu0 %v1217, 32
  %v1220 = vpop.permute.xlu0 %1219
  %v1222 = vadd.f32 %v1212, %v1220
  %v1223 = vtanh.pop %v1222
  %1225 = vrot.lane.b32.xlu0 %v1223, 64
  %v1226 = vpop.permute.xlu0 %1225
  %v1228 = vmul.f32 %v1207, %v1226
  %v1230 = vrot.slane %v1228, 2
  %1231 = vrot.lane.b32.xlu0 %v1230, 32
  %v1232 = vpop.permute.xlu0 %1231
  %v1233 = vsel %vm166, %v1232, 0
  %1235 = vmatpush.msra.mxu0 0.0
  %1236 = vmatpush.msra.mxu0 0.0
  %1237 = vmatpush.msra.mxu0 0.0
  %1238 = vmatpush.msra.mxu0 0.0
  %1239 = vmatpush.msra.mxu0 0.0
  %1240 = vmatpush.msra.mxu0 0.0
  %1241 = vmatpush.msra.mxu0 0.0
  %1242 = vmatpush.msra.mxu0 0.0
  %1243 = vmatpush.msra.mxu0 0.0
  %1244 = vmatpush.msra.mxu0 0.0
  %1245 = vmatpush.msra.mxu0 0.0
  %1246 = vmatpush.msra.mxu0 0.0
  %1247 = vmatpush.msra.mxu0 %v310
  %1248 = vmatpush.msra.mxu0 %v309
  %1249 = vmatpush.msra.mxu0 %v308
  %1250 = vmatpush.msra.mxu0 %v307
  %1251 = vmatmul.f32.gmra.mxu0 %v1233
  %v1252 = vpop.f32.mrf.mxu0
  %v1253 = vadd.f32 %v426, %v1252
  %1254 = vdwg.mxu0
  %1255 = vmatpush.msra.mxu0 0.0
  %1256 = vmatpush.msra.mxu0 0.0
  %1257 = vmatpush.msra.mxu0 0.0
  %1258 = vmatpush.msra.mxu0 0.0
  %1259 = vmatpush.msra.mxu0 0.0
  %1260 = vmatpush.msra.mxu0 0.0
  %1261 = vmatpush.msra.mxu0 0.0
  %1262 = vmatpush.msra.mxu0 0.0
  %1263 = vmatpush.msra.mxu0 0.0
  %1264 = vmatpush.msra.mxu0 0.0
  %1265 = vmatpush.msra.mxu0 0.0
  %1266 = vmatpush.msra.mxu0 0.0
  %1267 = vmatpush.msra.mxu0 %v306
  %1268 = vmatpush.msra.mxu0 %v305
  %1269 = vmatpush.msra.mxu0 %v304
  %1270 = vmatpush.msra.mxu0 %v303
  %1271 = vmatmul.f32.gmra.mxu0 %v1233
  %v1272 = vpop.f32.mrf.mxu0
  %v1273 = vadd.f32 0.0, %v1272
  %1274 = vdwg.mxu0
  %v1276 = vrot.slane %v1273, 4
  %v1278 = vadd.f32 %v352, %v1276
  %v1279 = vxor.u32 %v1278, 2147483648
  %v1280 = vmul.f32 %v1279, 1.442695
  %v1281 = vpow.pop %v1280
  %v1282 = vadd.f32 %v1281, 1.0
  %v1283 = vrcp.pop %v1282
  %v1284 = vmul.f32 %v1282, %v1283
  %v1285 = vsub.f32 1.0, %v1284
  %v1286 = vmul.f32 %v1283, %v1285
  %v1287 = vadd.f32 %v1283, %v1286
  %vm1288 = vweird.f32 %v1282
  %vm1289 = vweird.f32 %v1283
  %vm1290 = vmor %vm1288, %vm1289
  %v1291 = vsel %vm1290, %v1283, %v1287
  %v1292 = vand.u32 2147483647, %v1282
  %vm1293 = vcmp.eq.f32.partialorder %v1292, 8.507059e+37
  %v1294 = vand.u32 %v1282, 2147483648
  %v1295 = vor.u32 1.1754944e-38, %v1294
  %v1296 = vsel %vm1293, %v1295, %v1291
  %v1297 = vmul.f32 1.0, %v1296
  %v1298 = vtanh.pop %v1278
  %v1300 = vrot.slane %v1222, 6
  %v1302 = vmul.f32 %v1297, %v1300
  %1304 = vrot.lane.b32.xlu0 %v1298, 64
  %v1305 = vpop.permute.xlu0 %1304
  %v1307 = vmul.f32 %v1297, %v1305
  %1309 = vrot.lane.b32.xlu0 %v1307, 32
  %v1310 = vpop.permute.xlu0 %1309
  %v1312 = vadd.f32 %v1302, %v1310
  %v1313 = vtanh.pop %v1312
  %1315 = vrot.lane.b32.xlu0 %v1313, 64
  %v1316 = vpop.permute.xlu0 %1315
  %v1318 = vmul.f32 %v1297, %v1316
  %v1320 = vrot.slane %v1318, 4
  %1321 = vrot.lane.b32.xlu0 %v1320, 32
  %v1322 = vpop.permute.xlu0 %1321
  %v1323 = vsel %vm166, %v1322, 0
  %1325 = vmatpush.msra.mxu0 0.0
  %1326 = vmatpush.msra.mxu0 0.0
  %1327 = vmatpush.msra.mxu0 0.0
  %1328 = vmatpush.msra.mxu0 0.0
  %1329 = vmatpush.msra.mxu0 0.0
  %1330 = vmatpush.msra.mxu0 0.0
  %1331 = vmatpush.msra.mxu0 0.0
  %1332 = vmatpush.msra.mxu0 0.0
  %1333 = vmatpush.msra.mxu0 0.0
  %1334 = vmatpush.msra.mxu0 0.0
  %1335 = vmatpush.msra.mxu0 0.0
  %1336 = vmatpush.msra.mxu0 0.0
  %1337 = vmatpush.msra.mxu0 %v310
  %1338 = vmatpush.msra.mxu0 %v309
  %1339 = vmatpush.msra.mxu0 %v308
  %1340 = vmatpush.msra.mxu0 %v307
  %1341 = vmatmul.f32.gmra.mxu0 %v1323
  %v1342 = vpop.f32.mrf.mxu0
  %v1343 = vadd.f32 %v426, %v1342
  %1344 = vdwg.mxu0
  %1345 = vmatpush.msra.mxu0 0.0
  %1346 = vmatpush.msra.mxu0 0.0
  %1347 = vmatpush.msra.mxu0 0.0
  %1348 = vmatpush.msra.mxu0 0.0
  %1349 = vmatpush.msra.mxu0 0.0
  %1350 = vmatpush.msra.mxu0 0.0
  %1351 = vmatpush.msra.mxu0 0.0
  %1352 = vmatpush.msra.mxu0 0.0
  %1353 = vmatpush.msra.mxu0 0.0
  %1354 = vmatpush.msra.mxu0 0.0
  %1355 = vmatpush.msra.mxu0 0.0
  %1356 = vmatpush.msra.mxu0 0.0
  %1357 = vmatpush.msra.mxu0 %v306
  %1358 = vmatpush.msra.mxu0 %v305
  %1359 = vmatpush.msra.mxu0 %v304
  %1360 = vmatpush.msra.mxu0 %v303
  %1361 = vmatmul.f32.gmra.mxu0 %v1323
  %v1362 = vpop.f32.mrf.mxu0
  %v1363 = vadd.f32 0.0, %v1362
  %1364 = vdwg.mxu0
  %v1366 = vrot.slane %v1363, 2
  %v1368 = vadd.f32 %v352, %v1366
  %v1369 = vxor.u32 %v1368, 2147483648
  %v1370 = vmul.f32 %v1369, 1.442695
  %v1371 = vpow.pop %v1370
  %v1372 = vadd.f32 %v1371, 1.0
  %v1373 = vrcp.pop %v1372
  %v1374 = vmul.f32 %v1372, %v1373
  %v1375 = vsub.f32 1.0, %v1374
  %v1376 = vmul.f32 %v1373, %v1375
  %v1377 = vadd.f32 %v1373, %v1376
  %vm1378 = vweird.f32 %v1372
  %vm1379 = vweird.f32 %v1373
  %vm1380 = vmor %vm1378, %vm1379
  %v1381 = vsel %vm1380, %v1373, %v1377
  %v1382 = vand.u32 2147483647, %v1372
  %vm1383 = vcmp.eq.f32.partialorder %v1382, 8.507059e+37
  %v1384 = vand.u32 %v1372, 2147483648
  %v1385 = vor.u32 1.1754944e-38, %v1384
  %v1386 = vsel %vm1383, %v1385, %v1381
  %v1387 = vmul.f32 1.0, %v1386
  %v1388 = vtanh.pop %v1368
  %v1390 = vrot.slane %v1312, 6
  %v1392 = vmul.f32 %v1387, %v1390
  %1394 = vrot.lane.b32.xlu0 %v1388, 64
  %v1395 = vpop.permute.xlu0 %1394
  %v1397 = vmul.f32 %v1387, %v1395
  %1399 = vrot.lane.b32.xlu0 %v1397, 32
  %v1400 = vpop.permute.xlu0 %1399
  %v1402 = vadd.f32 %v1392, %v1400
  %v1403 = vtanh.pop %v1402
  %1405 = vrot.lane.b32.xlu0 %v1403, 64
  %v1406 = vpop.permute.xlu0 %1405
  %v1408 = vmul.f32 %v1387, %v1406
  %v1410 = vrot.slane %v1408, 6
  %1411 = vrot.lane.b32.xlu0 %v1410, 32
  %v1412 = vpop.permute.xlu0 %1411
  %v1413 = vsel %vm166, %v1412, 0
  %1415 = vmatpush.msra.mxu0 0.0
  %1416 = vmatpush.msra.mxu0 0.0
  %1417 = vmatpush.msra.mxu0 0.0
  %1418 = vmatpush.msra.mxu0 0.0
  %1419 = vmatpush.msra.mxu0 0.0
  %1420 = vmatpush.msra.mxu0 0.0
  %1421 = vmatpush.msra.mxu0 0.0
  %1422 = vmatpush.msra.mxu0 0.0
  %1423 = vmatpush.msra.mxu0 0.0
  %1424 = vmatpush.msra.mxu0 0.0
  %1425 = vmatpush.msra.mxu0 0.0
  %1426 = vmatpush.msra.mxu0 0.0
  %1427 = vmatpush.msra.mxu0 %v310
  %1428 = vmatpush.msra.mxu0 %v309
  %1429 = vmatpush.msra.mxu0 %v308
  %1430 = vmatpush.msra.mxu0 %v307
  %1431 = vmatmul.f32.gmra.mxu0 %v1413
  %v1432 = vpop.f32.mrf.mxu0
  %v1433 = vadd.f32 %v426, %v1432
  %1434 = vdwg.mxu0
  %1435 = vmatpush.msra.mxu0 0.0
  %1436 = vmatpush.msra.mxu0 0.0
  %1437 = vmatpush.msra.mxu0 0.0
  %1438 = vmatpush.msra.mxu0 0.0
  %1439 = vmatpush.msra.mxu0 0.0
  %1440 = vmatpush.msra.mxu0 0.0
  %1441 = vmatpush.msra.mxu0 0.0
  %1442 = vmatpush.msra.mxu0 0.0
  %1443 = vmatpush.msra.mxu0 0.0
  %1444 = vmatpush.msra.mxu0 0.0
  %1445 = vmatpush.msra.mxu0 0.0
  %1446 = vmatpush.msra.mxu0 0.0
  %1447 = vmatpush.msra.mxu0 %v306
  %1448 = vmatpush.msra.mxu0 %v305
  %1449 = vmatpush.msra.mxu0 %v304
  %1450 = vmatpush.msra.mxu0 %v303
  %1451 = vmatmul.f32.gmra.mxu0 %v1413
  %v1452 = vpop.f32.mrf.mxu0
  %v1453 = vadd.f32 0.0, %v1452
  %1454 = vdwg.mxu0
  %v1455 = vadd.f32 %v355, %v1453
  %v1456 = vxor.u32 %v1455, 2147483648
  %v1457 = vmul.f32 %v1456, 1.442695
  %v1458 = vpow.pop %v1457
  %v1459 = vadd.f32 %v1458, 1.0
  %v1460 = vrcp.pop %v1459
  %v1461 = vmul.f32 %v1459, %v1460
  %v1462 = vsub.f32 1.0, %v1461
  %v1463 = vmul.f32 %v1460, %v1462
  %v1464 = vadd.f32 %v1460, %v1463
  %vm1465 = vweird.f32 %v1459
  %vm1466 = vweird.f32 %v1460
  %vm1467 = vmor %vm1465, %vm1466
  %v1468 = vsel %vm1467, %v1460, %v1464
  %v1469 = vand.u32 2147483647, %v1459
  %vm1470 = vcmp.eq.f32.partialorder %v1469, 8.507059e+37
  %v1471 = vand.u32 %v1459, 2147483648
  %v1472 = vor.u32 1.1754944e-38, %v1471
  %v1473 = vsel %vm1470, %v1472, %v1468
  %v1474 = vmul.f32 1.0, %v1473
  %v1475 = vtanh.pop %v1455
  %v1477 = vrot.slane %v1402, 6
  %v1479 = vmul.f32 %v1474, %v1477
  %1481 = vrot.lane.b32.xlu0 %v1475, 64
  %v1482 = vpop.permute.xlu0 %1481
  %v1484 = vmul.f32 %v1474, %v1482
  %1486 = vrot.lane.b32.xlu0 %v1484, 32
  %v1487 = vpop.permute.xlu0 %1486
  %v1489 = vadd.f32 %v1479, %v1487
  %v1490 = vtanh.pop %v1489
  %1492 = vrot.lane.b32.xlu0 %v1490, 64
  %v1493 = vpop.permute.xlu0 %1492
  %v1495 = vmul.f32 %v1474, %v1493
  %1497 = vrot.lane.b32.xlu0 %v1495, 32
  %v1498 = vpop.permute.xlu0 %1497
  %v1499 = vsel %vm166, %v1498, 0
  %1501 = vmatpush.msra.mxu0 0.0
  %1502 = vmatpush.msra.mxu0 0.0
  %1503 = vmatpush.msra.mxu0 0.0
  %1504 = vmatpush.msra.mxu0 0.0
  %1505 = vmatpush.msra.mxu0 0.0
  %1506 = vmatpush.msra.mxu0 0.0
  %1507 = vmatpush.msra.mxu0 0.0
  %1508 = vmatpush.msra.mxu0 0.0
  %1509 = vmatpush.msra.mxu0 0.0
  %1510 = vmatpush.msra.mxu0 0.0
  %1511 = vmatpush.msra.mxu0 0.0
  %1512 = vmatpush.msra.mxu0 0.0
  %1513 = vmatpush.msra.mxu0 %v310
  %1514 = vmatpush.msra.mxu0 %v309
  %1515 = vmatpush.msra.mxu0 %v308
  %1516 = vmatpush.msra.mxu0 %v307
  %1517 = vmatmul.f32.gmra.mxu0 %v1499
  %v1518 = vpop.f32.mrf.mxu0
  %v1519 = vadd.f32 %v426, %v1518
  %1520 = vdwg.mxu0
  %1521 = vmatpush.msra.mxu0 0.0
  %1522 = vmatpush.msra.mxu0 0.0
  %1523 = vmatpush.msra.mxu0 0.0
  %1524 = vmatpush.msra.mxu0 0.0
  %1525 = vmatpush.msra.mxu0 0.0
  %1526 = vmatpush.msra.mxu0 0.0
  %1527 = vmatpush.msra.mxu0 0.0
  %1528 = vmatpush.msra.mxu0 0.0
  %1529 = vmatpush.msra.mxu0 0.0
  %1530 = vmatpush.msra.mxu0 0.0
  %1531 = vmatpush.msra.mxu0 0.0
  %1532 = vmatpush.msra.mxu0 0.0
  %1533 = vmatpush.msra.mxu0 %v306
  %1534 = vmatpush.msra.mxu0 %v305
  %1535 = vmatpush.msra.mxu0 %v304
  %1536 = vmatpush.msra.mxu0 %v303
  %1537 = vmatmul.f32.gmra.mxu0 %v1499
  %v1538 = vpop.f32.mrf.mxu0
  %v1539 = vadd.f32 0.0, %v1538
  %1540 = vdwg.mxu0
  %v1542 = vrot.slane %v1539, 6
  %v1544 = vadd.f32 %v355, %v1542
  %v1545 = vxor.u32 %v1544, 2147483648
  %v1546 = vmul.f32 %v1545, 1.442695
  %v1547 = vpow.pop %v1546
  %v1548 = vadd.f32 %v1547, 1.0
  %v1549 = vrcp.pop %v1548
  %v1550 = vmul.f32 %v1548, %v1549
  %v1551 = vsub.f32 1.0, %v1550
  %v1552 = vmul.f32 %v1549, %v1551
  %v1553 = vadd.f32 %v1549, %v1552
  %vm1554 = vweird.f32 %v1548
  %vm1555 = vweird.f32 %v1549
  %vm1556 = vmor %vm1554, %vm1555
  %v1557 = vsel %vm1556, %v1549, %v1553
  %v1558 = vand.u32 2147483647, %v1548
  %vm1559 = vcmp.eq.f32.partialorder %v1558, 8.507059e+37
  %v1560 = vand.u32 %v1548, 2147483648
  %v1561 = vor.u32 1.1754944e-38, %v1560
  %v1562 = vsel %vm1559, %v1561, %v1557
  %v1563 = vmul.f32 1.0, %v1562
  %v1564 = vtanh.pop %v1544
  %v1566 = vrot.slane %v1489, 6
  %v1568 = vmul.f32 %v1563, %v1566
  %1570 = vrot.lane.b32.xlu0 %v1564, 64
  %v1571 = vpop.permute.xlu0 %1570
  %v1573 = vmul.f32 %v1563, %v1571
  %1575 = vrot.lane.b32.xlu0 %v1573, 32
  %v1576 = vpop.permute.xlu0 %1575
  %v1578 = vadd.f32 %v1568, %v1576
  %v1579 = vtanh.pop %v1578
  %1581 = vrot.lane.b32.xlu0 %v1579, 64
  %v1582 = vpop.permute.xlu0 %1581
  %v1584 = vmul.f32 %v1563, %v1582
  %v1586 = vrot.slane %v1584, 2
  %1587 = vrot.lane.b32.xlu0 %v1586, 32
  %v1588 = vpop.permute.xlu0 %1587
  %v1589 = vsel %vm166, %v1588, 0
  %1591 = vmatpush.msra.mxu0 0.0
  %1592 = vmatpush.msra.mxu0 0.0
  %1593 = vmatpush.msra.mxu0 0.0
  %1594 = vmatpush.msra.mxu0 0.0
  %1595 = vmatpush.msra.mxu0 0.0
  %1596 = vmatpush.msra.mxu0 0.0
  %1597 = vmatpush.msra.mxu0 0.0
  %1598 = vmatpush.msra.mxu0 0.0
  %1599 = vmatpush.msra.mxu0 0.0
  %1600 = vmatpush.msra.mxu0 0.0
  %1601 = vmatpush.msra.mxu0 0.0
  %1602 = vmatpush.msra.mxu0 0.0
  %1603 = vmatpush.msra.mxu0 %v310
  %1604 = vmatpush.msra.mxu0 %v309
  %1605 = vmatpush.msra.mxu0 %v308
  %1606 = vmatpush.msra.mxu0 %v307
  %1607 = vmatmul.f32.gmra.mxu0 %v1589
  %v1608 = vpop.f32.mrf.mxu0
  %v1609 = vadd.f32 %v426, %v1608
  %1610 = vdwg.mxu0
  %1611 = vmatpush.msra.mxu0 0.0
  %1612 = vmatpush.msra.mxu0 0.0
  %1613 = vmatpush.msra.mxu0 0.0
  %1614 = vmatpush.msra.mxu0 0.0
  %1615 = vmatpush.msra.mxu0 0.0
  %1616 = vmatpush.msra.mxu0 0.0
  %1617 = vmatpush.msra.mxu0 0.0
  %1618 = vmatpush.msra.mxu0 0.0
  %1619 = vmatpush.msra.mxu0 0.0
  %1620 = vmatpush.msra.mxu0 0.0
  %1621 = vmatpush.msra.mxu0 0.0
  %1622 = vmatpush.msra.mxu0 0.0
  %1623 = vmatpush.msra.mxu0 %v306
  %1624 = vmatpush.msra.mxu0 %v305
  %1625 = vmatpush.msra.mxu0 %v304
  %1626 = vmatpush.msra.mxu0 %v303
  %1627 = vmatmul.f32.gmra.mxu0 %v1589
  %v1628 = vpop.f32.mrf.mxu0
  %v1629 = vadd.f32 0.0, %v1628
  %1630 = vdwg.mxu0
  %v1632 = vrot.slane %v1629, 4
  %v1634 = vadd.f32 %v355, %v1632
  %v1635 = vxor.u32 %v1634, 2147483648
  %v1636 = vmul.f32 %v1635, 1.442695
  %v1637 = vpow.pop %v1636
  %v1638 = vadd.f32 %v1637, 1.0
  %v1639 = vrcp.pop %v1638
  %v1640 = vmul.f32 %v1638, %v1639
  %v1641 = vsub.f32 1.0, %v1640
  %v1642 = vmul.f32 %v1639, %v1641
  %v1643 = vadd.f32 %v1639, %v1642
  %vm1644 = vweird.f32 %v1638
  %vm1645 = vweird.f32 %v1639
  %vm1646 = vmor %vm1644, %vm1645
  %v1647 = vsel %vm1646, %v1639, %v1643
  %v1648 = vand.u32 2147483647, %v1638
  %vm1649 = vcmp.eq.f32.partialorder %v1648, 8.507059e+37
  %v1650 = vand.u32 %v1638, 2147483648
  %v1651 = vor.u32 1.1754944e-38, %v1650
  %v1652 = vsel %vm1649, %v1651, %v1647
  %v1653 = vmul.f32 1.0, %v1652
  %v1654 = vtanh.pop %v1634
  %v1656 = vrot.slane %v1578, 6
  %v1658 = vmul.f32 %v1653, %v1656
  %1660 = vrot.lane.b32.xlu0 %v1654, 64
  %v1661 = vpop.permute.xlu0 %1660
  %v1663 = vmul.f32 %v1653, %v1661
  %1665 = vrot.lane.b32.xlu0 %v1663, 32
  %v1666 = vpop.permute.xlu0 %1665
  %v1668 = vadd.f32 %v1658, %v1666
  %v1669 = vtanh.pop %v1668
  %1671 = vrot.lane.b32.xlu0 %v1669, 64
  %v1672 = vpop.permute.xlu0 %1671
  %v1674 = vmul.f32 %v1653, %v1672
  %v1676 = vrot.slane %v1674, 4
  %1677 = vrot.lane.b32.xlu0 %v1676, 32
  %v1678 = vpop.permute.xlu0 %1677
  %v1679 = vsel %vm166, %v1678, 0
  %1681 = vmatpush.msra.mxu0 0.0
  %1682 = vmatpush.msra.mxu0 0.0
  %1683 = vmatpush.msra.mxu0 0.0
  %1684 = vmatpush.msra.mxu0 0.0
  %1685 = vmatpush.msra.mxu0 0.0
  %1686 = vmatpush.msra.mxu0 0.0
  %1687 = vmatpush.msra.mxu0 0.0
  %1688 = vmatpush.msra.mxu0 0.0
  %1689 = vmatpush.msra.mxu0 0.0
  %1690 = vmatpush.msra.mxu0 0.0
  %1691 = vmatpush.msra.mxu0 0.0
  %1692 = vmatpush.msra.mxu0 0.0
  %1693 = vmatpush.msra.mxu0 %v310
  %1694 = vmatpush.msra.mxu0 %v309
  %1695 = vmatpush.msra.mxu0 %v308
  %1696 = vmatpush.msra.mxu0 %v307
  %1697 = vmatmul.f32.gmra.mxu0 %v1679
  %v1698 = vpop.f32.mrf.mxu0
  %v1699 = vadd.f32 %v426, %v1698
  %1700 = vdwg.mxu0
  %1701 = vmatpush.msra.mxu0 0.0
  %1702 = vmatpush.msra.mxu0 0.0
  %1703 = vmatpush.msra.mxu0 0.0
  %1704 = vmatpush.msra.mxu0 0.0
  %1705 = vmatpush.msra.mxu0 0.0
  %1706 = vmatpush.msra.mxu0 0.0
  %1707 = vmatpush.msra.mxu0 0.0
  %1708 = vmatpush.msra.mxu0 0.0
  %1709 = vmatpush.msra.mxu0 0.0
  %1710 = vmatpush.msra.mxu0 0.0
  %1711 = vmatpush.msra.mxu0 0.0
  %1712 = vmatpush.msra.mxu0 0.0
  %1713 = vmatpush.msra.mxu0 %v306
  %1714 = vmatpush.msra.mxu0 %v305
  %1715 = vmatpush.msra.mxu0 %v304
  %1716 = vmatpush.msra.mxu0 %v303
  %1717 = vmatmul.f32.gmra.mxu0 %v1679
  %v1718 = vpop.f32.mrf.mxu0
  %v1719 = vadd.f32 0.0, %v1718
  %1720 = vdwg.mxu0
  %v1722 = vrot.slane %v1719, 2
  %v1724 = vadd.f32 %v355, %v1722
  %v1725 = vxor.u32 %v1724, 2147483648
  %v1726 = vmul.f32 %v1725, 1.442695
  %v1727 = vpow.pop %v1726
  %v1728 = vadd.f32 %v1727, 1.0
  %v1729 = vrcp.pop %v1728
  %v1730 = vmul.f32 %v1728, %v1729
  %v1731 = vsub.f32 1.0, %v1730
  %v1732 = vmul.f32 %v1729, %v1731
  %v1733 = vadd.f32 %v1729, %v1732
  %vm1734 = vweird.f32 %v1728
  %vm1735 = vweird.f32 %v1729
  %vm1736 = vmor %vm1734, %vm1735
  %v1737 = vsel %vm1736, %v1729, %v1733
  %v1738 = vand.u32 2147483647, %v1728
  %vm1739 = vcmp.eq.f32.partialorder %v1738, 8.507059e+37
  %v1740 = vand.u32 %v1728, 2147483648
  %v1741 = vor.u32 1.1754944e-38, %v1740
  %v1742 = vsel %vm1739, %v1741, %v1737
  %v1743 = vmul.f32 1.0, %v1742
  %v1744 = vtanh.pop %v1724
  %v1746 = vrot.slane %v1668, 6
  %v1748 = vmul.f32 %v1743, %v1746
  %1750 = vrot.lane.b32.xlu0 %v1744, 64
  %v1751 = vpop.permute.xlu0 %1750
  %v1753 = vmul.f32 %v1743, %v1751
  %1755 = vrot.lane.b32.xlu0 %v1753, 32
  %v1756 = vpop.permute.xlu0 %1755
  %v1758 = vadd.f32 %v1748, %v1756
  %v1759 = vtanh.pop %v1758
  %1761 = vrot.lane.b32.xlu0 %v1759, 64
  %v1762 = vpop.permute.xlu0 %1761
  %v1764 = vmul.f32 %v1743, %v1762
  %v1766 = vrot.slane %v1764, 6
  %1767 = vrot.lane.b32.xlu0 %v1766, 32
  %v1768 = vpop.permute.xlu0 %1767
  %v1769 = vsel %vm166, %v1768, 0
  %1771 = vmatpush.msra.mxu0 0.0
  %1772 = vmatpush.msra.mxu0 0.0
  %1773 = vmatpush.msra.mxu0 0.0
  %1774 = vmatpush.msra.mxu0 0.0
  %1775 = vmatpush.msra.mxu0 0.0
  %1776 = vmatpush.msra.mxu0 0.0
  %1777 = vmatpush.msra.mxu0 0.0
  %1778 = vmatpush.msra.mxu0 0.0
  %1779 = vmatpush.msra.mxu0 0.0
  %1780 = vmatpush.msra.mxu0 0.0
  %1781 = vmatpush.msra.mxu0 0.0
  %1782 = vmatpush.msra.mxu0 0.0
  %1783 = vmatpush.msra.mxu0 %v310
  %1784 = vmatpush.msra.mxu0 %v309
  %1785 = vmatpush.msra.mxu0 %v308
  %1786 = vmatpush.msra.mxu0 %v307
  %1787 = vmatmul.f32.gmra.mxu0 %v1769
  %v1788 = vpop.f32.mrf.mxu0
  %v1789 = vadd.f32 %v426, %v1788
  %1790 = vdwg.mxu0
  %1791 = vrot.lane.b32.xlu0 %v1764, 96
  %v1792 = vpop.permute.xlu0 %1791
  %vm1794 = vcmask 785926
  %1795 = vst.msk [vmem:[%s14 - $0x6] sm:$0xc0] %vm1794, %v1792
  %1797 = vrot.lane.b32.xlu0 %v1758, 64
  %v1798 = vpop.permute.xlu0 %1797
  %vm1800 = vcmask 1048326
  %1801 = vst.msk [vmem:[%s14 - $0x6] sm:$0xc0] %vm1800, %v1798
  %v1802 = vld [vmem:[%s9] sm:$0xff]
  %v1803 = vld [vmem:[%s9 + $0x8] sm:$0xff]
  %v1804 = vld [vmem:[%s9 + $0x10] sm:$0xff]
  %v1805 = vld [vmem:[%s9 + $0x18] sm:$0xff]
  %v1806 = vld [vmem:[%s11] sm:$0xff]
  %v1807 = vld [vmem:[%s11 + $0x8] sm:$0xff]
  %v1808 = vld [vmem:[%s11 + $0x10] sm:$0xff]
  %v1809 = vld [vmem:[%s11 + $0x18] sm:$0xff]
  %v1810 = vld [vmem:[%s12] sm:$0x1]
  %s1811 = scalar_lea.vmem %s13, 4
  %v1812 = vld [vmem:[%s1811] sm:$0x3]
  %s1813 = scalar_lea.vmem %s13, 6
  %v1814 = vld [vmem:[%s1813] sm:$0x3]
  %v1816 = vsel %vm166, %v1812, 0
  %1818 = vmatpush.msra.mxu0 0.0
  %1819 = vmatpush.msra.mxu0 0.0
  %1820 = vmatpush.msra.mxu0 0.0
  %1821 = vmatpush.msra.mxu0 0.0
  %1822 = vmatpush.msra.mxu0 0.0
  %1823 = vmatpush.msra.mxu0 0.0
  %1824 = vmatpush.msra.mxu0 0.0
  %1825 = vmatpush.msra.mxu0 0.0
  %1826 = vmatpush.msra.mxu0 0.0
  %1827 = vmatpush.msra.mxu0 0.0
  %1828 = vmatpush.msra.mxu0 0.0
  %1829 = vmatpush.msra.mxu0 0.0
  %1830 = vmatpush.msra.mxu0 %v1805
  %1831 = vmatpush.msra.mxu0 %v1804
  %1832 = vmatpush.msra.mxu0 %v1803
  %1833 = vmatpush.msra.mxu0 %v1802
  %1834 = vmatmul.f32.gmra.mxu0 %v1816
  %v1835 = vpop.f32.mrf.mxu0
  %v1836 = vadd.f32 0.0, %v1835
  %1837 = vdwg.mxu0
  %v1838 = vadd.f32 %v451, %v1836
  %v1839 = vxor.u32 %v1838, 2147483648
  %v1840 = vmul.f32 %v1839, 1.442695
  %v1841 = vpow.pop %v1840
  %v1842 = vadd.f32 %v1841, 1.0
  %v1843 = vrcp.pop %v1842
  %v1844 = vmul.f32 %v1842, %v1843
  %v1845 = vsub.f32 1.0, %v1844
  %v1846 = vmul.f32 %v1843, %v1845
  %v1847 = vadd.f32 %v1843, %v1846
  %vm1848 = vweird.f32 %v1842
  %vm1849 = vweird.f32 %v1843
  %vm1850 = vmor %vm1848, %vm1849
  %v1851 = vsel %vm1850, %v1843, %v1847
  %v1852 = vand.u32 2147483647, %v1842
  %vm1853 = vcmp.eq.f32.partialorder %v1852, 8.507059e+37
  %v1854 = vand.u32 %v1842, 2147483648
  %v1855 = vor.u32 1.1754944e-38, %v1854
  %v1856 = vsel %vm1853, %v1855, %v1851
  %v1857 = vmul.f32 1.0, %v1856
  %v1858 = vtanh.pop %v1838
  %1860 = vrot.lane.b32.xlu0 %v1814, 32
  %v1861 = vpop.permute.xlu0 %1860
  %v1863 = vmul.f32 %v1857, %v1861
  %1865 = vrot.lane.b32.xlu0 %v1858, 64
  %v1866 = vpop.permute.xlu0 %1865
  %v1868 = vmul.f32 %v1857, %v1866
  %1870 = vrot.lane.b32.xlu0 %v1868, 32
  %v1871 = vpop.permute.xlu0 %1870
  %v1873 = vadd.f32 %v1863, %v1871
  %v1874 = vtanh.pop %v1873
  %1876 = vrot.lane.b32.xlu0 %v1874, 64
  %v1877 = vpop.permute.xlu0 %1876
  %v1879 = vmul.f32 %v1857, %v1877
  %v1881 = vperm.slane %v1810, 0
  %1884 = vrot.lane.b32.xlu0 %v1879, 32
  %v1885 = vpop.permute.xlu0 %1884
  %v1886 = vsel %vm166, %v1885, 0
  %1888 = vmatpush.msra.mxu0 0.0
  %1889 = vmatpush.msra.mxu0 0.0
  %1890 = vmatpush.msra.mxu0 0.0
  %1891 = vmatpush.msra.mxu0 0.0
  %1892 = vmatpush.msra.mxu0 0.0
  %1893 = vmatpush.msra.mxu0 0.0
  %1894 = vmatpush.msra.mxu0 0.0
  %1895 = vmatpush.msra.mxu0 0.0
  %1896 = vmatpush.msra.mxu0 0.0
  %1897 = vmatpush.msra.mxu0 0.0
  %1898 = vmatpush.msra.mxu0 0.0
  %1899 = vmatpush.msra.mxu0 0.0
  %1900 = vmatpush.msra.mxu0 %v1809
  %1901 = vmatpush.msra.mxu0 %v1808
  %1902 = vmatpush.msra.mxu0 %v1807
  %1903 = vmatpush.msra.mxu0 %v1806
  %1904 = vmatmul.f32.gmra.mxu0 %v1886
  %v1905 = vpop.f32.mrf.mxu0
  %v1906 = vadd.f32 %v1881, %v1905
  %1907 = vdwg.mxu0
  %v1908 = vsel %vm164, %v1906, -inf
  %1909 = vmax.xlane.f32.xlu0 %v1908
  %v1910 = vpop.xlane.xlu0 %1909
  %v1911 = vsub.f32 %v1906, %v1910
  %v1912 = vmul.f32 %v1911, 1.442695
  %v1913 = vpow.pop %v1912
  %v1914 = vsel %vm164, %v1913, 0.0
  %1915 = vadd.xlane.f32.xlu0 %v1914
  %v1916 = vpop.xlane.xlu0 %1915
  %v1917 = vlog2.pop %v1916
  %v1918 = vmul.f32 %v1917, 0.6931472
  %v1919 = vadd.f32 %v1918, %v1910
  %v1920 = vsub.f32 %v1906, %v1919
  %1921 = vst.msk [vmem:[%s14] sm:$0x3] %vm164, %v1920
  %1922 = vmatpush.msra.mxu0 0.0
  %1923 = vmatpush.msra.mxu0 0.0
  %1924 = vmatpush.msra.mxu0 0.0
  %1925 = vmatpush.msra.mxu0 0.0
  %1926 = vmatpush.msra.mxu0 0.0
  %1927 = vmatpush.msra.mxu0 0.0
  %1928 = vmatpush.msra.mxu0 0.0
  %1929 = vmatpush.msra.mxu0 0.0
  %1930 = vmatpush.msra.mxu0 0.0
  %1931 = vmatpush.msra.mxu0 0.0
  %1932 = vmatpush.msra.mxu0 0.0
  %1933 = vmatpush.msra.mxu0 0.0
  %1934 = vmatpush.msra.mxu0 %v1805
  %1935 = vmatpush.msra.mxu0 %v1804
  %1936 = vmatpush.msra.mxu0 %v1803
  %1937 = vmatpush.msra.mxu0 %v1802
  %1938 = vmatmul.f32.gmra.mxu0 %v1886
  %v1939 = vpop.f32.mrf.mxu0
  %v1940 = vadd.f32 0.0, %v1939
  %1941 = vdwg.mxu0
  %v1942 = vadd.f32 %v541, %v1940
  %v1943 = vxor.u32 %v1942, 2147483648
  %v1944 = vmul.f32 %v1943, 1.442695
  %v1945 = vpow.pop %v1944
  %v1946 = vadd.f32 %v1945, 1.0
  %v1947 = vrcp.pop %v1946
  %v1948 = vmul.f32 %v1946, %v1947
  %v1949 = vsub.f32 1.0, %v1948
  %v1950 = vmul.f32 %v1947, %v1949
  %v1951 = vadd.f32 %v1947, %v1950
  %vm1952 = vweird.f32 %v1946
  %vm1953 = vweird.f32 %v1947
  %vm1954 = vmor %vm1952, %vm1953
  %v1955 = vsel %vm1954, %v1947, %v1951
  %v1956 = vand.u32 2147483647, %v1946
  %vm1957 = vcmp.eq.f32.partialorder %v1956, 8.507059e+37
  %v1958 = vand.u32 %v1946, 2147483648
  %v1959 = vor.u32 1.1754944e-38, %v1958
  %v1960 = vsel %vm1957, %v1959, %v1955
  %v1961 = vmul.f32 1.0, %v1960
  %v1962 = vtanh.pop %v1942
  %v1963 = vmul.f32 %v1961, %v1873
  %1965 = vrot.lane.b32.xlu0 %v1962, 64
  %v1966 = vpop.permute.xlu0 %1965
  %v1968 = vmul.f32 %v1961, %v1966
  %1970 = vrot.lane.b32.xlu0 %v1968, 32
  %v1971 = vpop.permute.xlu0 %1970
  %v1973 = vadd.f32 %v1963, %v1971
  %v1974 = vtanh.pop %v1973
  %1976 = vrot.lane.b32.xlu0 %v1974, 64
  %v1977 = vpop.permute.xlu0 %1976
  %v1979 = vmul.f32 %v1961, %v1977
  %1981 = vrot.lane.b32.xlu0 %v1979, 32
  %v1982 = vpop.permute.xlu0 %1981
  %v1983 = vsel %vm166, %v1982, 0
  %1985 = vmatpush.msra.mxu0 0.0
  %1986 = vmatpush.msra.mxu0 0.0
  %1987 = vmatpush.msra.mxu0 0.0
  %1988 = vmatpush.msra.mxu0 0.0
  %1989 = vmatpush.msra.mxu0 0.0
  %1990 = vmatpush.msra.mxu0 0.0
  %1991 = vmatpush.msra.mxu0 0.0
  %1992 = vmatpush.msra.mxu0 0.0
  %1993 = vmatpush.msra.mxu0 0.0
  %1994 = vmatpush.msra.mxu0 0.0
  %1995 = vmatpush.msra.mxu0 0.0
  %1996 = vmatpush.msra.mxu0 0.0
  %1997 = vmatpush.msra.mxu0 %v1809
  %1998 = vmatpush.msra.mxu0 %v1808
  %1999 = vmatpush.msra.mxu0 %v1807
  %2000 = vmatpush.msra.mxu0 %v1806
  %2001 = vmatmul.f32.gmra.mxu0 %v1983
  %v2002 = vpop.f32.mrf.mxu0
  %v2003 = vadd.f32 %v1881, %v2002
  %2004 = vdwg.mxu0
  %v2005 = vsel %vm164, %v2003, -inf
  %2006 = vmax.xlane.f32.xlu0 %v2005
  %v2007 = vpop.xlane.xlu0 %2006
  %v2008 = vsub.f32 %v2003, %v2007
  %v2009 = vmul.f32 %v2008, 1.442695
  %v2010 = vpow.pop %v2009
  %v2011 = vsel %vm164, %v2010, 0.0
  %2012 = vadd.xlane.f32.xlu0 %v2011
  %v2013 = vpop.xlane.xlu0 %2012
  %v2014 = vlog2.pop %v2013
  %v2015 = vmul.f32 %v2014, 0.6931472
  %v2016 = vadd.f32 %v2015, %v2007
  %v2017 = vsub.f32 %v2003, %v2016
  %2018 = vst.msk [vmem:[%s14 + $0x2] sm:$0x3] %vm164, %v2017
  %2019 = vmatpush.msra.mxu0 0.0
  %2020 = vmatpush.msra.mxu0 0.0
  %2021 = vmatpush.msra.mxu0 0.0
  %2022 = vmatpush.msra.mxu0 0.0
  %2023 = vmatpush.msra.mxu0 0.0
  %2024 = vmatpush.msra.mxu0 0.0
  %2025 = vmatpush.msra.mxu0 0.0
  %2026 = vmatpush.msra.mxu0 0.0
  %2027 = vmatpush.msra.mxu0 0.0
  %2028 = vmatpush.msra.mxu0 0.0
  %2029 = vmatpush.msra.mxu0 0.0
  %2030 = vmatpush.msra.mxu0 0.0
  %2031 = vmatpush.msra.mxu0 %v1805
  %2032 = vmatpush.msra.mxu0 %v1804
  %2033 = vmatpush.msra.mxu0 %v1803
  %2034 = vmatpush.msra.mxu0 %v1802
  %2035 = vmatmul.f32.gmra.mxu0 %v1983
  %v2036 = vpop.f32.mrf.mxu0
  %v2037 = vadd.f32 0.0, %v2036
  %2038 = vdwg.mxu0
  %v2039 = vadd.f32 %v631, %v2037
  %v2040 = vxor.u32 %v2039, 2147483648
  %v2041 = vmul.f32 %v2040, 1.442695
  %v2042 = vpow.pop %v2041
  %v2043 = vadd.f32 %v2042, 1.0
  %v2044 = vrcp.pop %v2043
  %v2045 = vmul.f32 %v2043, %v2044
  %v2046 = vsub.f32 1.0, %v2045
  %v2047 = vmul.f32 %v2044, %v2046
  %v2048 = vadd.f32 %v2044, %v2047
  %vm2049 = vweird.f32 %v2043
  %vm2050 = vweird.f32 %v2044
  %vm2051 = vmor %vm2049, %vm2050
  %v2052 = vsel %vm2051, %v2044, %v2048
  %v2053 = vand.u32 2147483647, %v2043
  %vm2054 = vcmp.eq.f32.partialorder %v2053, 8.507059e+37
  %v2055 = vand.u32 %v2043, 2147483648
  %v2056 = vor.u32 1.1754944e-38, %v2055
  %v2057 = vsel %vm2054, %v2056, %v2052
  %v2058 = vmul.f32 1.0, %v2057
  %v2059 = vtanh.pop %v2039
  %v2060 = vmul.f32 %v2058, %v1973
  %2062 = vrot.lane.b32.xlu0 %v2059, 64
  %v2063 = vpop.permute.xlu0 %2062
  %v2065 = vmul.f32 %v2058, %v2063
  %2067 = vrot.lane.b32.xlu0 %v2065, 32
  %v2068 = vpop.permute.xlu0 %2067
  %v2070 = vadd.f32 %v2060, %v2068
  %v2071 = vtanh.pop %v2070
  %2073 = vrot.lane.b32.xlu0 %v2071, 64
  %v2074 = vpop.permute.xlu0 %2073
  %v2076 = vmul.f32 %v2058, %v2074
  %2078 = vrot.lane.b32.xlu0 %v2076, 32
  %v2079 = vpop.permute.xlu0 %2078
  %v2080 = vsel %vm166, %v2079, 0
  %2082 = vmatpush.msra.mxu0 0.0
  %2083 = vmatpush.msra.mxu0 0.0
  %2084 = vmatpush.msra.mxu0 0.0
  %2085 = vmatpush.msra.mxu0 0.0
  %2086 = vmatpush.msra.mxu0 0.0
  %2087 = vmatpush.msra.mxu0 0.0
  %2088 = vmatpush.msra.mxu0 0.0
  %2089 = vmatpush.msra.mxu0 0.0
  %2090 = vmatpush.msra.mxu0 0.0
  %2091 = vmatpush.msra.mxu0 0.0
  %2092 = vmatpush.msra.mxu0 0.0
  %2093 = vmatpush.msra.mxu0 0.0
  %2094 = vmatpush.msra.mxu0 %v1809
  %2095 = vmatpush.msra.mxu0 %v1808
  %2096 = vmatpush.msra.mxu0 %v1807
  %2097 = vmatpush.msra.mxu0 %v1806
  %2098 = vmatmul.f32.gmra.mxu0 %v2080
  %v2099 = vpop.f32.mrf.mxu0
  %v2100 = vadd.f32 %v1881, %v2099
  %2101 = vdwg.mxu0
  %v2102 = vsel %vm164, %v2100, -inf
  %2103 = vmax.xlane.f32.xlu0 %v2102
  %v2104 = vpop.xlane.xlu0 %2103
  %v2105 = vsub.f32 %v2100, %v2104
  %v2106 = vmul.f32 %v2105, 1.442695
  %v2107 = vpow.pop %v2106
  %v2108 = vsel %vm164, %v2107, 0.0
  %2109 = vadd.xlane.f32.xlu0 %v2108
  %v2110 = vpop.xlane.xlu0 %2109
  %v2111 = vlog2.pop %v2110
  %v2112 = vmul.f32 %v2111, 0.6931472
  %v2113 = vadd.f32 %v2112, %v2104
  %v2114 = vsub.f32 %v2100, %v2113
  %2115 = vst.msk [vmem:[%s14 + $0x4] sm:$0x3] %vm164, %v2114
  %2116 = vmatpush.msra.mxu0 0.0
  %2117 = vmatpush.msra.mxu0 0.0
  %2118 = vmatpush.msra.mxu0 0.0
  %2119 = vmatpush.msra.mxu0 0.0
  %2120 = vmatpush.msra.mxu0 0.0
  %2121 = vmatpush.msra.mxu0 0.0
  %2122 = vmatpush.msra.mxu0 0.0
  %2123 = vmatpush.msra.mxu0 0.0
  %2124 = vmatpush.msra.mxu0 0.0
  %2125 = vmatpush.msra.mxu0 0.0
  %2126 = vmatpush.msra.mxu0 0.0
  %2127 = vmatpush.msra.mxu0 0.0
  %2128 = vmatpush.msra.mxu0 %v1805
  %2129 = vmatpush.msra.mxu0 %v1804
  %2130 = vmatpush.msra.mxu0 %v1803
  %2131 = vmatpush.msra.mxu0 %v1802
  %2132 = vmatmul.f32.gmra.mxu0 %v2080
  %v2133 = vpop.f32.mrf.mxu0
  %v2134 = vadd.f32 0.0, %v2133
  %2135 = vdwg.mxu0
  %v2136 = vadd.f32 %v721, %v2134
  %v2137 = vxor.u32 %v2136, 2147483648
  %v2138 = vmul.f32 %v2137, 1.442695
  %v2139 = vpow.pop %v2138
  %v2140 = vadd.f32 %v2139, 1.0
  %v2141 = vrcp.pop %v2140
  %v2142 = vmul.f32 %v2140, %v2141
  %v2143 = vsub.f32 1.0, %v2142
  %v2144 = vmul.f32 %v2141, %v2143
  %v2145 = vadd.f32 %v2141, %v2144
  %vm2146 = vweird.f32 %v2140
  %vm2147 = vweird.f32 %v2141
  %vm2148 = vmor %vm2146, %vm2147
  %v2149 = vsel %vm2148, %v2141, %v2145
  %v2150 = vand.u32 2147483647, %v2140
  %vm2151 = vcmp.eq.f32.partialorder %v2150, 8.507059e+37
  %v2152 = vand.u32 %v2140, 2147483648
  %v2153 = vor.u32 1.1754944e-38, %v2152
  %v2154 = vsel %vm2151, %v2153, %v2149
  %v2155 = vmul.f32 1.0, %v2154
  %v2156 = vtanh.pop %v2136
  %v2157 = vmul.f32 %v2155, %v2070
  %2159 = vrot.lane.b32.xlu0 %v2156, 64
  %v2160 = vpop.permute.xlu0 %2159
  %v2162 = vmul.f32 %v2155, %v2160
  %2164 = vrot.lane.b32.xlu0 %v2162, 32
  %v2165 = vpop.permute.xlu0 %2164
  %v2167 = vadd.f32 %v2157, %v2165
  %v2168 = vtanh.pop %v2167
  %2170 = vrot.lane.b32.xlu0 %v2168, 64
  %v2171 = vpop.permute.xlu0 %2170
  %v2173 = vmul.f32 %v2155, %v2171
  %2175 = vrot.lane.b32.xlu0 %v2173, 32
  %v2176 = vpop.permute.xlu0 %2175
  %v2177 = vsel %vm166, %v2176, 0
  %2179 = vmatpush.msra.mxu0 0.0
  %2180 = vmatpush.msra.mxu0 0.0
  %2181 = vmatpush.msra.mxu0 0.0
  %2182 = vmatpush.msra.mxu0 0.0
  %2183 = vmatpush.msra.mxu0 0.0
  %2184 = vmatpush.msra.mxu0 0.0
  %2185 = vmatpush.msra.mxu0 0.0
  %2186 = vmatpush.msra.mxu0 0.0
  %2187 = vmatpush.msra.mxu0 0.0
  %2188 = vmatpush.msra.mxu0 0.0
  %2189 = vmatpush.msra.mxu0 0.0
  %2190 = vmatpush.msra.mxu0 0.0
  %2191 = vmatpush.msra.mxu0 %v1809
  %2192 = vmatpush.msra.mxu0 %v1808
  %2193 = vmatpush.msra.mxu0 %v1807
  %2194 = vmatpush.msra.mxu0 %v1806
  %2195 = vmatmul.f32.gmra.mxu0 %v2177
  %v2196 = vpop.f32.mrf.mxu0
  %v2197 = vadd.f32 %v1881, %v2196
  %2198 = vdwg.mxu0
  %v2199 = vsel %vm164, %v2197, -inf
  %2200 = vmax.xlane.f32.xlu0 %v2199
  %v2201 = vpop.xlane.xlu0 %2200
  %v2202 = vsub.f32 %v2197, %v2201
  %v2203 = vmul.f32 %v2202, 1.442695
  %v2204 = vpow.pop %v2203
  %v2205 = vsel %vm164, %v2204, 0.0
  %2206 = vadd.xlane.f32.xlu0 %v2205
  %v2207 = vpop.xlane.xlu0 %2206
  %v2208 = vlog2.pop %v2207
  %v2209 = vmul.f32 %v2208, 0.6931472
  %v2210 = vadd.f32 %v2209, %v2201
  %v2211 = vsub.f32 %v2197, %v2210
  %2212 = vst.msk [vmem:[%s14 + $0x6] sm:$0x3] %vm164, %v2211
  %2213 = vmatpush.msra.mxu0 0.0
  %2214 = vmatpush.msra.mxu0 0.0
  %2215 = vmatpush.msra.mxu0 0.0
  %2216 = vmatpush.msra.mxu0 0.0
  %2217 = vmatpush.msra.mxu0 0.0
  %2218 = vmatpush.msra.mxu0 0.0
  %2219 = vmatpush.msra.mxu0 0.0
  %2220 = vmatpush.msra.mxu0 0.0
  %2221 = vmatpush.msra.mxu0 0.0
  %2222 = vmatpush.msra.mxu0 0.0
  %2223 = vmatpush.msra.mxu0 0.0
  %2224 = vmatpush.msra.mxu0 0.0
  %2225 = vmatpush.msra.mxu0 %v1805
  %2226 = vmatpush.msra.mxu0 %v1804
  %2227 = vmatpush.msra.mxu0 %v1803
  %2228 = vmatpush.msra.mxu0 %v1802
  %2229 = vmatmul.f32.gmra.mxu0 %v2177
  %v2230 = vpop.f32.mrf.mxu0
  %v2231 = vadd.f32 0.0, %v2230
  %2232 = vdwg.mxu0
  %v2233 = vadd.f32 %v807, %v2231
  %v2234 = vxor.u32 %v2233, 2147483648
  %v2235 = vmul.f32 %v2234, 1.442695
  %v2236 = vpow.pop %v2235
  %v2237 = vadd.f32 %v2236, 1.0
  %v2238 = vrcp.pop %v2237
  %v2239 = vmul.f32 %v2237, %v2238
  %v2240 = vsub.f32 1.0, %v2239
  %v2241 = vmul.f32 %v2238, %v2240
  %v2242 = vadd.f32 %v2238, %v2241
  %vm2243 = vweird.f32 %v2237
  %vm2244 = vweird.f32 %v2238
  %vm2245 = vmor %vm2243, %vm2244
  %v2246 = vsel %vm2245, %v2238, %v2242
  %v2247 = vand.u32 2147483647, %v2237
  %vm2248 = vcmp.eq.f32.partialorder %v2247, 8.507059e+37
  %v2249 = vand.u32 %v2237, 2147483648
  %v2250 = vor.u32 1.1754944e-38, %v2249
  %v2251 = vsel %vm2248, %v2250, %v2246
  %v2252 = vmul.f32 1.0, %v2251
  %v2253 = vtanh.pop %v2233
  %v2254 = vmul.f32 %v2252, %v2167
  %2256 = vrot.lane.b32.xlu0 %v2253, 64
  %v2257 = vpop.permute.xlu0 %2256
  %v2259 = vmul.f32 %v2252, %v2257
  %2261 = vrot.lane.b32.xlu0 %v2259, 32
  %v2262 = vpop.permute.xlu0 %2261
  %v2264 = vadd.f32 %v2254, %v2262
  %v2265 = vtanh.pop %v2264
  %2267 = vrot.lane.b32.xlu0 %v2265, 64
  %v2268 = vpop.permute.xlu0 %2267
  %v2270 = vmul.f32 %v2252, %v2268
  %2272 = vrot.lane.b32.xlu0 %v2270, 32
  %v2273 = vpop.permute.xlu0 %2272
  %v2274 = vsel %vm166, %v2273, 0
  %2276 = vmatpush.msra.mxu0 0.0
  %2277 = vmatpush.msra.mxu0 0.0
  %2278 = vmatpush.msra.mxu0 0.0
  %2279 = vmatpush.msra.mxu0 0.0
  %2280 = vmatpush.msra.mxu0 0.0
  %2281 = vmatpush.msra.mxu0 0.0
  %2282 = vmatpush.msra.mxu0 0.0
  %2283 = vmatpush.msra.mxu0 0.0
  %2284 = vmatpush.msra.mxu0 0.0
  %2285 = vmatpush.msra.mxu0 0.0
  %2286 = vmatpush.msra.mxu0 0.0
  %2287 = vmatpush.msra.mxu0 0.0
  %2288 = vmatpush.msra.mxu0 %v1809
  %2289 = vmatpush.msra.mxu0 %v1808
  %2290 = vmatpush.msra.mxu0 %v1807
  %2291 = vmatpush.msra.mxu0 %v1806
  %2292 = vmatmul.f32.gmra.mxu0 %v2274
  %v2293 = vpop.f32.mrf.mxu0
  %v2294 = vadd.f32 %v1881, %v2293
  %2295 = vdwg.mxu0
  %v2296 = vsel %vm164, %v2294, -inf
  %2297 = vmax.xlane.f32.xlu0 %v2296
  %v2298 = vpop.xlane.xlu0 %2297
  %v2299 = vsub.f32 %v2294, %v2298
  %v2300 = vmul.f32 %v2299, 1.442695
  %v2301 = vpow.pop %v2300
  %v2302 = vsel %vm164, %v2301, 0.0
  %2303 = vadd.xlane.f32.xlu0 %v2302
  %v2304 = vpop.xlane.xlu0 %2303
  %v2305 = vlog2.pop %v2304
  %v2306 = vmul.f32 %v2305, 0.6931472
  %v2307 = vadd.f32 %v2306, %v2298
  %v2308 = vsub.f32 %v2294, %v2307
  %2309 = vst.msk [vmem:[%s14 + $0x8] sm:$0x3] %vm164, %v2308
  %2310 = vmatpush.msra.mxu0 0.0
  %2311 = vmatpush.msra.mxu0 0.0
  %2312 = vmatpush.msra.mxu0 0.0
  %2313 = vmatpush.msra.mxu0 0.0
  %2314 = vmatpush.msra.mxu0 0.0
  %2315 = vmatpush.msra.mxu0 0.0
  %2316 = vmatpush.msra.mxu0 0.0
  %2317 = vmatpush.msra.mxu0 0.0
  %2318 = vmatpush.msra.mxu0 0.0
  %2319 = vmatpush.msra.mxu0 0.0
  %2320 = vmatpush.msra.mxu0 0.0
  %2321 = vmatpush.msra.mxu0 0.0
  %2322 = vmatpush.msra.mxu0 %v1805
  %2323 = vmatpush.msra.mxu0 %v1804
  %2324 = vmatpush.msra.mxu0 %v1803
  %2325 = vmatpush.msra.mxu0 %v1802
  %2326 = vmatmul.f32.gmra.mxu0 %v2274
  %v2327 = vpop.f32.mrf.mxu0
  %v2328 = vadd.f32 0.0, %v2327
  %2329 = vdwg.mxu0
  %v2330 = vadd.f32 %v897, %v2328
  %v2331 = vxor.u32 %v2330, 2147483648
  %v2332 = vmul.f32 %v2331, 1.442695
  %v2333 = vpow.pop %v2332
  %v2334 = vadd.f32 %v2333, 1.0
  %v2335 = vrcp.pop %v2334
  %v2336 = vmul.f32 %v2334, %v2335
  %v2337 = vsub.f32 1.0, %v2336
  %v2338 = vmul.f32 %v2335, %v2337
  %v2339 = vadd.f32 %v2335, %v2338
  %vm2340 = vweird.f32 %v2334
  %vm2341 = vweird.f32 %v2335
  %vm2342 = vmor %vm2340, %vm2341
  %v2343 = vsel %vm2342, %v2335, %v2339
  %v2344 = vand.u32 2147483647, %v2334
  %vm2345 = vcmp.eq.f32.partialorder %v2344, 8.507059e+37
  %v2346 = vand.u32 %v2334, 2147483648
  %v2347 = vor.u32 1.1754944e-38, %v2346
  %v2348 = vsel %vm2345, %v2347, %v2343
  %v2349 = vmul.f32 1.0, %v2348
  %v2350 = vtanh.pop %v2330
  %v2351 = vmul.f32 %v2349, %v2264
  %2353 = vrot.lane.b32.xlu0 %v2350, 64
  %v2354 = vpop.permute.xlu0 %2353
  %v2356 = vmul.f32 %v2349, %v2354
  %2358 = vrot.lane.b32.xlu0 %v2356, 32
  %v2359 = vpop.permute.xlu0 %2358
  %v2361 = vadd.f32 %v2351, %v2359
  %v2362 = vtanh.pop %v2361
  %2364 = vrot.lane.b32.xlu0 %v2362, 64
  %v2365 = vpop.permute.xlu0 %2364
  %v2367 = vmul.f32 %v2349, %v2365
  %2369 = vrot.lane.b32.xlu0 %v2367, 32
  %v2370 = vpop.permute.xlu0 %2369
  %v2371 = vsel %vm166, %v2370, 0
  %2373 = vmatpush.msra.mxu0 0.0
  %2374 = vmatpush.msra.mxu0 0.0
  %2375 = vmatpush.msra.mxu0 0.0
  %2376 = vmatpush.msra.mxu0 0.0
  %2377 = vmatpush.msra.mxu0 0.0
  %2378 = vmatpush.msra.mxu0 0.0
  %2379 = vmatpush.msra.mxu0 0.0
  %2380 = vmatpush.msra.mxu0 0.0
  %2381 = vmatpush.msra.mxu0 0.0
  %2382 = vmatpush.msra.mxu0 0.0
  %2383 = vmatpush.msra.mxu0 0.0
  %2384 = vmatpush.msra.mxu0 0.0
  %2385 = vmatpush.msra.mxu0 %v1809
  %2386 = vmatpush.msra.mxu0 %v1808
  %2387 = vmatpush.msra.mxu0 %v1807
  %2388 = vmatpush.msra.mxu0 %v1806
  %2389 = vmatmul.f32.gmra.mxu0 %v2371
  %v2390 = vpop.f32.mrf.mxu0
  %v2391 = vadd.f32 %v1881, %v2390
  %2392 = vdwg.mxu0
  %v2393 = vsel %vm164, %v2391, -inf
  %2394 = vmax.xlane.f32.xlu0 %v2393
  %v2395 = vpop.xlane.xlu0 %2394
  %v2396 = vsub.f32 %v2391, %v2395
  %v2397 = vmul.f32 %v2396, 1.442695
  %v2398 = vpow.pop %v2397
  %v2399 = vsel %vm164, %v2398, 0.0
  %2400 = vadd.xlane.f32.xlu0 %v2399
  %v2401 = vpop.xlane.xlu0 %2400
  %v2402 = vlog2.pop %v2401
  %v2403 = vmul.f32 %v2402, 0.6931472
  %v2404 = vadd.f32 %v2403, %v2395
  %v2405 = vsub.f32 %v2391, %v2404
  %2406 = vst.msk [vmem:[%s14 + $0xa] sm:$0x3] %vm164, %v2405
  %2407 = vmatpush.msra.mxu0 0.0
  %2408 = vmatpush.msra.mxu0 0.0
  %2409 = vmatpush.msra.mxu0 0.0
  %2410 = vmatpush.msra.mxu0 0.0
  %2411 = vmatpush.msra.mxu0 0.0
  %2412 = vmatpush.msra.mxu0 0.0
  %2413 = vmatpush.msra.mxu0 0.0
  %2414 = vmatpush.msra.mxu0 0.0
  %2415 = vmatpush.msra.mxu0 0.0
  %2416 = vmatpush.msra.mxu0 0.0
  %2417 = vmatpush.msra.mxu0 0.0
  %2418 = vmatpush.msra.mxu0 0.0
  %2419 = vmatpush.msra.mxu0 %v1805
  %2420 = vmatpush.msra.mxu0 %v1804
  %2421 = vmatpush.msra.mxu0 %v1803
  %2422 = vmatpush.msra.mxu0 %v1802
  %2423 = vmatmul.f32.gmra.mxu0 %v2371
  %v2424 = vpop.f32.mrf.mxu0
  %v2425 = vadd.f32 0.0, %v2424
  %2426 = vdwg.mxu0
  %v2427 = vadd.f32 %v987, %v2425
  %v2428 = vxor.u32 %v2427, 2147483648
  %v2429 = vmul.f32 %v2428, 1.442695
  %v2430 = vpow.pop %v2429
  %v2431 = vadd.f32 %v2430, 1.0
  %v2432 = vrcp.pop %v2431
  %v2433 = vmul.f32 %v2431, %v2432
  %v2434 = vsub.f32 1.0, %v2433
  %v2435 = vmul.f32 %v2432, %v2434
  %v2436 = vadd.f32 %v2432, %v2435
  %vm2437 = vweird.f32 %v2431
  %vm2438 = vweird.f32 %v2432
  %vm2439 = vmor %vm2437, %vm2438
  %v2440 = vsel %vm2439, %v2432, %v2436
  %v2441 = vand.u32 2147483647, %v2431
  %vm2442 = vcmp.eq.f32.partialorder %v2441, 8.507059e+37
  %v2443 = vand.u32 %v2431, 2147483648
  %v2444 = vor.u32 1.1754944e-38, %v2443
  %v2445 = vsel %vm2442, %v2444, %v2440
  %v2446 = vmul.f32 1.0, %v2445
  %v2447 = vtanh.pop %v2427
  %v2448 = vmul.f32 %v2446, %v2361
  %2450 = vrot.lane.b32.xlu0 %v2447, 64
  %v2451 = vpop.permute.xlu0 %2450
  %v2453 = vmul.f32 %v2446, %v2451
  %2455 = vrot.lane.b32.xlu0 %v2453, 32
  %v2456 = vpop.permute.xlu0 %2455
  %v2458 = vadd.f32 %v2448, %v2456
  %v2459 = vtanh.pop %v2458
  %2461 = vrot.lane.b32.xlu0 %v2459, 64
  %v2462 = vpop.permute.xlu0 %2461
  %v2464 = vmul.f32 %v2446, %v2462
  %2466 = vrot.lane.b32.xlu0 %v2464, 32
  %v2467 = vpop.permute.xlu0 %2466
  %v2468 = vsel %vm166, %v2467, 0
  %2470 = vmatpush.msra.mxu0 0.0
  %2471 = vmatpush.msra.mxu0 0.0
  %2472 = vmatpush.msra.mxu0 0.0
  %2473 = vmatpush.msra.mxu0 0.0
  %2474 = vmatpush.msra.mxu0 0.0
  %2475 = vmatpush.msra.mxu0 0.0
  %2476 = vmatpush.msra.mxu0 0.0
  %2477 = vmatpush.msra.mxu0 0.0
  %2478 = vmatpush.msra.mxu0 0.0
  %2479 = vmatpush.msra.mxu0 0.0
  %2480 = vmatpush.msra.mxu0 0.0
  %2481 = vmatpush.msra.mxu0 0.0
  %2482 = vmatpush.msra.mxu0 %v1809
  %2483 = vmatpush.msra.mxu0 %v1808
  %2484 = vmatpush.msra.mxu0 %v1807
  %2485 = vmatpush.msra.mxu0 %v1806
  %2486 = vmatmul.f32.gmra.mxu0 %v2468
  %v2487 = vpop.f32.mrf.mxu0
  %v2488 = vadd.f32 %v1881, %v2487
  %2489 = vdwg.mxu0
  %v2490 = vsel %vm164, %v2488, -inf
  %2491 = vmax.xlane.f32.xlu0 %v2490
  %v2492 = vpop.xlane.xlu0 %2491
  %v2493 = vsub.f32 %v2488, %v2492
  %v2494 = vmul.f32 %v2493, 1.442695
  %v2495 = vpow.pop %v2494
  %v2496 = vsel %vm164, %v2495, 0.0
  %2497 = vadd.xlane.f32.xlu0 %v2496
  %v2498 = vpop.xlane.xlu0 %2497
  %v2499 = vlog2.pop %v2498
  %v2500 = vmul.f32 %v2499, 0.6931472
  %v2501 = vadd.f32 %v2500, %v2492
  %v2502 = vsub.f32 %v2488, %v2501
  %2503 = vst.msk [vmem:[%s14 + $0xc] sm:$0x3] %vm164, %v2502
  %2504 = vmatpush.msra.mxu0 0.0
  %2505 = vmatpush.msra.mxu0 0.0
  %2506 = vmatpush.msra.mxu0 0.0
  %2507 = vmatpush.msra.mxu0 0.0
  %2508 = vmatpush.msra.mxu0 0.0
  %2509 = vmatpush.msra.mxu0 0.0
  %2510 = vmatpush.msra.mxu0 0.0
  %2511 = vmatpush.msra.mxu0 0.0
  %2512 = vmatpush.msra.mxu0 0.0
  %2513 = vmatpush.msra.mxu0 0.0
  %2514 = vmatpush.msra.mxu0 0.0
  %2515 = vmatpush.msra.mxu0 0.0
  %2516 = vmatpush.msra.mxu0 %v1805
  %2517 = vmatpush.msra.mxu0 %v1804
  %2518 = vmatpush.msra.mxu0 %v1803
  %2519 = vmatpush.msra.mxu0 %v1802
  %2520 = vmatmul.f32.gmra.mxu0 %v2468
  %v2521 = vpop.f32.mrf.mxu0
  %v2522 = vadd.f32 0.0, %v2521
  %2523 = vdwg.mxu0
  %v2524 = vadd.f32 %v1077, %v2522
  %v2525 = vxor.u32 %v2524, 2147483648
  %v2526 = vmul.f32 %v2525, 1.442695
  %v2527 = vpow.pop %v2526
  %v2528 = vadd.f32 %v2527, 1.0
  %v2529 = vrcp.pop %v2528
  %v2530 = vmul.f32 %v2528, %v2529
  %v2531 = vsub.f32 1.0, %v2530
  %v2532 = vmul.f32 %v2529, %v2531
  %v2533 = vadd.f32 %v2529, %v2532
  %vm2534 = vweird.f32 %v2528
  %vm2535 = vweird.f32 %v2529
  %vm2536 = vmor %vm2534, %vm2535
  %v2537 = vsel %vm2536, %v2529, %v2533
  %v2538 = vand.u32 2147483647, %v2528
  %vm2539 = vcmp.eq.f32.partialorder %v2538, 8.507059e+37
  %v2540 = vand.u32 %v2528, 2147483648
  %v2541 = vor.u32 1.1754944e-38, %v2540
  %v2542 = vsel %vm2539, %v2541, %v2537
  %v2543 = vmul.f32 1.0, %v2542
  %v2544 = vtanh.pop %v2524
  %v2545 = vmul.f32 %v2543, %v2458
  %2547 = vrot.lane.b32.xlu0 %v2544, 64
  %v2548 = vpop.permute.xlu0 %2547
  %v2550 = vmul.f32 %v2543, %v2548
  %2552 = vrot.lane.b32.xlu0 %v2550, 32
  %v2553 = vpop.permute.xlu0 %2552
  %v2555 = vadd.f32 %v2545, %v2553
  %v2556 = vtanh.pop %v2555
  %2558 = vrot.lane.b32.xlu0 %v2556, 64
  %v2559 = vpop.permute.xlu0 %2558
  %v2561 = vmul.f32 %v2543, %v2559
  %2563 = vrot.lane.b32.xlu0 %v2561, 32
  %v2564 = vpop.permute.xlu0 %2563
  %v2565 = vsel %vm166, %v2564, 0
  %2567 = vmatpush.msra.mxu0 0.0
  %2568 = vmatpush.msra.mxu0 0.0
  %2569 = vmatpush.msra.mxu0 0.0
  %2570 = vmatpush.msra.mxu0 0.0
  %2571 = vmatpush.msra.mxu0 0.0
  %2572 = vmatpush.msra.mxu0 0.0
  %2573 = vmatpush.msra.mxu0 0.0
  %2574 = vmatpush.msra.mxu0 0.0
  %2575 = vmatpush.msra.mxu0 0.0
  %2576 = vmatpush.msra.mxu0 0.0
  %2577 = vmatpush.msra.mxu0 0.0
  %2578 = vmatpush.msra.mxu0 0.0
  %2579 = vmatpush.msra.mxu0 %v1809
  %2580 = vmatpush.msra.mxu0 %v1808
  %2581 = vmatpush.msra.mxu0 %v1807
  %2582 = vmatpush.msra.mxu0 %v1806
  %2583 = vmatmul.f32.gmra.mxu0 %v2565
  %v2584 = vpop.f32.mrf.mxu0
  %v2585 = vadd.f32 %v1881, %v2584
  %2586 = vdwg.mxu0
  %v2587 = vsel %vm164, %v2585, -inf
  %2588 = vmax.xlane.f32.xlu0 %v2587
  %v2589 = vpop.xlane.xlu0 %2588
  %v2590 = vsub.f32 %v2585, %v2589
  %v2591 = vmul.f32 %v2590, 1.442695
  %v2592 = vpow.pop %v2591
  %v2593 = vsel %vm164, %v2592, 0.0
  %2594 = vadd.xlane.f32.xlu0 %v2593
  %v2595 = vpop.xlane.xlu0 %2594
  %v2596 = vlog2.pop %v2595
  %v2597 = vmul.f32 %v2596, 0.6931472
  %v2598 = vadd.f32 %v2597, %v2589
  %v2599 = vsub.f32 %v2585, %v2598
  %2600 = vst.msk [vmem:[%s14 + $0xe] sm:$0x3] %vm164, %v2599
  %2601 = vmatpush.msra.mxu0 0.0
  %2602 = vmatpush.msra.mxu0 0.0
  %2603 = vmatpush.msra.mxu0 0.0
  %2604 = vmatpush.msra.mxu0 0.0
  %2605 = vmatpush.msra.mxu0 0.0
  %2606 = vmatpush.msra.mxu0 0.0
  %2607 = vmatpush.msra.mxu0 0.0
  %2608 = vmatpush.msra.mxu0 0.0
  %2609 = vmatpush.msra.mxu0 0.0
  %2610 = vmatpush.msra.mxu0 0.0
  %2611 = vmatpush.msra.mxu0 0.0
  %2612 = vmatpush.msra.mxu0 0.0
  %2613 = vmatpush.msra.mxu0 %v1805
  %2614 = vmatpush.msra.mxu0 %v1804
  %2615 = vmatpush.msra.mxu0 %v1803
  %2616 = vmatpush.msra.mxu0 %v1802
  %2617 = vmatmul.f32.gmra.mxu0 %v2565
  %v2618 = vpop.f32.mrf.mxu0
  %v2619 = vadd.f32 0.0, %v2618
  %2620 = vdwg.mxu0
  %v2621 = vadd.f32 %v1163, %v2619
  %v2622 = vxor.u32 %v2621, 2147483648
  %v2623 = vmul.f32 %v2622, 1.442695
  %v2624 = vpow.pop %v2623
  %v2625 = vadd.f32 %v2624, 1.0
  %v2626 = vrcp.pop %v2625
  %v2627 = vmul.f32 %v2625, %v2626
  %v2628 = vsub.f32 1.0, %v2627
  %v2629 = vmul.f32 %v2626, %v2628
  %v2630 = vadd.f32 %v2626, %v2629
  %vm2631 = vweird.f32 %v2625
  %vm2632 = vweird.f32 %v2626
  %vm2633 = vmor %vm2631, %vm2632
  %v2634 = vsel %vm2633, %v2626, %v2630
  %v2635 = vand.u32 2147483647, %v2625
  %vm2636 = vcmp.eq.f32.partialorder %v2635, 8.507059e+37
  %v2637 = vand.u32 %v2625, 2147483648
  %v2638 = vor.u32 1.1754944e-38, %v2637
  %v2639 = vsel %vm2636, %v2638, %v2634
  %v2640 = vmul.f32 1.0, %v2639
  %v2641 = vtanh.pop %v2621
  %v2642 = vmul.f32 %v2640, %v2555
  %2644 = vrot.lane.b32.xlu0 %v2641, 64
  %v2645 = vpop.permute.xlu0 %2644
  %v2647 = vmul.f32 %v2640, %v2645
  %2649 = vrot.lane.b32.xlu0 %v2647, 32
  %v2650 = vpop.permute.xlu0 %2649
  %v2652 = vadd.f32 %v2642, %v2650
  %v2653 = vtanh.pop %v2652
  %2655 = vrot.lane.b32.xlu0 %v2653, 64
  %v2656 = vpop.permute.xlu0 %2655
  %v2658 = vmul.f32 %v2640, %v2656
  %2660 = vrot.lane.b32.xlu0 %v2658, 32
  %v2661 = vpop.permute.xlu0 %2660
  %v2662 = vsel %vm166, %v2661, 0
  %2664 = vmatpush.msra.mxu0 0.0
  %2665 = vmatpush.msra.mxu0 0.0
  %2666 = vmatpush.msra.mxu0 0.0
  %2667 = vmatpush.msra.mxu0 0.0
  %2668 = vmatpush.msra.mxu0 0.0
  %2669 = vmatpush.msra.mxu0 0.0
  %2670 = vmatpush.msra.mxu0 0.0
  %2671 = vmatpush.msra.mxu0 0.0
  %2672 = vmatpush.msra.mxu0 0.0
  %2673 = vmatpush.msra.mxu0 0.0
  %2674 = vmatpush.msra.mxu0 0.0
  %2675 = vmatpush.msra.mxu0 0.0
  %2676 = vmatpush.msra.mxu0 %v1809
  %2677 = vmatpush.msra.mxu0 %v1808
  %2678 = vmatpush.msra.mxu0 %v1807
  %2679 = vmatpush.msra.mxu0 %v1806
  %2680 = vmatmul.f32.gmra.mxu0 %v2662
  %v2681 = vpop.f32.mrf.mxu0
  %v2682 = vadd.f32 %v1881, %v2681
  %2683 = vdwg.mxu0
  %v2684 = vsel %vm164, %v2682, -inf
  %2685 = vmax.xlane.f32.xlu0 %v2684
  %v2686 = vpop.xlane.xlu0 %2685
  %v2687 = vsub.f32 %v2682, %v2686
  %v2688 = vmul.f32 %v2687, 1.442695
  %v2689 = vpow.pop %v2688
  %v2690 = vsel %vm164, %v2689, 0.0
  %2691 = vadd.xlane.f32.xlu0 %v2690
  %v2692 = vpop.xlane.xlu0 %2691
  %v2693 = vlog2.pop %v2692
  %v2694 = vmul.f32 %v2693, 0.6931472
  %v2695 = vadd.f32 %v2694, %v2686
  %v2696 = vsub.f32 %v2682, %v2695
  %2697 = vst.msk [vmem:[%s14 + $0x10] sm:$0x3] %vm164, %v2696
  %2698 = vmatpush.msra.mxu0 0.0
  %2699 = vmatpush.msra.mxu0 0.0
  %2700 = vmatpush.msra.mxu0 0.0
  %2701 = vmatpush.msra.mxu0 0.0
  %2702 = vmatpush.msra.mxu0 0.0
  %2703 = vmatpush.msra.mxu0 0.0
  %2704 = vmatpush.msra.mxu0 0.0
  %2705 = vmatpush.msra.mxu0 0.0
  %2706 = vmatpush.msra.mxu0 0.0
  %2707 = vmatpush.msra.mxu0 0.0
  %2708 = vmatpush.msra.mxu0 0.0
  %2709 = vmatpush.msra.mxu0 0.0
  %2710 = vmatpush.msra.mxu0 %v1805
  %2711 = vmatpush.msra.mxu0 %v1804
  %2712 = vmatpush.msra.mxu0 %v1803
  %2713 = vmatpush.msra.mxu0 %v1802
  %2714 = vmatmul.f32.gmra.mxu0 %v2662
  %v2715 = vpop.f32.mrf.mxu0
  %v2716 = vadd.f32 0.0, %v2715
  %2717 = vdwg.mxu0
  %v2718 = vadd.f32 %v1253, %v2716
  %v2719 = vxor.u32 %v2718, 2147483648
  %v2720 = vmul.f32 %v2719, 1.442695
  %v2721 = vpow.pop %v2720
  %v2722 = vadd.f32 %v2721, 1.0
  %v2723 = vrcp.pop %v2722
  %v2724 = vmul.f32 %v2722, %v2723
  %v2725 = vsub.f32 1.0, %v2724
  %v2726 = vmul.f32 %v2723, %v2725
  %v2727 = vadd.f32 %v2723, %v2726
  %vm2728 = vweird.f32 %v2722
  %vm2729 = vweird.f32 %v2723
  %vm2730 = vmor %vm2728, %vm2729
  %v2731 = vsel %vm2730, %v2723, %v2727
  %v2732 = vand.u32 2147483647, %v2722
  %vm2733 = vcmp.eq.f32.partialorder %v2732, 8.507059e+37
  %v2734 = vand.u32 %v2722, 2147483648
  %v2735 = vor.u32 1.1754944e-38, %v2734
  %v2736 = vsel %vm2733, %v2735, %v2731
  %v2737 = vmul.f32 1.0, %v2736
  %v2738 = vtanh.pop %v2718
  %v2739 = vmul.f32 %v2737, %v2652
  %2741 = vrot.lane.b32.xlu0 %v2738, 64
  %v2742 = vpop.permute.xlu0 %2741
  %v2744 = vmul.f32 %v2737, %v2742
  %2746 = vrot.lane.b32.xlu0 %v2744, 32
  %v2747 = vpop.permute.xlu0 %2746
  %v2749 = vadd.f32 %v2739, %v2747
  %v2750 = vtanh.pop %v2749
  %2752 = vrot.lane.b32.xlu0 %v2750, 64
  %v2753 = vpop.permute.xlu0 %2752
  %v2755 = vmul.f32 %v2737, %v2753
  %2757 = vrot.lane.b32.xlu0 %v2755, 32
  %v2758 = vpop.permute.xlu0 %2757
  %v2759 = vsel %vm166, %v2758, 0
  %2761 = vmatpush.msra.mxu0 0.0
  %2762 = vmatpush.msra.mxu0 0.0
  %2763 = vmatpush.msra.mxu0 0.0
  %2764 = vmatpush.msra.mxu0 0.0
  %2765 = vmatpush.msra.mxu0 0.0
  %2766 = vmatpush.msra.mxu0 0.0
  %2767 = vmatpush.msra.mxu0 0.0
  %2768 = vmatpush.msra.mxu0 0.0
  %2769 = vmatpush.msra.mxu0 0.0
  %2770 = vmatpush.msra.mxu0 0.0
  %2771 = vmatpush.msra.mxu0 0.0
  %2772 = vmatpush.msra.mxu0 0.0
  %2773 = vmatpush.msra.mxu0 %v1809
  %2774 = vmatpush.msra.mxu0 %v1808
  %2775 = vmatpush.msra.mxu0 %v1807
  %2776 = vmatpush.msra.mxu0 %v1806
  %2777 = vmatmul.f32.gmra.mxu0 %v2759
  %v2778 = vpop.f32.mrf.mxu0
  %v2779 = vadd.f32 %v1881, %v2778
  %2780 = vdwg.mxu0
  %v2781 = vsel %vm164, %v2779, -inf
  %2782 = vmax.xlane.f32.xlu0 %v2781
  %v2783 = vpop.xlane.xlu0 %2782
  %v2784 = vsub.f32 %v2779, %v2783
  %v2785 = vmul.f32 %v2784, 1.442695
  %v2786 = vpow.pop %v2785
  %v2787 = vsel %vm164, %v2786, 0.0
  %2788 = vadd.xlane.f32.xlu0 %v2787
  %v2789 = vpop.xlane.xlu0 %2788
  %v2790 = vlog2.pop %v2789
  %v2791 = vmul.f32 %v2790, 0.6931472
  %v2792 = vadd.f32 %v2791, %v2783
  %v2793 = vsub.f32 %v2779, %v2792
  %2794 = vst.msk [vmem:[%s14 + $0x12] sm:$0x3] %vm164, %v2793
  %2795 = vmatpush.msra.mxu0 0.0
  %2796 = vmatpush.msra.mxu0 0.0
  %2797 = vmatpush.msra.mxu0 0.0
  %2798 = vmatpush.msra.mxu0 0.0
  %2799 = vmatpush.msra.mxu0 0.0
  %2800 = vmatpush.msra.mxu0 0.0
  %2801 = vmatpush.msra.mxu0 0.0
  %2802 = vmatpush.msra.mxu0 0.0
  %2803 = vmatpush.msra.mxu0 0.0
  %2804 = vmatpush.msra.mxu0 0.0
  %2805 = vmatpush.msra.mxu0 0.0
  %2806 = vmatpush.msra.mxu0 0.0
  %2807 = vmatpush.msra.mxu0 %v1805
  %2808 = vmatpush.msra.mxu0 %v1804
  %2809 = vmatpush.msra.mxu0 %v1803
  %2810 = vmatpush.msra.mxu0 %v1802
  %2811 = vmatmul.f32.gmra.mxu0 %v2759
  %v2812 = vpop.f32.mrf.mxu0
  %v2813 = vadd.f32 0.0, %v2812
  %2814 = vdwg.mxu0
  %v2815 = vadd.f32 %v1343, %v2813
  %v2816 = vxor.u32 %v2815, 2147483648
  %v2817 = vmul.f32 %v2816, 1.442695
  %v2818 = vpow.pop %v2817
  %v2819 = vadd.f32 %v2818, 1.0
  %v2820 = vrcp.pop %v2819
  %v2821 = vmul.f32 %v2819, %v2820
  %v2822 = vsub.f32 1.0, %v2821
  %v2823 = vmul.f32 %v2820, %v2822
  %v2824 = vadd.f32 %v2820, %v2823
  %vm2825 = vweird.f32 %v2819
  %vm2826 = vweird.f32 %v2820
  %vm2827 = vmor %vm2825, %vm2826
  %v2828 = vsel %vm2827, %v2820, %v2824
  %v2829 = vand.u32 2147483647, %v2819
  %vm2830 = vcmp.eq.f32.partialorder %v2829, 8.507059e+37
  %v2831 = vand.u32 %v2819, 2147483648
  %v2832 = vor.u32 1.1754944e-38, %v2831
  %v2833 = vsel %vm2830, %v2832, %v2828
  %v2834 = vmul.f32 1.0, %v2833
  %v2835 = vtanh.pop %v2815
  %v2836 = vmul.f32 %v2834, %v2749
  %2838 = vrot.lane.b32.xlu0 %v2835, 64
  %v2839 = vpop.permute.xlu0 %2838
  %v2841 = vmul.f32 %v2834, %v2839
  %2843 = vrot.lane.b32.xlu0 %v2841, 32
  %v2844 = vpop.permute.xlu0 %2843
  %v2846 = vadd.f32 %v2836, %v2844
  %v2847 = vtanh.pop %v2846
  %2849 = vrot.lane.b32.xlu0 %v2847, 64
  %v2850 = vpop.permute.xlu0 %2849
  %v2852 = vmul.f32 %v2834, %v2850
  %2854 = vrot.lane.b32.xlu0 %v2852, 32
  %v2855 = vpop.permute.xlu0 %2854
  %v2856 = vsel %vm166, %v2855, 0
  %2858 = vmatpush.msra.mxu0 0.0
  %2859 = vmatpush.msra.mxu0 0.0
  %2860 = vmatpush.msra.mxu0 0.0
  %2861 = vmatpush.msra.mxu0 0.0
  %2862 = vmatpush.msra.mxu0 0.0
  %2863 = vmatpush.msra.mxu0 0.0
  %2864 = vmatpush.msra.mxu0 0.0
  %2865 = vmatpush.msra.mxu0 0.0
  %2866 = vmatpush.msra.mxu0 0.0
  %2867 = vmatpush.msra.mxu0 0.0
  %2868 = vmatpush.msra.mxu0 0.0
  %2869 = vmatpush.msra.mxu0 0.0
  %2870 = vmatpush.msra.mxu0 %v1809
  %2871 = vmatpush.msra.mxu0 %v1808
  %2872 = vmatpush.msra.mxu0 %v1807
  %2873 = vmatpush.msra.mxu0 %v1806
  %2874 = vmatmul.f32.gmra.mxu0 %v2856
  %v2875 = vpop.f32.mrf.mxu0
  %v2876 = vadd.f32 %v1881, %v2875
  %2877 = vdwg.mxu0
  %v2878 = vsel %vm164, %v2876, -inf
  %2879 = vmax.xlane.f32.xlu0 %v2878
  %v2880 = vpop.xlane.xlu0 %2879
  %v2881 = vsub.f32 %v2876, %v2880
  %v2882 = vmul.f32 %v2881, 1.442695
  %v2883 = vpow.pop %v2882
  %v2884 = vsel %vm164, %v2883, 0.0
  %2885 = vadd.xlane.f32.xlu0 %v2884
  %v2886 = vpop.xlane.xlu0 %2885
  %v2887 = vlog2.pop %v2886
  %v2888 = vmul.f32 %v2887, 0.6931472
  %v2889 = vadd.f32 %v2888, %v2880
  %v2890 = vsub.f32 %v2876, %v2889
  %2891 = vst.msk [vmem:[%s14 + $0x14] sm:$0x3] %vm164, %v2890
  %2892 = vmatpush.msra.mxu0 0.0
  %2893 = vmatpush.msra.mxu0 0.0
  %2894 = vmatpush.msra.mxu0 0.0
  %2895 = vmatpush.msra.mxu0 0.0
  %2896 = vmatpush.msra.mxu0 0.0
  %2897 = vmatpush.msra.mxu0 0.0
  %2898 = vmatpush.msra.mxu0 0.0
  %2899 = vmatpush.msra.mxu0 0.0
  %2900 = vmatpush.msra.mxu0 0.0
  %2901 = vmatpush.msra.mxu0 0.0
  %2902 = vmatpush.msra.mxu0 0.0
  %2903 = vmatpush.msra.mxu0 0.0
  %2904 = vmatpush.msra.mxu0 %v1805
  %2905 = vmatpush.msra.mxu0 %v1804
  %2906 = vmatpush.msra.mxu0 %v1803
  %2907 = vmatpush.msra.mxu0 %v1802
  %2908 = vmatmul.f32.gmra.mxu0 %v2856
  %v2909 = vpop.f32.mrf.mxu0
  %v2910 = vadd.f32 0.0, %v2909
  %2911 = vdwg.mxu0
  %v2912 = vadd.f32 %v1433, %v2910
  %v2913 = vxor.u32 %v2912, 2147483648
  %v2914 = vmul.f32 %v2913, 1.442695
  %v2915 = vpow.pop %v2914
  %v2916 = vadd.f32 %v2915, 1.0
  %v2917 = vrcp.pop %v2916
  %v2918 = vmul.f32 %v2916, %v2917
  %v2919 = vsub.f32 1.0, %v2918
  %v2920 = vmul.f32 %v2917, %v2919
  %v2921 = vadd.f32 %v2917, %v2920
  %vm2922 = vweird.f32 %v2916
  %vm2923 = vweird.f32 %v2917
  %vm2924 = vmor %vm2922, %vm2923
  %v2925 = vsel %vm2924, %v2917, %v2921
  %v2926 = vand.u32 2147483647, %v2916
  %vm2927 = vcmp.eq.f32.partialorder %v2926, 8.507059e+37
  %v2928 = vand.u32 %v2916, 2147483648
  %v2929 = vor.u32 1.1754944e-38, %v2928
  %v2930 = vsel %vm2927, %v2929, %v2925
  %v2931 = vmul.f32 1.0, %v2930
  %v2932 = vtanh.pop %v2912
  %v2933 = vmul.f32 %v2931, %v2846
  %2935 = vrot.lane.b32.xlu0 %v2932, 64
  %v2936 = vpop.permute.xlu0 %2935
  %v2938 = vmul.f32 %v2931, %v2936
  %2940 = vrot.lane.b32.xlu0 %v2938, 32
  %v2941 = vpop.permute.xlu0 %2940
  %v2943 = vadd.f32 %v2933, %v2941
  %v2944 = vtanh.pop %v2943
  %2946 = vrot.lane.b32.xlu0 %v2944, 64
  %v2947 = vpop.permute.xlu0 %2946
  %v2949 = vmul.f32 %v2931, %v2947
  %2951 = vrot.lane.b32.xlu0 %v2949, 32
  %v2952 = vpop.permute.xlu0 %2951
  %v2953 = vsel %vm166, %v2952, 0
  %2955 = vmatpush.msra.mxu0 0.0
  %2956 = vmatpush.msra.mxu0 0.0
  %2957 = vmatpush.msra.mxu0 0.0
  %2958 = vmatpush.msra.mxu0 0.0
  %2959 = vmatpush.msra.mxu0 0.0
  %2960 = vmatpush.msra.mxu0 0.0
  %2961 = vmatpush.msra.mxu0 0.0
  %2962 = vmatpush.msra.mxu0 0.0
  %2963 = vmatpush.msra.mxu0 0.0
  %2964 = vmatpush.msra.mxu0 0.0
  %2965 = vmatpush.msra.mxu0 0.0
  %2966 = vmatpush.msra.mxu0 0.0
  %2967 = vmatpush.msra.mxu0 %v1809
  %2968 = vmatpush.msra.mxu0 %v1808
  %2969 = vmatpush.msra.mxu0 %v1807
  %2970 = vmatpush.msra.mxu0 %v1806
  %2971 = vmatmul.f32.gmra.mxu0 %v2953
  %v2972 = vpop.f32.mrf.mxu0
  %v2973 = vadd.f32 %v1881, %v2972
  %2974 = vdwg.mxu0
  %v2975 = vsel %vm164, %v2973, -inf
  %2976 = vmax.xlane.f32.xlu0 %v2975
  %v2977 = vpop.xlane.xlu0 %2976
  %v2978 = vsub.f32 %v2973, %v2977
  %v2979 = vmul.f32 %v2978, 1.442695
  %v2980 = vpow.pop %v2979
  %v2981 = vsel %vm164, %v2980, 0.0
  %2982 = vadd.xlane.f32.xlu0 %v2981
  %v2983 = vpop.xlane.xlu0 %2982
  %v2984 = vlog2.pop %v2983
  %v2985 = vmul.f32 %v2984, 0.6931472
  %v2986 = vadd.f32 %v2985, %v2977
  %v2987 = vsub.f32 %v2973, %v2986
  %2988 = vst.msk [vmem:[%s14 + $0x16] sm:$0x3] %vm164, %v2987
  %2989 = vmatpush.msra.mxu0 0.0
  %2990 = vmatpush.msra.mxu0 0.0
  %2991 = vmatpush.msra.mxu0 0.0
  %2992 = vmatpush.msra.mxu0 0.0
  %2993 = vmatpush.msra.mxu0 0.0
  %2994 = vmatpush.msra.mxu0 0.0
  %2995 = vmatpush.msra.mxu0 0.0
  %2996 = vmatpush.msra.mxu0 0.0
  %2997 = vmatpush.msra.mxu0 0.0
  %2998 = vmatpush.msra.mxu0 0.0
  %2999 = vmatpush.msra.mxu0 0.0
  %3000 = vmatpush.msra.mxu0 0.0
  %3001 = vmatpush.msra.mxu0 %v1805
  %3002 = vmatpush.msra.mxu0 %v1804
  %3003 = vmatpush.msra.mxu0 %v1803
  %3004 = vmatpush.msra.mxu0 %v1802
  %3005 = vmatmul.f32.gmra.mxu0 %v2953
  %v3006 = vpop.f32.mrf.mxu0
  %v3007 = vadd.f32 0.0, %v3006
  %3008 = vdwg.mxu0
  %v3009 = vadd.f32 %v1519, %v3007
  %v3010 = vxor.u32 %v3009, 2147483648
  %v3011 = vmul.f32 %v3010, 1.442695
  %v3012 = vpow.pop %v3011
  %v3013 = vadd.f32 %v3012, 1.0
  %v3014 = vrcp.pop %v3013
  %v3015 = vmul.f32 %v3013, %v3014
  %v3016 = vsub.f32 1.0, %v3015
  %v3017 = vmul.f32 %v3014, %v3016
  %v3018 = vadd.f32 %v3014, %v3017
  %vm3019 = vweird.f32 %v3013
  %vm3020 = vweird.f32 %v3014
  %vm3021 = vmor %vm3019, %vm3020
  %v3022 = vsel %vm3021, %v3014, %v3018
  %v3023 = vand.u32 2147483647, %v3013
  %vm3024 = vcmp.eq.f32.partialorder %v3023, 8.507059e+37
  %v3025 = vand.u32 %v3013, 2147483648
  %v3026 = vor.u32 1.1754944e-38, %v3025
  %v3027 = vsel %vm3024, %v3026, %v3022
  %v3028 = vmul.f32 1.0, %v3027
  %v3029 = vtanh.pop %v3009
  %v3030 = vmul.f32 %v3028, %v2943
  %3032 = vrot.lane.b32.xlu0 %v3029, 64
  %v3033 = vpop.permute.xlu0 %3032
  %v3035 = vmul.f32 %v3028, %v3033
  %3037 = vrot.lane.b32.xlu0 %v3035, 32
  %v3038 = vpop.permute.xlu0 %3037
  %v3040 = vadd.f32 %v3030, %v3038
  %v3041 = vtanh.pop %v3040
  %3043 = vrot.lane.b32.xlu0 %v3041, 64
  %v3044 = vpop.permute.xlu0 %3043
  %v3046 = vmul.f32 %v3028, %v3044
  %3048 = vrot.lane.b32.xlu0 %v3046, 32
  %v3049 = vpop.permute.xlu0 %3048
  %v3050 = vsel %vm166, %v3049, 0
  %3052 = vmatpush.msra.mxu0 0.0
  %3053 = vmatpush.msra.mxu0 0.0
  %3054 = vmatpush.msra.mxu0 0.0
  %3055 = vmatpush.msra.mxu0 0.0
  %3056 = vmatpush.msra.mxu0 0.0
  %3057 = vmatpush.msra.mxu0 0.0
  %3058 = vmatpush.msra.mxu0 0.0
  %3059 = vmatpush.msra.mxu0 0.0
  %3060 = vmatpush.msra.mxu0 0.0
  %3061 = vmatpush.msra.mxu0 0.0
  %3062 = vmatpush.msra.mxu0 0.0
  %3063 = vmatpush.msra.mxu0 0.0
  %3064 = vmatpush.msra.mxu0 %v1809
  %3065 = vmatpush.msra.mxu0 %v1808
  %3066 = vmatpush.msra.mxu0 %v1807
  %3067 = vmatpush.msra.mxu0 %v1806
  %3068 = vmatmul.f32.gmra.mxu0 %v3050
  %v3069 = vpop.f32.mrf.mxu0
  %v3070 = vadd.f32 %v1881, %v3069
  %3071 = vdwg.mxu0
  %v3072 = vsel %vm164, %v3070, -inf
  %3073 = vmax.xlane.f32.xlu0 %v3072
  %v3074 = vpop.xlane.xlu0 %3073
  %v3075 = vsub.f32 %v3070, %v3074
  %v3076 = vmul.f32 %v3075, 1.442695
  %v3077 = vpow.pop %v3076
  %v3078 = vsel %vm164, %v3077, 0.0
  %3079 = vadd.xlane.f32.xlu0 %v3078
  %v3080 = vpop.xlane.xlu0 %3079
  %v3081 = vlog2.pop %v3080
  %v3082 = vmul.f32 %v3081, 0.6931472
  %v3083 = vadd.f32 %v3082, %v3074
  %v3084 = vsub.f32 %v3070, %v3083
  %3085 = vst.msk [vmem:[%s14 + $0x18] sm:$0x3] %vm164, %v3084
  %3086 = vmatpush.msra.mxu0 0.0
  %3087 = vmatpush.msra.mxu0 0.0
  %3088 = vmatpush.msra.mxu0 0.0
  %3089 = vmatpush.msra.mxu0 0.0
  %3090 = vmatpush.msra.mxu0 0.0
  %3091 = vmatpush.msra.mxu0 0.0
  %3092 = vmatpush.msra.mxu0 0.0
  %3093 = vmatpush.msra.mxu0 0.0
  %3094 = vmatpush.msra.mxu0 0.0
  %3095 = vmatpush.msra.mxu0 0.0
  %3096 = vmatpush.msra.mxu0 0.0
  %3097 = vmatpush.msra.mxu0 0.0
  %3098 = vmatpush.msra.mxu0 %v1805
  %3099 = vmatpush.msra.mxu0 %v1804
  %3100 = vmatpush.msra.mxu0 %v1803
  %3101 = vmatpush.msra.mxu0 %v1802
  %3102 = vmatmul.f32.gmra.mxu0 %v3050
  %v3103 = vpop.f32.mrf.mxu0
  %v3104 = vadd.f32 0.0, %v3103
  %3105 = vdwg.mxu0
  %v3106 = vadd.f32 %v1609, %v3104
  %v3107 = vxor.u32 %v3106, 2147483648
  %v3108 = vmul.f32 %v3107, 1.442695
  %v3109 = vpow.pop %v3108
  %v3110 = vadd.f32 %v3109, 1.0
  %v3111 = vrcp.pop %v3110
  %v3112 = vmul.f32 %v3110, %v3111
  %v3113 = vsub.f32 1.0, %v3112
  %v3114 = vmul.f32 %v3111, %v3113
  %v3115 = vadd.f32 %v3111, %v3114
  %vm3116 = vweird.f32 %v3110
  %vm3117 = vweird.f32 %v3111
  %vm3118 = vmor %vm3116, %vm3117
  %v3119 = vsel %vm3118, %v3111, %v3115
  %v3120 = vand.u32 2147483647, %v3110
  %vm3121 = vcmp.eq.f32.partialorder %v3120, 8.507059e+37
  %v3122 = vand.u32 %v3110, 2147483648
  %v3123 = vor.u32 1.1754944e-38, %v3122
  %v3124 = vsel %vm3121, %v3123, %v3119
  %v3125 = vmul.f32 1.0, %v3124
  %v3126 = vtanh.pop %v3106
  %v3127 = vmul.f32 %v3125, %v3040
  %3129 = vrot.lane.b32.xlu0 %v3126, 64
  %v3130 = vpop.permute.xlu0 %3129
  %v3132 = vmul.f32 %v3125, %v3130
  %3134 = vrot.lane.b32.xlu0 %v3132, 32
  %v3135 = vpop.permute.xlu0 %3134
  %v3137 = vadd.f32 %v3127, %v3135
  %v3138 = vtanh.pop %v3137
  %3140 = vrot.lane.b32.xlu0 %v3138, 64
  %v3141 = vpop.permute.xlu0 %3140
  %v3143 = vmul.f32 %v3125, %v3141
  %3145 = vrot.lane.b32.xlu0 %v3143, 32
  %v3146 = vpop.permute.xlu0 %3145
  %v3147 = vsel %vm166, %v3146, 0
  %3149 = vmatpush.msra.mxu0 0.0
  %3150 = vmatpush.msra.mxu0 0.0
  %3151 = vmatpush.msra.mxu0 0.0
  %3152 = vmatpush.msra.mxu0 0.0
  %3153 = vmatpush.msra.mxu0 0.0
  %3154 = vmatpush.msra.mxu0 0.0
  %3155 = vmatpush.msra.mxu0 0.0
  %3156 = vmatpush.msra.mxu0 0.0
  %3157 = vmatpush.msra.mxu0 0.0
  %3158 = vmatpush.msra.mxu0 0.0
  %3159 = vmatpush.msra.mxu0 0.0
  %3160 = vmatpush.msra.mxu0 0.0
  %3161 = vmatpush.msra.mxu0 %v1809
  %3162 = vmatpush.msra.mxu0 %v1808
  %3163 = vmatpush.msra.mxu0 %v1807
  %3164 = vmatpush.msra.mxu0 %v1806
  %3165 = vmatmul.f32.gmra.mxu0 %v3147
  %v3166 = vpop.f32.mrf.mxu0
  %v3167 = vadd.f32 %v1881, %v3166
  %3168 = vdwg.mxu0
  %v3169 = vsel %vm164, %v3167, -inf
  %3170 = vmax.xlane.f32.xlu0 %v3169
  %v3171 = vpop.xlane.xlu0 %3170
  %v3172 = vsub.f32 %v3167, %v3171
  %v3173 = vmul.f32 %v3172, 1.442695
  %v3174 = vpow.pop %v3173
  %v3175 = vsel %vm164, %v3174, 0.0
  %3176 = vadd.xlane.f32.xlu0 %v3175
  %v3177 = vpop.xlane.xlu0 %3176
  %v3178 = vlog2.pop %v3177
  %v3179 = vmul.f32 %v3178, 0.6931472
  %v3180 = vadd.f32 %v3179, %v3171
  %v3181 = vsub.f32 %v3167, %v3180
  %3182 = vst.msk [vmem:[%s14 + $0x1a] sm:$0x3] %vm164, %v3181
  %3183 = vmatpush.msra.mxu0 0.0
  %3184 = vmatpush.msra.mxu0 0.0
  %3185 = vmatpush.msra.mxu0 0.0
  %3186 = vmatpush.msra.mxu0 0.0
  %3187 = vmatpush.msra.mxu0 0.0
  %3188 = vmatpush.msra.mxu0 0.0
  %3189 = vmatpush.msra.mxu0 0.0
  %3190 = vmatpush.msra.mxu0 0.0
  %3191 = vmatpush.msra.mxu0 0.0
  %3192 = vmatpush.msra.mxu0 0.0
  %3193 = vmatpush.msra.mxu0 0.0
  %3194 = vmatpush.msra.mxu0 0.0
  %3195 = vmatpush.msra.mxu0 %v1805
  %3196 = vmatpush.msra.mxu0 %v1804
  %3197 = vmatpush.msra.mxu0 %v1803
  %3198 = vmatpush.msra.mxu0 %v1802
  %3199 = vmatmul.f32.gmra.mxu0 %v3147
  %v3200 = vpop.f32.mrf.mxu0
  %v3201 = vadd.f32 0.0, %v3200
  %3202 = vdwg.mxu0
  %v3203 = vadd.f32 %v1699, %v3201
  %v3204 = vxor.u32 %v3203, 2147483648
  %v3205 = vmul.f32 %v3204, 1.442695
  %v3206 = vpow.pop %v3205
  %v3207 = vadd.f32 %v3206, 1.0
  %v3208 = vrcp.pop %v3207
  %v3209 = vmul.f32 %v3207, %v3208
  %v3210 = vsub.f32 1.0, %v3209
  %v3211 = vmul.f32 %v3208, %v3210
  %v3212 = vadd.f32 %v3208, %v3211
  %vm3213 = vweird.f32 %v3207
  %vm3214 = vweird.f32 %v3208
  %vm3215 = vmor %vm3213, %vm3214
  %v3216 = vsel %vm3215, %v3208, %v3212
  %v3217 = vand.u32 2147483647, %v3207
  %vm3218 = vcmp.eq.f32.partialorder %v3217, 8.507059e+37
  %v3219 = vand.u32 %v3207, 2147483648
  %v3220 = vor.u32 1.1754944e-38, %v3219
  %v3221 = vsel %vm3218, %v3220, %v3216
  %v3222 = vmul.f32 1.0, %v3221
  %v3223 = vtanh.pop %v3203
  %v3224 = vmul.f32 %v3222, %v3137
  %3226 = vrot.lane.b32.xlu0 %v3223, 64
  %v3227 = vpop.permute.xlu0 %3226
  %v3229 = vmul.f32 %v3222, %v3227
  %3231 = vrot.lane.b32.xlu0 %v3229, 32
  %v3232 = vpop.permute.xlu0 %3231
  %v3234 = vadd.f32 %v3224, %v3232
  %v3235 = vtanh.pop %v3234
  %3237 = vrot.lane.b32.xlu0 %v3235, 64
  %v3238 = vpop.permute.xlu0 %3237
  %v3240 = vmul.f32 %v3222, %v3238
  %3242 = vrot.lane.b32.xlu0 %v3240, 32
  %v3243 = vpop.permute.xlu0 %3242
  %v3244 = vsel %vm166, %v3243, 0
  %3246 = vmatpush.msra.mxu0 0.0
  %3247 = vmatpush.msra.mxu0 0.0
  %3248 = vmatpush.msra.mxu0 0.0
  %3249 = vmatpush.msra.mxu0 0.0
  %3250 = vmatpush.msra.mxu0 0.0
  %3251 = vmatpush.msra.mxu0 0.0
  %3252 = vmatpush.msra.mxu0 0.0
  %3253 = vmatpush.msra.mxu0 0.0
  %3254 = vmatpush.msra.mxu0 0.0
  %3255 = vmatpush.msra.mxu0 0.0
  %3256 = vmatpush.msra.mxu0 0.0
  %3257 = vmatpush.msra.mxu0 0.0
  %3258 = vmatpush.msra.mxu0 %v1809
  %3259 = vmatpush.msra.mxu0 %v1808
  %3260 = vmatpush.msra.mxu0 %v1807
  %3261 = vmatpush.msra.mxu0 %v1806
  %3262 = vmatmul.f32.gmra.mxu0 %v3244
  %v3263 = vpop.f32.mrf.mxu0
  %v3264 = vadd.f32 %v1881, %v3263
  %3265 = vdwg.mxu0
  %v3266 = vsel %vm164, %v3264, -inf
  %3267 = vmax.xlane.f32.xlu0 %v3266
  %v3268 = vpop.xlane.xlu0 %3267
  %v3269 = vsub.f32 %v3264, %v3268
  %v3270 = vmul.f32 %v3269, 1.442695
  %v3271 = vpow.pop %v3270
  %v3272 = vsel %vm164, %v3271, 0.0
  %3273 = vadd.xlane.f32.xlu0 %v3272
  %v3274 = vpop.xlane.xlu0 %3273
  %v3275 = vlog2.pop %v3274
  %v3276 = vmul.f32 %v3275, 0.6931472
  %v3277 = vadd.f32 %v3276, %v3268
  %v3278 = vsub.f32 %v3264, %v3277
  %3279 = vst.msk [vmem:[%s14 + $0x1c] sm:$0x3] %vm164, %v3278
  %3280 = vmatpush.msra.mxu0 0.0
  %3281 = vmatpush.msra.mxu0 0.0
  %3282 = vmatpush.msra.mxu0 0.0
  %3283 = vmatpush.msra.mxu0 0.0
  %3284 = vmatpush.msra.mxu0 0.0
  %3285 = vmatpush.msra.mxu0 0.0
  %3286 = vmatpush.msra.mxu0 0.0
  %3287 = vmatpush.msra.mxu0 0.0
  %3288 = vmatpush.msra.mxu0 0.0
  %3289 = vmatpush.msra.mxu0 0.0
  %3290 = vmatpush.msra.mxu0 0.0
  %3291 = vmatpush.msra.mxu0 0.0
  %3292 = vmatpush.msra.mxu0 %v1805
  %3293 = vmatpush.msra.mxu0 %v1804
  %3294 = vmatpush.msra.mxu0 %v1803
  %3295 = vmatpush.msra.mxu0 %v1802
  %3296 = vmatmul.f32.gmra.mxu0 %v3244
  %v3297 = vpop.f32.mrf.mxu0
  %v3298 = vadd.f32 0.0, %v3297
  %3299 = vdwg.mxu0
  %v3300 = vadd.f32 %v1789, %v3298
  %v3301 = vxor.u32 %v3300, 2147483648
  %v3302 = vmul.f32 %v3301, 1.442695
  %v3303 = vpow.pop %v3302
  %v3304 = vadd.f32 %v3303, 1.0
  %v3305 = vrcp.pop %v3304
  %v3306 = vmul.f32 %v3304, %v3305
  %v3307 = vsub.f32 1.0, %v3306
  %v3308 = vmul.f32 %v3305, %v3307
  %v3309 = vadd.f32 %v3305, %v3308
  %vm3310 = vweird.f32 %v3304
  %vm3311 = vweird.f32 %v3305
  %vm3312 = vmor %vm3310, %vm3311
  %v3313 = vsel %vm3312, %v3305, %v3309
  %v3314 = vand.u32 2147483647, %v3304
  %vm3315 = vcmp.eq.f32.partialorder %v3314, 8.507059e+37
  %v3316 = vand.u32 %v3304, 2147483648
  %v3317 = vor.u32 1.1754944e-38, %v3316
  %v3318 = vsel %vm3315, %v3317, %v3313
  %v3319 = vmul.f32 1.0, %v3318
  %v3320 = vtanh.pop %v3300
  %v3321 = vmul.f32 %v3319, %v3234
  %3323 = vrot.lane.b32.xlu0 %v3320, 64
  %v3324 = vpop.permute.xlu0 %3323
  %v3326 = vmul.f32 %v3319, %v3324
  %3328 = vrot.lane.b32.xlu0 %v3326, 32
  %v3329 = vpop.permute.xlu0 %3328
  %v3331 = vadd.f32 %v3321, %v3329
  %v3332 = vtanh.pop %v3331
  %3334 = vrot.lane.b32.xlu0 %v3332, 64
  %v3335 = vpop.permute.xlu0 %3334
  %v3337 = vmul.f32 %v3319, %v3335
  %3339 = vrot.lane.b32.xlu0 %v3337, 32
  %v3340 = vpop.permute.xlu0 %3339
  %v3341 = vsel %vm166, %v3340, 0
  %3343 = vmatpush.msra.mxu0 0.0
  %3344 = vmatpush.msra.mxu0 0.0
  %3345 = vmatpush.msra.mxu0 0.0
  %3346 = vmatpush.msra.mxu0 0.0
  %3347 = vmatpush.msra.mxu0 0.0
  %3348 = vmatpush.msra.mxu0 0.0
  %3349 = vmatpush.msra.mxu0 0.0
  %3350 = vmatpush.msra.mxu0 0.0
  %3351 = vmatpush.msra.mxu0 0.0
  %3352 = vmatpush.msra.mxu0 0.0
  %3353 = vmatpush.msra.mxu0 0.0
  %3354 = vmatpush.msra.mxu0 0.0
  %3355 = vmatpush.msra.mxu0 %v1809
  %3356 = vmatpush.msra.mxu0 %v1808
  %3357 = vmatpush.msra.mxu0 %v1807
  %3358 = vmatpush.msra.mxu0 %v1806
  %3359 = vmatmul.f32.gmra.mxu0 %v3341
  %v3360 = vpop.f32.mrf.mxu0
  %v3361 = vadd.f32 %v1881, %v3360
  %3362 = vdwg.mxu0
  %v3363 = vsel %vm164, %v3361, -inf
  %3364 = vmax.xlane.f32.xlu0 %v3363
  %v3365 = vpop.xlane.xlu0 %3364
  %v3366 = vsub.f32 %v3361, %v3365
  %v3367 = vmul.f32 %v3366, 1.442695
  %v3368 = vpow.pop %v3367
  %v3369 = vsel %vm164, %v3368, 0.0
  %3370 = vadd.xlane.f32.xlu0 %v3369
  %v3371 = vpop.xlane.xlu0 %3370
  %v3372 = vlog2.pop %v3371
  %v3373 = vmul.f32 %v3372, 0.6931472
  %v3374 = vadd.f32 %v3373, %v3365
  %v3375 = vsub.f32 %v3361, %v3374
  %3376 = vst.msk [vmem:[%s14 + $0x1e] sm:$0x3] %vm164, %v3375
  %3377 = vrot.lane.b32.xlu0 %v3337, 96
  %v3378 = vpop.permute.xlu0 %3377
  %3380 = vst.msk [vmem:[%s14 + $0x2] sm:$0x3] %vm211, %v3378
  %3382 = vrot.lane.b32.xlu0 %v3331, 64
  %v3383 = vpop.permute.xlu0 %3382
  %vm3385 = vcmask 1042176
  %3386 = vst.msk [vmem:[%s14 + $0x2] sm:$0x3] %vm3385, %v3383
  // Predicated region
  $region58: #{onnx_encoder_forward.1} parent=0 // pred_check
    _
  $region59: #{onnx_encoder_forward.1} parent=0 // pred_check_branch
    %3388 = sbr.rel (0) target = $region61
  $region60: #{onnx_encoder_forward.1} parent=0 // pred_region
    _
  $region61: #{onnx_encoder_forward.1} parent=0 // pred_fallthru
    _
  // Predicated region
  $region62: #{onnx_encoder_forward.1} parent=0 // pred_check
    _
  $region63: #{onnx_encoder_forward.1} parent=0 // pred_check_branch
    %3390 = sbr.rel (0) target = $region65
  $region64: #{onnx_encoder_forward.1} parent=0 // pred_region
    _
  $region65: #{onnx_encoder_forward.1} parent=0 // pred_fallthru
    _

</llo_original>
